<compile_context>
chip_gen: v6e
topology: v6e:2x2x1
jax: 0.10.0
libtpu: 0.0.40
codegen_flags: <defaults>
</compile_context>

<pallas_src>
import numpy as np
import jax
import jax.numpy as jnp
from jax import lax
from jax.experimental import pallas as pl
from jax.experimental.pallas import tpu as pltpu

# ----------------------------- config (small) --------------------------------
VOCAB = 100
SEQ = 8
HIDDEN = 32
FFN = 64
LAYERS = 2
BATCH = 2
ALPHA_AUG = 0.8

NB = 2 * BATCH            # number of sequences fed to the encoder (left + right)
NTOK = NB * SEQ           # flattened token rows
OUT_PAD = 128             # lane-dense head output width (real logits in [:, :2])

# TODO(synk): real roberta-base is 12 layers / 12 heads / 768 hidden with exact
# erf GELU; this synthetic encoder is single-head at toy sizes with tanh GELU.
# At real sizes, cast weights/activations to bf16 for the MXU and tile FFN K to
# respect v7x's 64 MiB VMEM.


# ----------------------------- kernel helpers ---------------------------------
def _layernorm(x, g, b, eps=1e-5):
    mu = jnp.mean(x, axis=-1, keepdims=True)
    var = jnp.mean((x - mu) ** 2, axis=-1, keepdims=True)
    return (x - mu) * lax.rsqrt(var + eps) * g + b


def _gelu(x):
    c = jnp.float32(0.7978845608028654)  # sqrt(2/pi)
    return 0.5 * x * (1.0 + jnp.tanh(c * (x + 0.044715 * x * x * x)))


# ----------------------------- fused Pallas kernel -----------------------------
def _ditto_fused_kernel(emb_ref, emb_g_ref, emb_b_ref,
                        wqkv_ref, bqkv_ref, wo_ref, bo_ref,
                        ln1g_ref, ln1b_ref,
                        w1_ref, b1_ref, w2_ref, b2_ref,
                        ln2g_ref, ln2b_ref,
                        fc_w_ref, fc_b_ref, lam_ref,
                        o_ref,
                        qkv_scr, ctx_scr, h_scr):
    H, S = HIDDEN, SEQ
    scale = jnp.float32(1.0 / np.sqrt(H))

    # --- embedding layernorm over all 2B*S token rows at once ---
    h = _layernorm(emb_ref[...], emb_g_ref[...], emb_b_ref[...])

    # --- transformer encoder stack (weights stacked along leading layer axis) ---
    for li in range(LAYERS):
        # fused QKV projection: one (NTOK, H) x (H, 3H) MXU matmul
        qkv_scr[...] = (jnp.dot(h, wqkv_ref[li], preferred_element_type=jnp.float32)
                        + bqkv_ref[li])

        # per-sequence single-head attention (static unrolled over NB sequences)
        for b in range(NB):
            r0 = b * S
            qb = qkv_scr[r0:r0 + S, 0:H]
            kb = qkv_scr[r0:r0 + S, H:2 * H]
            vb = qkv_scr[r0:r0 + S, 2 * H:3 * H]
            # q @ k^T without materializing a transpose: contract last axes.
            sc = lax.dot_general(qb, kb, (((1,), (1,)), ((), ())),
                                 preferred_element_type=jnp.float32) * scale
            sc = sc - jnp.max(sc, axis=-1, keepdims=True)
            p = jnp.exp(sc)
            p = p * pl.reciprocal(jnp.sum(p, axis=-1, keepdims=True), approx=True)
            ctx_scr[r0:r0 + S, :] = jnp.dot(p, vb,
                                            preferred_element_type=jnp.float32)

        attn = (jnp.dot(ctx_scr[...], wo_ref[li],
                        preferred_element_type=jnp.float32) + bo_ref[li])
        h1 = _layernorm(h + attn, ln1g_ref[li], ln1b_ref[li])

        ff = _gelu(jnp.dot(h1, w1_ref[li],
                           preferred_element_type=jnp.float32) + b1_ref[li])
        ff = jnp.dot(ff, w2_ref[li],
                     preferred_element_type=jnp.float32) + b2_ref[li]
        h = _layernorm(h1 + ff, ln2g_ref[li], ln2b_ref[li])

    # --- [CLS] rows (token 0 of each sequence) via strided VMEM loads ---
    h_scr[...] = h
    enc1 = h_scr[pl.ds(0, BATCH, stride=S), :]            # left sequences
    enc2 = h_scr[pl.ds(BATCH * S, BATCH, stride=S), :]    # right (augmented)

    # --- MixDA interpolation + Linear(hidden, 2) head (output padded to 128 lanes) ---
    lam = lam_ref[0, 0]
    enc = enc1 * lam + enc2 * (1.0 - lam)
    o_ref[...] = (jnp.dot(enc, fc_w_ref[...], preferred_element_type=jnp.float32)
                  + fc_b_ref[...])


# ----------------------------- Pallas wrapper ----------------------------------
def _vmem_spec():
    return pl.BlockSpec(memory_space=pltpu.MemorySpace.VMEM)


def ditto_fused(emb_flat, params, fc_w_pad, fc_b_pad, lam):
    return pl.pallas_call(
        _ditto_fused_kernel,
        out_shape=jax.ShapeDtypeStruct((BATCH, OUT_PAD), jnp.float32),
        in_specs=[_vmem_spec()] * 17
        + [pl.BlockSpec(memory_space=pltpu.MemorySpace.SMEM)],   # lam scalar
        out_specs=_vmem_spec(),
        scratch_shapes=[
            pltpu.VMEM((NTOK, 3 * HIDDEN), jnp.float32),   # fused QKV buffer
            pltpu.VMEM((NTOK, HIDDEN), jnp.float32),       # attention context
            pltpu.VMEM((NTOK, HIDDEN), jnp.float32),       # final hidden states
        ],
    )(emb_flat,
      params["emb_ln_g"], params["emb_ln_b"],
      params["wqkv"], params["bqkv"], params["wo"], params["bo"],
      params["ln1_g"], params["ln1_b"],
      params["w1"], params["b1"], params["w2"], params["b2"],
      params["ln2_g"], params["ln2_b"],
      fc_w_pad, fc_b_pad, lam)


# ----------------------------- parameters --------------------------------------
def init_params(key):
    keys = iter(jax.random.split(key, 8))

    def dense(shape):
        return jax.random.normal(next(keys), shape, jnp.float32) * 0.02

    H, F, L = HIDDEN, FFN, LAYERS
    return {
        "word_emb": dense((VOCAB, H)),
        "pos_emb": dense((SEQ, H)),
        "emb_ln_g": jnp.ones((1, H), jnp.float32),
        "emb_ln_b": jnp.zeros((1, H), jnp.float32),
        # per-layer weights stacked on a leading layer axis
        "wqkv": dense((L, H, 3 * H)),
        "bqkv": jnp.zeros((L, 1, 3 * H), jnp.float32),
        "wo": dense((L, H, H)),
        "bo": jnp.zeros((L, 1, H), jnp.float32),
        "ln1_g": jnp.ones((L, 1, H), jnp.float32),
        "ln1_b": jnp.zeros((L, 1, H), jnp.float32),
        "w1": dense((L, H, F)),
        "b1": jnp.zeros((L, 1, F), jnp.float32),
        "w2": dense((L, F, H)),
        "b2": jnp.zeros((L, 1, H), jnp.float32),
        "ln2_g": jnp.ones((L, 1, H), jnp.float32),
        "ln2_b": jnp.zeros((L, 1, H), jnp.float32),
        "fc_w": dense((H, 2)),
        "fc_b": jnp.zeros((1, 2), jnp.float32),
    }


# ----------------------------- forward pass -------------------------------------
def ditto_forward(params, x1, x2, lam):
    """Mirrors DittoModel.forward(x1, x2): encode cat(x1, x2), take [CLS],
    MixDA-interpolate, apply Linear(hidden, 2)."""
    assert x1.shape == (BATCH, SEQ) and x2.shape == (BATCH, SEQ)
    x = jnp.concatenate([x1, x2], axis=0)                       # (2B, S) int32

    # embeddings (glue): token + position lookups, flatten to [2B*S, H]
    emb = params["word_emb"][x] + params["pos_emb"][None, :, :]
    emb_flat = emb.reshape(-1, HIDDEN).astype(jnp.float32)      # (NTOK, H)

    # pad fc head to a lane-dense 128-wide output (real logits in cols 0:2)
    fc_w_pad = jnp.zeros((HIDDEN, OUT_PAD), jnp.float32).at[:, :2].set(params["fc_w"])
    fc_b_pad = jnp.zeros((1, OUT_PAD), jnp.float32).at[:, :2].set(params["fc_b"])

    logits_pad = ditto_fused(emb_flat, params, fc_w_pad, fc_b_pad, lam)
    return logits_pad[:, :2]


# ----------------------------- main ---------------------------------------------
if __name__ == "__main__":
    key = jax.random.PRNGKey(0)
    pkey, k1, k2 = jax.random.split(key, 3)

    params = init_params(pkey)

    x1 = jax.random.randint(k1, (BATCH, SEQ), 0, VOCAB, dtype=jnp.int32)
    x2 = jax.random.randint(k2, (BATCH, SEQ), 0, VOCAB, dtype=jnp.int32)

    # Deterministic stand-in for np.random.beta(alpha_aug, alpha_aug)
    aug_lam = float(np.random.default_rng(0).beta(ALPHA_AUG, ALPHA_AUG))
    lam = jnp.full((1, 1), aug_lam, dtype=jnp.float32)

    logits = ditto_forward(params, x1, x2, lam)
    jax.block_until_ready(logits)
    assert logits.shape == (BATCH, 2) and logits.dtype == jnp.float32
    print("KERNEL_OK")
</pallas_src>

<mosaic_0001>
module attributes {stable_mosaic.version = 11 : i64} {
  func.func @_ditto_fused_kernel(%arg0: memref<32x32xf32, #tpu.memory_space<vmem>>, %arg1: memref<1x32xf32, #tpu.memory_space<vmem>>, %arg2: memref<1x32xf32, #tpu.memory_space<vmem>>, %arg3: memref<2x32x96xf32, #tpu.memory_space<vmem>>, %arg4: memref<2x1x96xf32, #tpu.memory_space<vmem>>, %arg5: memref<2x32x32xf32, #tpu.memory_space<vmem>>, %arg6: memref<2x1x32xf32, #tpu.memory_space<vmem>>, %arg7: memref<2x1x32xf32, #tpu.memory_space<vmem>>, %arg8: memref<2x1x32xf32, #tpu.memory_space<vmem>>, %arg9: memref<2x32x64xf32, #tpu.memory_space<vmem>>, %arg10: memref<2x1x64xf32, #tpu.memory_space<vmem>>, %arg11: memref<2x64x32xf32, #tpu.memory_space<vmem>>, %arg12: memref<2x1x32xf32, #tpu.memory_space<vmem>>, %arg13: memref<2x1x32xf32, #tpu.memory_space<vmem>>, %arg14: memref<2x1x32xf32, #tpu.memory_space<vmem>>, %arg15: memref<32x128xf32, #tpu.memory_space<vmem>>, %arg16: memref<1x128xf32, #tpu.memory_space<vmem>>, %arg17: memref<1x1xf32, #tpu.memory_space<smem>>, %arg18: memref<2x128xf32, #tpu.memory_space<vmem>>, %arg19: memref<32x96xf32, #tpu.memory_space<vmem>>, %arg20: memref<32x32xf32, #tpu.memory_space<vmem>>, %arg21: memref<32x32xf32, #tpu.memory_space<vmem>>) attributes {dimension_semantics = [], scalar_prefetch = 0 : i64, scratch_operands = 3 : i64, tpu.core_type = #tpu.core_type<tc>} {
    %c0 = arith.constant 0 : index
    %c0_0 = arith.constant 0 : index
    %0 = vector.load %arg0[%c0, %c0_0] : memref<32x32xf32, #tpu.memory_space<vmem>>, vector<32x32xf32>
    %c0_1 = arith.constant 0 : index
    %c0_2 = arith.constant 0 : index
    %1 = vector.load %arg1[%c0_1, %c0_2] : memref<1x32xf32, #tpu.memory_space<vmem>>, vector<1x32xf32>
    %c0_3 = arith.constant 0 : index
    %c0_4 = arith.constant 0 : index
    %2 = vector.load %arg2[%c0_3, %c0_4] : memref<1x32xf32, #tpu.memory_space<vmem>>, vector<1x32xf32>
    %cst = arith.constant dense<0.000000e+00> : vector<32xf32>
    %3 = vector.multi_reduction <add>, %0, %cst [1] : vector<32x32xf32> to vector<32xf32>
    %4 = vector.shape_cast %3 : vector<32xf32> to vector<32x1xf32>
    %cst_5 = arith.constant 3.200000e+01 : f32
    %5 = vector.broadcast %cst_5 : f32 to vector<32x1xf32>
    %6 = arith.divf %4, %5 : vector<32x1xf32>
    %7 = vector.broadcast %6 : vector<32x1xf32> to vector<32x32xf32>
    %8 = arith.subf %0, %7 : vector<32x32xf32>
    %9 = arith.mulf %8, %8 : vector<32x32xf32>
    %cst_6 = arith.constant dense<0.000000e+00> : vector<32xf32>
    %10 = vector.multi_reduction <add>, %9, %cst_6 [1] : vector<32x32xf32> to vector<32xf32>
    %11 = vector.shape_cast %10 : vector<32xf32> to vector<32x1xf32>
    %cst_7 = arith.constant 3.200000e+01 : f32
    %12 = vector.broadcast %cst_7 : f32 to vector<32x1xf32>
    %13 = arith.divf %11, %12 : vector<32x1xf32>
    %14 = vector.broadcast %6 : vector<32x1xf32> to vector<32x32xf32>
    %15 = arith.subf %0, %14 : vector<32x32xf32>
    %cst_8 = arith.constant 9.99999974E-6 : f32
    %16 = vector.broadcast %cst_8 : f32 to vector<32x1xf32>
    %17 = arith.addf %13, %16 : vector<32x1xf32>
    %18 = math.rsqrt %17 : vector<32x1xf32>
    %19 = vector.broadcast %18 : vector<32x1xf32> to vector<32x32xf32>
    %20 = arith.mulf %15, %19 : vector<32x32xf32>
    %21 = vector.broadcast %1 : vector<1x32xf32> to vector<32x32xf32>
    %22 = arith.mulf %20, %21 : vector<32x32xf32>
    %23 = vector.broadcast %2 : vector<1x32xf32> to vector<32x32xf32>
    %24 = arith.addf %22, %23 : vector<32x32xf32>
    %c0_9 = arith.constant 0 : index
    %c0_10 = arith.constant 0 : index
    %c0_11 = arith.constant 0 : index
    %25 = vector.load %arg3[%c0_9, %c0_10, %c0_11] : memref<2x32x96xf32, #tpu.memory_space<vmem>>, vector<1x32x96xf32>
    %26 = vector.shape_cast %25 : vector<1x32x96xf32> to vector<32x96xf32>
    %cst_12 = arith.constant dense<0.000000e+00> : vector<32x96xf32>
    %27 = tpu.matmul %24, %26, %cst_12 {dimension_numbers = #tpu.dot_dimension_numbers<[1], [0], [0], [1], [0, 0, 1, 1], [], []>} : vector<32x32xf32>, vector<32x96xf32>, vector<32x96xf32> -> vector<32x96xf32>
    %c0_13 = arith.constant 0 : index
    %c0_14 = arith.constant 0 : index
    %c0_15 = arith.constant 0 : index
    %28 = vector.load %arg4[%c0_13, %c0_14, %c0_15] : memref<2x1x96xf32, #tpu.memory_space<vmem>>, vector<1x1x96xf32>
    %29 = vector.shape_cast %28 : vector<1x1x96xf32> to vector<1x96xf32>
    %30 = vector.broadcast %29 : vector<1x96xf32> to vector<32x96xf32>
    %31 = arith.addf %27, %30 : vector<32x96xf32>
    %c0_16 = arith.constant 0 : index
    %c0_17 = arith.constant 0 : index
    %32 = vector.load %arg19[%c0_16, %c0_17] : memref<32x96xf32, #tpu.memory_space<vmem>>, vector<32x96xf32>
    tpu.vector_store %arg19[%c0_16, %c0_17], %31 {strides = array<i32>} : memref<32x96xf32, #tpu.memory_space<vmem>>, vector<32x96xf32>,
    %c0_18 = arith.constant 0 : index
    %c0_19 = arith.constant 0 : index
    %33 = vector.load %arg19[%c0_18, %c0_19] : memref<32x96xf32, #tpu.memory_space<vmem>>, vector<8x32xf32>
    %c0_20 = arith.constant 0 : index
    %c32 = arith.constant 32 : index
    %34 = vector.load %arg19[%c0_20, %c32] : memref<32x96xf32, #tpu.memory_space<vmem>>, vector<8x32xf32>
    %c0_21 = arith.constant 0 : index
    %c64 = arith.constant 64 : index
    %35 = vector.load %arg19[%c0_21, %c64] : memref<32x96xf32, #tpu.memory_space<vmem>>, vector<8x32xf32>
    %cst_22 = arith.constant dense<0.000000e+00> : vector<8x8xf32>
    %36 = tpu.matmul %33, %34, %cst_22 {dimension_numbers = #tpu.dot_dimension_numbers<[1], [1], [0], [0], [0, 0, 1, 0], [], []>} : vector<8x32xf32>, vector<8x32xf32>, vector<8x8xf32> -> vector<8x8xf32>
    %cst_23 = arith.constant 0.176776692 : f32
    %37 = vector.broadcast %cst_23 : f32 to vector<8x8xf32>
    %38 = arith.mulf %36, %37 : vector<8x8xf32>
    %cst_24 = arith.constant dense<0xFF800000> : vector<8xf32>
    %39 = vector.multi_reduction <maximumf>, %38, %cst_24 [1] : vector<8x8xf32> to vector<8xf32>
    %40 = vector.shape_cast %39 : vector<8xf32> to vector<8x1xf32>
    %41 = vector.broadcast %40 : vector<8x1xf32> to vector<8x8xf32>
    %42 = arith.subf %38, %41 : vector<8x8xf32>
    %43 = math.exp %42 : vector<8x8xf32>
    %cst_25 = arith.constant dense<0.000000e+00> : vector<8xf32>
    %44 = vector.multi_reduction <add>, %43, %cst_25 [1] : vector<8x8xf32> to vector<8xf32>
    %45 = vector.shape_cast %44 : vector<8xf32> to vector<8x1xf32>
    %46 = tpu.reciprocal %45 {approx = true} : vector<8x1xf32> -> vector<8x1xf32>
    %47 = vector.broadcast %46 : vector<8x1xf32> to vector<8x8xf32>
    %48 = arith.mulf %43, %47 : vector<8x8xf32>
    %cst_26 = arith.constant dense<0.000000e+00> : vector<8x32xf32>
    %49 = tpu.matmul %48, %35, %cst_26 {dimension_numbers = #tpu.dot_dimension_numbers<[1], [0], [0], [1], [0, 0, 1, 1], [], []>} : vector<8x8xf32>, vector<8x32xf32>, vector<8x32xf32> -> vector<8x32xf32>
    %c0_27 = arith.constant 0 : index
    %c0_28 = arith.constant 0 : index
    %50 = vector.load %arg20[%c0_27, %c0_28] : memref<32x32xf32, #tpu.memory_space<vmem>>, vector<8x32xf32>
    tpu.vector_store %arg20[%c0_27, %c0_28], %49 {strides = array<i32>} : memref<32x32xf32, #tpu.memory_space<vmem>>, vector<8x32xf32>,
    %c8 = arith.constant 8 : index
    %c0_29 = arith.constant 0 : index
    %51 = vector.load %arg19[%c8, %c0_29] : memref<32x96xf32, #tpu.memory_space<vmem>>, vector<8x32xf32>
    %c8_30 = arith.constant 8 : index
    %c32_31 = arith.constant 32 : index
    %52 = vector.load %arg19[%c8_30, %c32_31] : memref<32x96xf32, #tpu.memory_space<vmem>>, vector<8x32xf32>
    %c8_32 = arith.constant 8 : index
    %c64_33 = arith.constant 64 : index
    %53 = vector.load %arg19[%c8_32, %c64_33] : memref<32x96xf32, #tpu.memory_space<vmem>>, vector<8x32xf32>
    %cst_34 = arith.constant dense<0.000000e+00> : vector<8x8xf32>
    %54 = tpu.matmul %51, %52, %cst_34 {dimension_numbers = #tpu.dot_dimension_numbers<[1], [1], [0], [0], [0, 0, 1, 0], [], []>} : vector<8x32xf32>, vector<8x32xf32>, vector<8x8xf32> -> vector<8x8xf32>
    %cst_35 = arith.constant 0.176776692 : f32
    %55 = vector.broadcast %cst_35 : f32 to vector<8x8xf32>
    %56 = arith.mulf %54, %55 : vector<8x8xf32>
    %cst_36 = arith.constant dense<0xFF800000> : vector<8xf32>
    %57 = vector.multi_reduction <maximumf>, %56, %cst_36 [1] : vector<8x8xf32> to vector<8xf32>
    %58 = vector.shape_cast %57 : vector<8xf32> to vector<8x1xf32>
    %59 = vector.broadcast %58 : vector<8x1xf32> to vector<8x8xf32>
    %60 = arith.subf %56, %59 : vector<8x8xf32>
    %61 = math.exp %60 : vector<8x8xf32>
    %cst_37 = arith.constant dense<0.000000e+00> : vector<8xf32>
    %62 = vector.multi_reduction <add>, %61, %cst_37 [1] : vector<8x8xf32> to vector<8xf32>
    %63 = vector.shape_cast %62 : vector<8xf32> to vector<8x1xf32>
    %64 = tpu.reciprocal %63 {approx = true} : vector<8x1xf32> -> vector<8x1xf32>
    %65 = vector.broadcast %64 : vector<8x1xf32> to vector<8x8xf32>
    %66 = arith.mulf %61, %65 : vector<8x8xf32>
    %cst_38 = arith.constant dense<0.000000e+00> : vector<8x32xf32>
    %67 = tpu.matmul %66, %53, %cst_38 {dimension_numbers = #tpu.dot_dimension_numbers<[1], [0], [0], [1], [0, 0, 1, 1], [], []>} : vector<8x8xf32>, vector<8x32xf32>, vector<8x32xf32> -> vector<8x32xf32>
    %c8_39 = arith.constant 8 : index
    %c0_40 = arith.constant 0 : index
    %68 = vector.load %arg20[%c8_39, %c0_40] : memref<32x32xf32, #tpu.memory_space<vmem>>, vector<8x32xf32>
    tpu.vector_store %arg20[%c8_39, %c0_40], %67 {strides = array<i32>} : memref<32x32xf32, #tpu.memory_space<vmem>>, vector<8x32xf32>,
    %c16 = arith.constant 16 : index
    %c0_41 = arith.constant 0 : index
    %69 = vector.load %arg19[%c16, %c0_41] : memref<32x96xf32, #tpu.memory_space<vmem>>, vector<8x32xf32>
    %c16_42 = arith.constant 16 : index
    %c32_43 = arith.constant 32 : index
    %70 = vector.load %arg19[%c16_42, %c32_43] : memref<32x96xf32, #tpu.memory_space<vmem>>, vector<8x32xf32>
    %c16_44 = arith.constant 16 : index
    %c64_45 = arith.constant 64 : index
    %71 = vector.load %arg19[%c16_44, %c64_45] : memref<32x96xf32, #tpu.memory_space<vmem>>, vector<8x32xf32>
    %cst_46 = arith.constant dense<0.000000e+00> : vector<8x8xf32>
    %72 = tpu.matmul %69, %70, %cst_46 {dimension_numbers = #tpu.dot_dimension_numbers<[1], [1], [0], [0], [0, 0, 1, 0], [], []>} : vector<8x32xf32>, vector<8x32xf32>, vector<8x8xf32> -> vector<8x8xf32>
    %cst_47 = arith.constant 0.176776692 : f32
    %73 = vector.broadcast %cst_47 : f32 to vector<8x8xf32>
    %74 = arith.mulf %72, %73 : vector<8x8xf32>
    %cst_48 = arith.constant dense<0xFF800000> : vector<8xf32>
    %75 = vector.multi_reduction <maximumf>, %74, %cst_48 [1] : vector<8x8xf32> to vector<8xf32>
    %76 = vector.shape_cast %75 : vector<8xf32> to vector<8x1xf32>
    %77 = vector.broadcast %76 : vector<8x1xf32> to vector<8x8xf32>
    %78 = arith.subf %74, %77 : vector<8x8xf32>
    %79 = math.exp %78 : vector<8x8xf32>
    %cst_49 = arith.constant dense<0.000000e+00> : vector<8xf32>
    %80 = vector.multi_reduction <add>, %79, %cst_49 [1] : vector<8x8xf32> to vector<8xf32>
    %81 = vector.shape_cast %80 : vector<8xf32> to vector<8x1xf32>
    %82 = tpu.reciprocal %81 {approx = true} : vector<8x1xf32> -> vector<8x1xf32>
    %83 = vector.broadcast %82 : vector<8x1xf32> to vector<8x8xf32>
    %84 = arith.mulf %79, %83 : vector<8x8xf32>
    %cst_50 = arith.constant dense<0.000000e+00> : vector<8x32xf32>
    %85 = tpu.matmul %84, %71, %cst_50 {dimension_numbers = #tpu.dot_dimension_numbers<[1], [0], [0], [1], [0, 0, 1, 1], [], []>} : vector<8x8xf32>, vector<8x32xf32>, vector<8x32xf32> -> vector<8x32xf32>
    %c16_51 = arith.constant 16 : index
    %c0_52 = arith.constant 0 : index
    %86 = vector.load %arg20[%c16_51, %c0_52] : memref<32x32xf32, #tpu.memory_space<vmem>>, vector<8x32xf32>
    tpu.vector_store %arg20[%c16_51, %c0_52], %85 {strides = array<i32>} : memref<32x32xf32, #tpu.memory_space<vmem>>, vector<8x32xf32>,
    %c24 = arith.constant 24 : index
    %c0_53 = arith.constant 0 : index
    %87 = vector.load %arg19[%c24, %c0_53] : memref<32x96xf32, #tpu.memory_space<vmem>>, vector<8x32xf32>
    %c24_54 = arith.constant 24 : index
    %c32_55 = arith.constant 32 : index
    %88 = vector.load %arg19[%c24_54, %c32_55] : memref<32x96xf32, #tpu.memory_space<vmem>>, vector<8x32xf32>
    %c24_56 = arith.constant 24 : index
    %c64_57 = arith.constant 64 : index
    %89 = vector.load %arg19[%c24_56, %c64_57] : memref<32x96xf32, #tpu.memory_space<vmem>>, vector<8x32xf32>
    %cst_58 = arith.constant dense<0.000000e+00> : vector<8x8xf32>
    %90 = tpu.matmul %87, %88, %cst_58 {dimension_numbers = #tpu.dot_dimension_numbers<[1], [1], [0], [0], [0, 0, 1, 0], [], []>} : vector<8x32xf32>, vector<8x32xf32>, vector<8x8xf32> -> vector<8x8xf32>
    %cst_59 = arith.constant 0.176776692 : f32
    %91 = vector.broadcast %cst_59 : f32 to vector<8x8xf32>
    %92 = arith.mulf %90, %91 : vector<8x8xf32>
    %cst_60 = arith.constant dense<0xFF800000> : vector<8xf32>
    %93 = vector.multi_reduction <maximumf>, %92, %cst_60 [1] : vector<8x8xf32> to vector<8xf32>
    %94 = vector.shape_cast %93 : vector<8xf32> to vector<8x1xf32>
    %95 = vector.broadcast %94 : vector<8x1xf32> to vector<8x8xf32>
    %96 = arith.subf %92, %95 : vector<8x8xf32>
    %97 = math.exp %96 : vector<8x8xf32>
    %cst_61 = arith.constant dense<0.000000e+00> : vector<8xf32>
    %98 = vector.multi_reduction <add>, %97, %cst_61 [1] : vector<8x8xf32> to vector<8xf32>
    %99 = vector.shape_cast %98 : vector<8xf32> to vector<8x1xf32>
    %100 = tpu.reciprocal %99 {approx = true} : vector<8x1xf32> -> vector<8x1xf32>
    %101 = vector.broadcast %100 : vector<8x1xf32> to vector<8x8xf32>
    %102 = arith.mulf %97, %101 : vector<8x8xf32>
    %cst_62 = arith.constant dense<0.000000e+00> : vector<8x32xf32>
    %103 = tpu.matmul %102, %89, %cst_62 {dimension_numbers = #tpu.dot_dimension_numbers<[1], [0], [0], [1], [0, 0, 1, 1], [], []>} : vector<8x8xf32>, vector<8x32xf32>, vector<8x32xf32> -> vector<8x32xf32>
    %c24_63 = arith.constant 24 : index
    %c0_64 = arith.constant 0 : index
    %104 = vector.load %arg20[%c24_63, %c0_64] : memref<32x32xf32, #tpu.memory_space<vmem>>, vector<8x32xf32>
    tpu.vector_store %arg20[%c24_63, %c0_64], %103 {strides = array<i32>} : memref<32x32xf32, #tpu.memory_space<vmem>>, vector<8x32xf32>,
    %c0_65 = arith.constant 0 : index
    %c0_66 = arith.constant 0 : index
    %105 = vector.load %arg20[%c0_65, %c0_66] : memref<32x32xf32, #tpu.memory_space<vmem>>, vector<32x32xf32>
    %c0_67 = arith.constant 0 : index
    %c0_68 = arith.constant 0 : index
    %c0_69 = arith.constant 0 : index
    %106 = vector.load %arg5[%c0_67, %c0_68, %c0_69] : memref<2x32x32xf32, #tpu.memory_space<vmem>>, vector<1x32x32xf32>
    %107 = vector.shape_cast %106 : vector<1x32x32xf32> to vector<32x32xf32>
    %cst_70 = arith.constant dense<0.000000e+00> : vector<32x32xf32>
    %108 = tpu.matmul %105, %107, %cst_70 {dimension_numbers = #tpu.dot_dimension_numbers<[1], [0], [0], [1], [0, 0, 1, 1], [], []>} : vector<32x32xf32>, vector<32x32xf32>, vector<32x32xf32> -> vector<32x32xf32>
    %c0_71 = arith.constant 0 : index
    %c0_72 = arith.constant 0 : index
    %c0_73 = arith.constant 0 : index
    %109 = vector.load %arg6[%c0_71, %c0_72, %c0_73] : memref<2x1x32xf32, #tpu.memory_space<vmem>>, vector<1x1x32xf32>
    %110 = vector.shape_cast %109 : vector<1x1x32xf32> to vector<1x32xf32>
    %111 = vector.broadcast %110 : vector<1x32xf32> to vector<32x32xf32>
    %112 = arith.addf %108, %111 : vector<32x32xf32>
    %113 = arith.addf %24, %112 : vector<32x32xf32>
    %c0_74 = arith.constant 0 : index
    %c0_75 = arith.constant 0 : index
    %c0_76 = arith.constant 0 : index
    %114 = vector.load %arg7[%c0_74, %c0_75, %c0_76] : memref<2x1x32xf32, #tpu.memory_space<vmem>>, vector<1x1x32xf32>
    %115 = vector.shape_cast %114 : vector<1x1x32xf32> to vector<1x32xf32>
    %c0_77 = arith.constant 0 : index
    %c0_78 = arith.constant 0 : index
    %c0_79 = arith.constant 0 : index
    %116 = vector.load %arg8[%c0_77, %c0_78, %c0_79] : memref<2x1x32xf32, #tpu.memory_space<vmem>>, vector<1x1x32xf32>
    %117 = vector.shape_cast %116 : vector<1x1x32xf32> to vector<1x32xf32>
    %cst_80 = arith.constant dense<0.000000e+00> : vector<32xf32>
    %118 = vector.multi_reduction <add>, %113, %cst_80 [1] : vector<32x32xf32> to vector<32xf32>
    %119 = vector.shape_cast %118 : vector<32xf32> to vector<32x1xf32>
    %cst_81 = arith.constant 3.200000e+01 : f32
    %120 = vector.broadcast %cst_81 : f32 to vector<32x1xf32>
    %121 = arith.divf %119, %120 : vector<32x1xf32>
    %122 = vector.broadcast %121 : vector<32x1xf32> to vector<32x32xf32>
    %123 = arith.subf %113, %122 : vector<32x32xf32>
    %124 = arith.mulf %123, %123 : vector<32x32xf32>
    %cst_82 = arith.constant dense<0.000000e+00> : vector<32xf32>
    %125 = vector.multi_reduction <add>, %124, %cst_82 [1] : vector<32x32xf32> to vector<32xf32>
    %126 = vector.shape_cast %125 : vector<32xf32> to vector<32x1xf32>
    %cst_83 = arith.constant 3.200000e+01 : f32
    %127 = vector.broadcast %cst_83 : f32 to vector<32x1xf32>
    %128 = arith.divf %126, %127 : vector<32x1xf32>
    %129 = vector.broadcast %121 : vector<32x1xf32> to vector<32x32xf32>
    %130 = arith.subf %113, %129 : vector<32x32xf32>
    %cst_84 = arith.constant 9.99999974E-6 : f32
    %131 = vector.broadcast %cst_84 : f32 to vector<32x1xf32>
    %132 = arith.addf %128, %131 : vector<32x1xf32>
    %133 = math.rsqrt %132 : vector<32x1xf32>
    %134 = vector.broadcast %133 : vector<32x1xf32> to vector<32x32xf32>
    %135 = arith.mulf %130, %134 : vector<32x32xf32>
    %136 = vector.broadcast %115 : vector<1x32xf32> to vector<32x32xf32>
    %137 = arith.mulf %135, %136 : vector<32x32xf32>
    %138 = vector.broadcast %117 : vector<1x32xf32> to vector<32x32xf32>
    %139 = arith.addf %137, %138 : vector<32x32xf32>
    %c0_85 = arith.constant 0 : index
    %c0_86 = arith.constant 0 : index
    %c0_87 = arith.constant 0 : index
    %140 = vector.load %arg9[%c0_85, %c0_86, %c0_87] : memref<2x32x64xf32, #tpu.memory_space<vmem>>, vector<1x32x64xf32>
    %141 = vector.shape_cast %140 : vector<1x32x64xf32> to vector<32x64xf32>
    %cst_88 = arith.constant dense<0.000000e+00> : vector<32x64xf32>
    %142 = tpu.matmul %139, %141, %cst_88 {dimension_numbers = #tpu.dot_dimension_numbers<[1], [0], [0], [1], [0, 0, 1, 1], [], []>} : vector<32x32xf32>, vector<32x64xf32>, vector<32x64xf32> -> vector<32x64xf32>
    %c0_89 = arith.constant 0 : index
    %c0_90 = arith.constant 0 : index
    %c0_91 = arith.constant 0 : index
    %143 = vector.load %arg10[%c0_89, %c0_90, %c0_91] : memref<2x1x64xf32, #tpu.memory_space<vmem>>, vector<1x1x64xf32>
    %144 = vector.shape_cast %143 : vector<1x1x64xf32> to vector<1x64xf32>
    %145 = vector.broadcast %144 : vector<1x64xf32> to vector<32x64xf32>
    %146 = arith.addf %142, %145 : vector<32x64xf32>
    %cst_92 = arith.constant 5.000000e-01 : f32
    %147 = vector.broadcast %cst_92 : f32 to vector<32x64xf32>
    %148 = arith.mulf %147, %146 : vector<32x64xf32>
    %cst_93 = arith.constant 4.471500e-02 : f32
    %149 = vector.broadcast %cst_93 : f32 to vector<32x64xf32>
    %150 = arith.mulf %149, %146 : vector<32x64xf32>
    %151 = arith.mulf %150, %146 : vector<32x64xf32>
    %152 = arith.mulf %151, %146 : vector<32x64xf32>
    %153 = arith.addf %146, %152 : vector<32x64xf32>
    %cst_94 = arith.constant 0.797884583 : f32
    %154 = vector.broadcast %cst_94 : f32 to vector<32x64xf32>
    %155 = arith.mulf %154, %153 : vector<32x64xf32>
    %156 = math.tanh %155 : vector<32x64xf32>
    %cst_95 = arith.constant 1.000000e+00 : f32
    %157 = vector.broadcast %cst_95 : f32 to vector<32x64xf32>
    %158 = arith.addf %157, %156 : vector<32x64xf32>
    %159 = arith.mulf %148, %158 : vector<32x64xf32>
    %c0_96 = arith.constant 0 : index
    %c0_97 = arith.constant 0 : index
    %c0_98 = arith.constant 0 : index
    %160 = vector.load %arg11[%c0_96, %c0_97, %c0_98] : memref<2x64x32xf32, #tpu.memory_space<vmem>>, vector<1x64x32xf32>
    %161 = vector.shape_cast %160 : vector<1x64x32xf32> to vector<64x32xf32>
    %cst_99 = arith.constant dense<0.000000e+00> : vector<32x32xf32>
    %162 = tpu.matmul %159, %161, %cst_99 {dimension_numbers = #tpu.dot_dimension_numbers<[1], [0], [0], [1], [0, 0, 1, 1], [], []>} : vector<32x64xf32>, vector<64x32xf32>, vector<32x32xf32> -> vector<32x32xf32>
    %c0_100 = arith.constant 0 : index
    %c0_101 = arith.constant 0 : index
    %c0_102 = arith.constant 0 : index
    %163 = vector.load %arg12[%c0_100, %c0_101, %c0_102] : memref<2x1x32xf32, #tpu.memory_space<vmem>>, vector<1x1x32xf32>
    %164 = vector.shape_cast %163 : vector<1x1x32xf32> to vector<1x32xf32>
    %165 = vector.broadcast %164 : vector<1x32xf32> to vector<32x32xf32>
    %166 = arith.addf %162, %165 : vector<32x32xf32>
    %167 = arith.addf %139, %166 : vector<32x32xf32>
    %c0_103 = arith.constant 0 : index
    %c0_104 = arith.constant 0 : index
    %c0_105 = arith.constant 0 : index
    %168 = vector.load %arg13[%c0_103, %c0_104, %c0_105] : memref<2x1x32xf32, #tpu.memory_space<vmem>>, vector<1x1x32xf32>
    %169 = vector.shape_cast %168 : vector<1x1x32xf32> to vector<1x32xf32>
    %c0_106 = arith.constant 0 : index
    %c0_107 = arith.constant 0 : index
    %c0_108 = arith.constant 0 : index
    %170 = vector.load %arg14[%c0_106, %c0_107, %c0_108] : memref<2x1x32xf32, #tpu.memory_space<vmem>>, vector<1x1x32xf32>
    %171 = vector.shape_cast %170 : vector<1x1x32xf32> to vector<1x32xf32>
    %cst_109 = arith.constant dense<0.000000e+00> : vector<32xf32>
    %172 = vector.multi_reduction <add>, %167, %cst_109 [1] : vector<32x32xf32> to vector<32xf32>
    %173 = vector.shape_cast %172 : vector<32xf32> to vector<32x1xf32>
    %cst_110 = arith.constant 3.200000e+01 : f32
    %174 = vector.broadcast %cst_110 : f32 to vector<32x1xf32>
    %175 = arith.divf %173, %174 : vector<32x1xf32>
    %176 = vector.broadcast %175 : vector<32x1xf32> to vector<32x32xf32>
    %177 = arith.subf %167, %176 : vector<32x32xf32>
    %178 = arith.mulf %177, %177 : vector<32x32xf32>
    %cst_111 = arith.constant dense<0.000000e+00> : vector<32xf32>
    %179 = vector.multi_reduction <add>, %178, %cst_111 [1] : vector<32x32xf32> to vector<32xf32>
    %180 = vector.shape_cast %179 : vector<32xf32> to vector<32x1xf32>
    %cst_112 = arith.constant 3.200000e+01 : f32
    %181 = vector.broadcast %cst_112 : f32 to vector<32x1xf32>
    %182 = arith.divf %180, %181 : vector<32x1xf32>
    %183 = vector.broadcast %175 : vector<32x1xf32> to vector<32x32xf32>
    %184 = arith.subf %167, %183 : vector<32x32xf32>
    %cst_113 = arith.constant 9.99999974E-6 : f32
    %185 = vector.broadcast %cst_113 : f32 to vector<32x1xf32>
    %186 = arith.addf %182, %185 : vector<32x1xf32>
    %187 = math.rsqrt %186 : vector<32x1xf32>
    %188 = vector.broadcast %187 : vector<32x1xf32> to vector<32x32xf32>
    %189 = arith.mulf %184, %188 : vector<32x32xf32>
    %190 = vector.broadcast %169 : vector<1x32xf32> to vector<32x32xf32>
    %191 = arith.mulf %189, %190 : vector<32x32xf32>
    %192 = vector.broadcast %171 : vector<1x32xf32> to vector<32x32xf32>
    %193 = arith.addf %191, %192 : vector<32x32xf32>
    %c1 = arith.constant 1 : index
    %c0_114 = arith.constant 0 : index
    %c0_115 = arith.constant 0 : index
    %194 = vector.load %arg3[%c1, %c0_114, %c0_115] : memref<2x32x96xf32, #tpu.memory_space<vmem>>, vector<1x32x96xf32>
    %195 = vector.shape_cast %194 : vector<1x32x96xf32> to vector<32x96xf32>
    %cst_116 = arith.constant dense<0.000000e+00> : vector<32x96xf32>
    %196 = tpu.matmul %193, %195, %cst_116 {dimension_numbers = #tpu.dot_dimension_numbers<[1], [0], [0], [1], [0, 0, 1, 1], [], []>} : vector<32x32xf32>, vector<32x96xf32>, vector<32x96xf32> -> vector<32x96xf32>
    %c1_117 = arith.constant 1 : index
    %c0_118 = arith.constant 0 : index
    %c0_119 = arith.constant 0 : index
    %197 = vector.load %arg4[%c1_117, %c0_118, %c0_119] : memref<2x1x96xf32, #tpu.memory_space<vmem>>, vector<1x1x96xf32>
    %198 = vector.shape_cast %197 : vector<1x1x96xf32> to vector<1x96xf32>
    %199 = vector.broadcast %198 : vector<1x96xf32> to vector<32x96xf32>
    %200 = arith.addf %196, %199 : vector<32x96xf32>
    %c0_120 = arith.constant 0 : index
    %c0_121 = arith.constant 0 : index
    %201 = vector.load %arg19[%c0_120, %c0_121] : memref<32x96xf32, #tpu.memory_space<vmem>>, vector<32x96xf32>
    tpu.vector_store %arg19[%c0_120, %c0_121], %200 {strides = array<i32>} : memref<32x96xf32, #tpu.memory_space<vmem>>, vector<32x96xf32>,
    %c0_122 = arith.constant 0 : index
    %c0_123 = arith.constant 0 : index
    %202 = vector.load %arg19[%c0_122, %c0_123] : memref<32x96xf32, #tpu.memory_space<vmem>>, vector<8x32xf32>
    %c0_124 = arith.constant 0 : index
    %c32_125 = arith.constant 32 : index
    %203 = vector.load %arg19[%c0_124, %c32_125] : memref<32x96xf32, #tpu.memory_space<vmem>>, vector<8x32xf32>
    %c0_126 = arith.constant 0 : index
    %c64_127 = arith.constant 64 : index
    %204 = vector.load %arg19[%c0_126, %c64_127] : memref<32x96xf32, #tpu.memory_space<vmem>>, vector<8x32xf32>
    %cst_128 = arith.constant dense<0.000000e+00> : vector<8x8xf32>
    %205 = tpu.matmul %202, %203, %cst_128 {dimension_numbers = #tpu.dot_dimension_numbers<[1], [1], [0], [0], [0, 0, 1, 0], [], []>} : vector<8x32xf32>, vector<8x32xf32>, vector<8x8xf32> -> vector<8x8xf32>
    %cst_129 = arith.constant 0.176776692 : f32
    %206 = vector.broadcast %cst_129 : f32 to vector<8x8xf32>
    %207 = arith.mulf %205, %206 : vector<8x8xf32>
    %cst_130 = arith.constant dense<0xFF800000> : vector<8xf32>
    %208 = vector.multi_reduction <maximumf>, %207, %cst_130 [1] : vector<8x8xf32> to vector<8xf32>
    %209 = vector.shape_cast %208 : vector<8xf32> to vector<8x1xf32>
    %210 = vector.broadcast %209 : vector<8x1xf32> to vector<8x8xf32>
    %211 = arith.subf %207, %210 : vector<8x8xf32>
    %212 = math.exp %211 : vector<8x8xf32>
    %cst_131 = arith.constant dense<0.000000e+00> : vector<8xf32>
    %213 = vector.multi_reduction <add>, %212, %cst_131 [1] : vector<8x8xf32> to vector<8xf32>
    %214 = vector.shape_cast %213 : vector<8xf32> to vector<8x1xf32>
    %215 = tpu.reciprocal %214 {approx = true} : vector<8x1xf32> -> vector<8x1xf32>
    %216 = vector.broadcast %215 : vector<8x1xf32> to vector<8x8xf32>
    %217 = arith.mulf %212, %216 : vector<8x8xf32>
    %cst_132 = arith.constant dense<0.000000e+00> : vector<8x32xf32>
    %218 = tpu.matmul %217, %204, %cst_132 {dimension_numbers = #tpu.dot_dimension_numbers<[1], [0], [0], [1], [0, 0, 1, 1], [], []>} : vector<8x8xf32>, vector<8x32xf32>, vector<8x32xf32> -> vector<8x32xf32>
    %c0_133 = arith.constant 0 : index
    %c0_134 = arith.constant 0 : index
    %219 = vector.load %arg20[%c0_133, %c0_134] : memref<32x32xf32, #tpu.memory_space<vmem>>, vector<8x32xf32>
    tpu.vector_store %arg20[%c0_133, %c0_134], %218 {strides = array<i32>} : memref<32x32xf32, #tpu.memory_space<vmem>>, vector<8x32xf32>,
    %c8_135 = arith.constant 8 : index
    %c0_136 = arith.constant 0 : index
    %220 = vector.load %arg19[%c8_135, %c0_136] : memref<32x96xf32, #tpu.memory_space<vmem>>, vector<8x32xf32>
    %c8_137 = arith.constant 8 : index
    %c32_138 = arith.constant 32 : index
    %221 = vector.load %arg19[%c8_137, %c32_138] : memref<32x96xf32, #tpu.memory_space<vmem>>, vector<8x32xf32>
    %c8_139 = arith.constant 8 : index
    %c64_140 = arith.constant 64 : index
    %222 = vector.load %arg19[%c8_139, %c64_140] : memref<32x96xf32, #tpu.memory_space<vmem>>, vector<8x32xf32>
    %cst_141 = arith.constant dense<0.000000e+00> : vector<8x8xf32>
    %223 = tpu.matmul %220, %221, %cst_141 {dimension_numbers = #tpu.dot_dimension_numbers<[1], [1], [0], [0], [0, 0, 1, 0], [], []>} : vector<8x32xf32>, vector<8x32xf32>, vector<8x8xf32> -> vector<8x8xf32>
    %cst_142 = arith.constant 0.176776692 : f32
    %224 = vector.broadcast %cst_142 : f32 to vector<8x8xf32>
    %225 = arith.mulf %223, %224 : vector<8x8xf32>
    %cst_143 = arith.constant dense<0xFF800000> : vector<8xf32>
    %226 = vector.multi_reduction <maximumf>, %225, %cst_143 [1] : vector<8x8xf32> to vector<8xf32>
    %227 = vector.shape_cast %226 : vector<8xf32> to vector<8x1xf32>
    %228 = vector.broadcast %227 : vector<8x1xf32> to vector<8x8xf32>
    %229 = arith.subf %225, %228 : vector<8x8xf32>
    %230 = math.exp %229 : vector<8x8xf32>
    %cst_144 = arith.constant dense<0.000000e+00> : vector<8xf32>
    %231 = vector.multi_reduction <add>, %230, %cst_144 [1] : vector<8x8xf32> to vector<8xf32>
    %232 = vector.shape_cast %231 : vector<8xf32> to vector<8x1xf32>
    %233 = tpu.reciprocal %232 {approx = true} : vector<8x1xf32> -> vector<8x1xf32>
    %234 = vector.broadcast %233 : vector<8x1xf32> to vector<8x8xf32>
    %235 = arith.mulf %230, %234 : vector<8x8xf32>
    %cst_145 = arith.constant dense<0.000000e+00> : vector<8x32xf32>
    %236 = tpu.matmul %235, %222, %cst_145 {dimension_numbers = #tpu.dot_dimension_numbers<[1], [0], [0], [1], [0, 0, 1, 1], [], []>} : vector<8x8xf32>, vector<8x32xf32>, vector<8x32xf32> -> vector<8x32xf32>
    %c8_146 = arith.constant 8 : index
    %c0_147 = arith.constant 0 : index
    %237 = vector.load %arg20[%c8_146, %c0_147] : memref<32x32xf32, #tpu.memory_space<vmem>>, vector<8x32xf32>
    tpu.vector_store %arg20[%c8_146, %c0_147], %236 {strides = array<i32>} : memref<32x32xf32, #tpu.memory_space<vmem>>, vector<8x32xf32>,
    %c16_148 = arith.constant 16 : index
    %c0_149 = arith.constant 0 : index
    %238 = vector.load %arg19[%c16_148, %c0_149] : memref<32x96xf32, #tpu.memory_space<vmem>>, vector<8x32xf32>
    %c16_150 = arith.constant 16 : index
    %c32_151 = arith.constant 32 : index
    %239 = vector.load %arg19[%c16_150, %c32_151] : memref<32x96xf32, #tpu.memory_space<vmem>>, vector<8x32xf32>
    %c16_152 = arith.constant 16 : index
    %c64_153 = arith.constant 64 : index
    %240 = vector.load %arg19[%c16_152, %c64_153] : memref<32x96xf32, #tpu.memory_space<vmem>>, vector<8x32xf32>
    %cst_154 = arith.constant dense<0.000000e+00> : vector<8x8xf32>
    %241 = tpu.matmul %238, %239, %cst_154 {dimension_numbers = #tpu.dot_dimension_numbers<[1], [1], [0], [0], [0, 0, 1, 0], [], []>} : vector<8x32xf32>, vector<8x32xf32>, vector<8x8xf32> -> vector<8x8xf32>
    %cst_155 = arith.constant 0.176776692 : f32
    %242 = vector.broadcast %cst_155 : f32 to vector<8x8xf32>
    %243 = arith.mulf %241, %242 : vector<8x8xf32>
    %cst_156 = arith.constant dense<0xFF800000> : vector<8xf32>
    %244 = vector.multi_reduction <maximumf>, %243, %cst_156 [1] : vector<8x8xf32> to vector<8xf32>
    %245 = vector.shape_cast %244 : vector<8xf32> to vector<8x1xf32>
    %246 = vector.broadcast %245 : vector<8x1xf32> to vector<8x8xf32>
    %247 = arith.subf %243, %246 : vector<8x8xf32>
    %248 = math.exp %247 : vector<8x8xf32>
    %cst_157 = arith.constant dense<0.000000e+00> : vector<8xf32>
    %249 = vector.multi_reduction <add>, %248, %cst_157 [1] : vector<8x8xf32> to vector<8xf32>
    %250 = vector.shape_cast %249 : vector<8xf32> to vector<8x1xf32>
    %251 = tpu.reciprocal %250 {approx = true} : vector<8x1xf32> -> vector<8x1xf32>
    %252 = vector.broadcast %251 : vector<8x1xf32> to vector<8x8xf32>
    %253 = arith.mulf %248, %252 : vector<8x8xf32>
    %cst_158 = arith.constant dense<0.000000e+00> : vector<8x32xf32>
    %254 = tpu.matmul %253, %240, %cst_158 {dimension_numbers = #tpu.dot_dimension_numbers<[1], [0], [0], [1], [0, 0, 1, 1], [], []>} : vector<8x8xf32>, vector<8x32xf32>, vector<8x32xf32> -> vector<8x32xf32>
    %c16_159 = arith.constant 16 : index
    %c0_160 = arith.constant 0 : index
    %255 = vector.load %arg20[%c16_159, %c0_160] : memref<32x32xf32, #tpu.memory_space<vmem>>, vector<8x32xf32>
    tpu.vector_store %arg20[%c16_159, %c0_160], %254 {strides = array<i32>} : memref<32x32xf32, #tpu.memory_space<vmem>>, vector<8x32xf32>,
    %c24_161 = arith.constant 24 : index
    %c0_162 = arith.constant 0 : index
    %256 = vector.load %arg19[%c24_161, %c0_162] : memref<32x96xf32, #tpu.memory_space<vmem>>, vector<8x32xf32>
    %c24_163 = arith.constant 24 : index
    %c32_164 = arith.constant 32 : index
    %257 = vector.load %arg19[%c24_163, %c32_164] : memref<32x96xf32, #tpu.memory_space<vmem>>, vector<8x32xf32>
    %c24_165 = arith.constant 24 : index
    %c64_166 = arith.constant 64 : index
    %258 = vector.load %arg19[%c24_165, %c64_166] : memref<32x96xf32, #tpu.memory_space<vmem>>, vector<8x32xf32>
    %cst_167 = arith.constant dense<0.000000e+00> : vector<8x8xf32>
    %259 = tpu.matmul %256, %257, %cst_167 {dimension_numbers = #tpu.dot_dimension_numbers<[1], [1], [0], [0], [0, 0, 1, 0], [], []>} : vector<8x32xf32>, vector<8x32xf32>, vector<8x8xf32> -> vector<8x8xf32>
    %cst_168 = arith.constant 0.176776692 : f32
    %260 = vector.broadcast %cst_168 : f32 to vector<8x8xf32>
    %261 = arith.mulf %259, %260 : vector<8x8xf32>
    %cst_169 = arith.constant dense<0xFF800000> : vector<8xf32>
    %262 = vector.multi_reduction <maximumf>, %261, %cst_169 [1] : vector<8x8xf32> to vector<8xf32>
    %263 = vector.shape_cast %262 : vector<8xf32> to vector<8x1xf32>
    %264 = vector.broadcast %263 : vector<8x1xf32> to vector<8x8xf32>
    %265 = arith.subf %261, %264 : vector<8x8xf32>
    %266 = math.exp %265 : vector<8x8xf32>
    %cst_170 = arith.constant dense<0.000000e+00> : vector<8xf32>
    %267 = vector.multi_reduction <add>, %266, %cst_170 [1] : vector<8x8xf32> to vector<8xf32>
    %268 = vector.shape_cast %267 : vector<8xf32> to vector<8x1xf32>
    %269 = tpu.reciprocal %268 {approx = true} : vector<8x1xf32> -> vector<8x1xf32>
    %270 = vector.broadcast %269 : vector<8x1xf32> to vector<8x8xf32>
    %271 = arith.mulf %266, %270 : vector<8x8xf32>
    %cst_171 = arith.constant dense<0.000000e+00> : vector<8x32xf32>
    %272 = tpu.matmul %271, %258, %cst_171 {dimension_numbers = #tpu.dot_dimension_numbers<[1], [0], [0], [1], [0, 0, 1, 1], [], []>} : vector<8x8xf32>, vector<8x32xf32>, vector<8x32xf32> -> vector<8x32xf32>
    %c24_172 = arith.constant 24 : index
    %c0_173 = arith.constant 0 : index
    %273 = vector.load %arg20[%c24_172, %c0_173] : memref<32x32xf32, #tpu.memory_space<vmem>>, vector<8x32xf32>
    tpu.vector_store %arg20[%c24_172, %c0_173], %272 {strides = array<i32>} : memref<32x32xf32, #tpu.memory_space<vmem>>, vector<8x32xf32>,
    %c0_174 = arith.constant 0 : index
    %c0_175 = arith.constant 0 : index
    %274 = vector.load %arg20[%c0_174, %c0_175] : memref<32x32xf32, #tpu.memory_space<vmem>>, vector<32x32xf32>
    %c1_176 = arith.constant 1 : index
    %c0_177 = arith.constant 0 : index
    %c0_178 = arith.constant 0 : index
    %275 = vector.load %arg5[%c1_176, %c0_177, %c0_178] : memref<2x32x32xf32, #tpu.memory_space<vmem>>, vector<1x32x32xf32>
    %276 = vector.shape_cast %275 : vector<1x32x32xf32> to vector<32x32xf32>
    %cst_179 = arith.constant dense<0.000000e+00> : vector<32x32xf32>
    %277 = tpu.matmul %274, %276, %cst_179 {dimension_numbers = #tpu.dot_dimension_numbers<[1], [0], [0], [1], [0, 0, 1, 1], [], []>} : vector<32x32xf32>, vector<32x32xf32>, vector<32x32xf32> -> vector<32x32xf32>
    %c1_180 = arith.constant 1 : index
    %c0_181 = arith.constant 0 : index
    %c0_182 = arith.constant 0 : index
    %278 = vector.load %arg6[%c1_180, %c0_181, %c0_182] : memref<2x1x32xf32, #tpu.memory_space<vmem>>, vector<1x1x32xf32>
    %279 = vector.shape_cast %278 : vector<1x1x32xf32> to vector<1x32xf32>
    %280 = vector.broadcast %279 : vector<1x32xf32> to vector<32x32xf32>
    %281 = arith.addf %277, %280 : vector<32x32xf32>
    %282 = arith.addf %193, %281 : vector<32x32xf32>
    %c1_183 = arith.constant 1 : index
    %c0_184 = arith.constant 0 : index
    %c0_185 = arith.constant 0 : index
    %283 = vector.load %arg7[%c1_183, %c0_184, %c0_185] : memref<2x1x32xf32, #tpu.memory_space<vmem>>, vector<1x1x32xf32>
    %284 = vector.shape_cast %283 : vector<1x1x32xf32> to vector<1x32xf32>
    %c1_186 = arith.constant 1 : index
    %c0_187 = arith.constant 0 : index
    %c0_188 = arith.constant 0 : index
    %285 = vector.load %arg8[%c1_186, %c0_187, %c0_188] : memref<2x1x32xf32, #tpu.memory_space<vmem>>, vector<1x1x32xf32>
    %286 = vector.shape_cast %285 : vector<1x1x32xf32> to vector<1x32xf32>
    %cst_189 = arith.constant dense<0.000000e+00> : vector<32xf32>
    %287 = vector.multi_reduction <add>, %282, %cst_189 [1] : vector<32x32xf32> to vector<32xf32>
    %288 = vector.shape_cast %287 : vector<32xf32> to vector<32x1xf32>
    %cst_190 = arith.constant 3.200000e+01 : f32
    %289 = vector.broadcast %cst_190 : f32 to vector<32x1xf32>
    %290 = arith.divf %288, %289 : vector<32x1xf32>
    %291 = vector.broadcast %290 : vector<32x1xf32> to vector<32x32xf32>
    %292 = arith.subf %282, %291 : vector<32x32xf32>
    %293 = arith.mulf %292, %292 : vector<32x32xf32>
    %cst_191 = arith.constant dense<0.000000e+00> : vector<32xf32>
    %294 = vector.multi_reduction <add>, %293, %cst_191 [1] : vector<32x32xf32> to vector<32xf32>
    %295 = vector.shape_cast %294 : vector<32xf32> to vector<32x1xf32>
    %cst_192 = arith.constant 3.200000e+01 : f32
    %296 = vector.broadcast %cst_192 : f32 to vector<32x1xf32>
    %297 = arith.divf %295, %296 : vector<32x1xf32>
    %298 = vector.broadcast %290 : vector<32x1xf32> to vector<32x32xf32>
    %299 = arith.subf %282, %298 : vector<32x32xf32>
    %cst_193 = arith.constant 9.99999974E-6 : f32
    %300 = vector.broadcast %cst_193 : f32 to vector<32x1xf32>
    %301 = arith.addf %297, %300 : vector<32x1xf32>
    %302 = math.rsqrt %301 : vector<32x1xf32>
    %303 = vector.broadcast %302 : vector<32x1xf32> to vector<32x32xf32>
    %304 = arith.mulf %299, %303 : vector<32x32xf32>
    %305 = vector.broadcast %284 : vector<1x32xf32> to vector<32x32xf32>
    %306 = arith.mulf %304, %305 : vector<32x32xf32>
    %307 = vector.broadcast %286 : vector<1x32xf32> to vector<32x32xf32>
    %308 = arith.addf %306, %307 : vector<32x32xf32>
    %c1_194 = arith.constant 1 : index
    %c0_195 = arith.constant 0 : index
    %c0_196 = arith.constant 0 : index
    %309 = vector.load %arg9[%c1_194, %c0_195, %c0_196] : memref<2x32x64xf32, #tpu.memory_space<vmem>>, vector<1x32x64xf32>
    %310 = vector.shape_cast %309 : vector<1x32x64xf32> to vector<32x64xf32>
    %cst_197 = arith.constant dense<0.000000e+00> : vector<32x64xf32>
    %311 = tpu.matmul %308, %310, %cst_197 {dimension_numbers = #tpu.dot_dimension_numbers<[1], [0], [0], [1], [0, 0, 1, 1], [], []>} : vector<32x32xf32>, vector<32x64xf32>, vector<32x64xf32> -> vector<32x64xf32>
    %c1_198 = arith.constant 1 : index
    %c0_199 = arith.constant 0 : index
    %c0_200 = arith.constant 0 : index
    %312 = vector.load %arg10[%c1_198, %c0_199, %c0_200] : memref<2x1x64xf32, #tpu.memory_space<vmem>>, vector<1x1x64xf32>
    %313 = vector.shape_cast %312 : vector<1x1x64xf32> to vector<1x64xf32>
    %314 = vector.broadcast %313 : vector<1x64xf32> to vector<32x64xf32>
    %315 = arith.addf %311, %314 : vector<32x64xf32>
    %cst_201 = arith.constant 5.000000e-01 : f32
    %316 = vector.broadcast %cst_201 : f32 to vector<32x64xf32>
    %317 = arith.mulf %316, %315 : vector<32x64xf32>
    %cst_202 = arith.constant 4.471500e-02 : f32
    %318 = vector.broadcast %cst_202 : f32 to vector<32x64xf32>
    %319 = arith.mulf %318, %315 : vector<32x64xf32>
    %320 = arith.mulf %319, %315 : vector<32x64xf32>
    %321 = arith.mulf %320, %315 : vector<32x64xf32>
    %322 = arith.addf %315, %321 : vector<32x64xf32>
    %cst_203 = arith.constant 0.797884583 : f32
    %323 = vector.broadcast %cst_203 : f32 to vector<32x64xf32>
    %324 = arith.mulf %323, %322 : vector<32x64xf32>
    %325 = math.tanh %324 : vector<32x64xf32>
    %cst_204 = arith.constant 1.000000e+00 : f32
    %326 = vector.broadcast %cst_204 : f32 to vector<32x64xf32>
    %327 = arith.addf %326, %325 : vector<32x64xf32>
    %328 = arith.mulf %317, %327 : vector<32x64xf32>
    %c1_205 = arith.constant 1 : index
    %c0_206 = arith.constant 0 : index
    %c0_207 = arith.constant 0 : index
    %329 = vector.load %arg11[%c1_205, %c0_206, %c0_207] : memref<2x64x32xf32, #tpu.memory_space<vmem>>, vector<1x64x32xf32>
    %330 = vector.shape_cast %329 : vector<1x64x32xf32> to vector<64x32xf32>
    %cst_208 = arith.constant dense<0.000000e+00> : vector<32x32xf32>
    %331 = tpu.matmul %328, %330, %cst_208 {dimension_numbers = #tpu.dot_dimension_numbers<[1], [0], [0], [1], [0, 0, 1, 1], [], []>} : vector<32x64xf32>, vector<64x32xf32>, vector<32x32xf32> -> vector<32x32xf32>
    %c1_209 = arith.constant 1 : index
    %c0_210 = arith.constant 0 : index
    %c0_211 = arith.constant 0 : index
    %332 = vector.load %arg12[%c1_209, %c0_210, %c0_211] : memref<2x1x32xf32, #tpu.memory_space<vmem>>, vector<1x1x32xf32>
    %333 = vector.shape_cast %332 : vector<1x1x32xf32> to vector<1x32xf32>
    %334 = vector.broadcast %333 : vector<1x32xf32> to vector<32x32xf32>
    %335 = arith.addf %331, %334 : vector<32x32xf32>
    %336 = arith.addf %308, %335 : vector<32x32xf32>
    %c1_212 = arith.constant 1 : index
    %c0_213 = arith.constant 0 : index
    %c0_214 = arith.constant 0 : index
    %337 = vector.load %arg13[%c1_212, %c0_213, %c0_214] : memref<2x1x32xf32, #tpu.memory_space<vmem>>, vector<1x1x32xf32>
    %338 = vector.shape_cast %337 : vector<1x1x32xf32> to vector<1x32xf32>
    %c1_215 = arith.constant 1 : index
    %c0_216 = arith.constant 0 : index
    %c0_217 = arith.constant 0 : index
    %339 = vector.load %arg14[%c1_215, %c0_216, %c0_217] : memref<2x1x32xf32, #tpu.memory_space<vmem>>, vector<1x1x32xf32>
    %340 = vector.shape_cast %339 : vector<1x1x32xf32> to vector<1x32xf32>
    %cst_218 = arith.constant dense<0.000000e+00> : vector<32xf32>
    %341 = vector.multi_reduction <add>, %336, %cst_218 [1] : vector<32x32xf32> to vector<32xf32>
    %342 = vector.shape_cast %341 : vector<32xf32> to vector<32x1xf32>
    %cst_219 = arith.constant 3.200000e+01 : f32
    %343 = vector.broadcast %cst_219 : f32 to vector<32x1xf32>
    %344 = arith.divf %342, %343 : vector<32x1xf32>
    %345 = vector.broadcast %344 : vector<32x1xf32> to vector<32x32xf32>
    %346 = arith.subf %336, %345 : vector<32x32xf32>
    %347 = arith.mulf %346, %346 : vector<32x32xf32>
    %cst_220 = arith.constant dense<0.000000e+00> : vector<32xf32>
    %348 = vector.multi_reduction <add>, %347, %cst_220 [1] : vector<32x32xf32> to vector<32xf32>
    %349 = vector.shape_cast %348 : vector<32xf32> to vector<32x1xf32>
    %cst_221 = arith.constant 3.200000e+01 : f32
    %350 = vector.broadcast %cst_221 : f32 to vector<32x1xf32>
    %351 = arith.divf %349, %350 : vector<32x1xf32>
    %352 = vector.broadcast %344 : vector<32x1xf32> to vector<32x32xf32>
    %353 = arith.subf %336, %352 : vector<32x32xf32>
    %cst_222 = arith.constant 9.99999974E-6 : f32
    %354 = vector.broadcast %cst_222 : f32 to vector<32x1xf32>
    %355 = arith.addf %351, %354 : vector<32x1xf32>
    %356 = math.rsqrt %355 : vector<32x1xf32>
    %357 = vector.broadcast %356 : vector<32x1xf32> to vector<32x32xf32>
    %358 = arith.mulf %353, %357 : vector<32x32xf32>
    %359 = vector.broadcast %338 : vector<1x32xf32> to vector<32x32xf32>
    %360 = arith.mulf %358, %359 : vector<32x32xf32>
    %361 = vector.broadcast %340 : vector<1x32xf32> to vector<32x32xf32>
    %362 = arith.addf %360, %361 : vector<32x32xf32>
    %c0_223 = arith.constant 0 : index
    %c0_224 = arith.constant 0 : index
    %363 = vector.load %arg21[%c0_223, %c0_224] : memref<32x32xf32, #tpu.memory_space<vmem>>, vector<32x32xf32>
    tpu.vector_store %arg21[%c0_223, %c0_224], %362 {strides = array<i32>} : memref<32x32xf32, #tpu.memory_space<vmem>>, vector<32x32xf32>,
    %c0_225 = arith.constant 0 : index
    %c0_226 = arith.constant 0 : index
    %364 = tpu.strided_load %arg21[%c0_225, %c0_226] {strides = array<i32: 8, 1>} : memref<32x32xf32, #tpu.memory_space<vmem>>, vector<2x32xf32>
    %c16_227 = arith.constant 16 : index
    %c0_228 = arith.constant 0 : index
    %365 = tpu.strided_load %arg21[%c16_227, %c0_228] {strides = array<i32: 8, 1>} : memref<32x32xf32, #tpu.memory_space<vmem>>, vector<2x32xf32>
    %c0_229 = arith.constant 0 : index
    %c0_230 = arith.constant 0 : index
    %366 = memref.load %arg17[%c0_229, %c0_230] : memref<1x1xf32, #tpu.memory_space<smem>>
    %367 = vector.broadcast %366 : f32 to vector<2x32xf32>
    %368 = arith.mulf %364, %367 : vector<2x32xf32>
    %cst_231 = arith.constant 1.000000e+00 : f32
    %369 = arith.subf %cst_231, %366 : f32
    %370 = vector.broadcast %369 : f32 to vector<2x32xf32>
    %371 = arith.mulf %365, %370 : vector<2x32xf32>
    %372 = arith.addf %368, %371 : vector<2x32xf32>
    %c0_232 = arith.constant 0 : index
    %c0_233 = arith.constant 0 : index
    %373 = vector.load %arg15[%c0_232, %c0_233] : memref<32x128xf32, #tpu.memory_space<vmem>>, vector<32x128xf32>
    %cst_234 = arith.constant dense<0.000000e+00> : vector<2x128xf32>
    %374 = tpu.matmul %372, %373, %cst_234 {dimension_numbers = #tpu.dot_dimension_numbers<[1], [0], [0], [1], [0, 0, 1, 1], [], []>} : vector<2x32xf32>, vector<32x128xf32>, vector<2x128xf32> -> vector<2x128xf32>
    %c0_235 = arith.constant 0 : index
    %c0_236 = arith.constant 0 : index
    %375 = vector.load %arg16[%c0_235, %c0_236] : memref<1x128xf32, #tpu.memory_space<vmem>>, vector<1x128xf32>
    %376 = vector.broadcast %375 : vector<1x128xf32> to vector<2x128xf32>
    %377 = arith.addf %374, %376 : vector<2x128xf32>
    %c0_237 = arith.constant 0 : index
    %c0_238 = arith.constant 0 : index
    %378 = vector.load %arg18[%c0_237, %c0_238] : memref<2x128xf32, #tpu.memory_space<vmem>>, vector<2x128xf32>
    tpu.vector_store %arg18[%c0_237, %c0_238], %377 {strides = array<i32>} : memref<2x128xf32, #tpu.memory_space<vmem>>, vector<2x128xf32>,
    return
  }
}

</mosaic_0001>

<llo_original>
// kernel: tpu_custom_call.1
$region0: #{tpu_custom_call.1}
  #allocation0 [shape = 'u32[]', space=smem, size = 0x4, offset = 0x4, fixed_abs, tag = 'smem constant byte address 0x4 - core index']
  #allocation1 [shape = 'u32[144,128]{1,0:T(1,128)}', space=vmem, size = 0x12000, scoped, tag = 'internal scratch']
  #allocation2 [shape = 'f32[32,96]{1,0:T(8,128)}', space=vmem, size = 0x4000, scoped, tag = 'scratch operand']
  #allocation3 [shape = 'f32[32,32]{1,0:T(8,128)}', space=vmem, size = 0x4000, scoped, tag = 'scratch operand']
  #allocation4 [shape = 'f32[32,32]{1,0:T(8,128)}', space=vmem, size = 0x4000, scoped, tag = 'scratch operand']
  #allocation5 [shape = 'f32[1,1]{1,0:T(1,128)S(6)}', space=smem, size = 0x200, scoped, tag = 'scoped memory for tpu_custom_call.1']
  %s0 = inlined_call_operand.hbm [shape: f32[32,32], index: 0, kind: input, shape index: {}]
  %s1 = inlined_call_operand.hbm [shape: f32[1,32], index: 1, kind: input, shape index: {}]
  %s2 = inlined_call_operand.hbm [shape: f32[1,32], index: 2, kind: input, shape index: {}]
  %s3 = inlined_call_operand.vmem [shape: f32[2,32,96], index: 3, kind: input, shape index: {}]
  %s4 = inlined_call_operand.vmem [shape: f32[2,1,96], index: 4, kind: input, shape index: {}]
  %s5 = inlined_call_operand.vmem [shape: f32[2,32,32], index: 5, kind: input, shape index: {}]
  %s6 = inlined_call_operand.vmem [shape: f32[2,1,32], index: 6, kind: input, shape index: {}]
  %s7 = inlined_call_operand.vmem [shape: f32[2,1,32], index: 7, kind: input, shape index: {}]
  %s8 = inlined_call_operand.vmem [shape: f32[2,1,32], index: 8, kind: input, shape index: {}]
  %s9 = inlined_call_operand.vmem [shape: f32[2,32,64], index: 9, kind: input, shape index: {}]
  %s10 = inlined_call_operand.vmem [shape: f32[2,1,64], index: 10, kind: input, shape index: {}]
  %s11 = inlined_call_operand.vmem [shape: f32[2,64,32], index: 11, kind: input, shape index: {}]
  %s12 = inlined_call_operand.vmem [shape: f32[2,1,32], index: 12, kind: input, shape index: {}]
  %s13 = inlined_call_operand.vmem [shape: f32[2,1,32], index: 13, kind: input, shape index: {}]
  %s14 = inlined_call_operand.vmem [shape: f32[2,1,32], index: 14, kind: input, shape index: {}]
  %s15 = inlined_call_operand.hbm [shape: f32[32,128], index: 15, kind: input, shape index: {}]
  %s16 = inlined_call_operand.vmem [shape: f32[1,128], index: 16, kind: input, shape index: {}]
  %s17 = inlined_call_operand.<no memory space> [shape: f32[1,1], index: 17, kind: input, shape index: {}]
  %s18 = inlined_call_operand.hbm [shape: f32[2,128], index: 18, kind: output, shape index: {}]
  %s19 = sld [smem:[#allocation0]]
  $region98: #{tpu_custom_call.1} parent=0
    _
  %s21 = ssub.s32 1, %s19
  %s22 = scalar_select 0, %s21, %s19
  %23 = sst [smem:[#allocation5]] %s17
  $region1: #{tpu_custom_call.1} parent=0
    #allocation6 [shape = 'u8[16384]{0}', space=vmem, size = 0x4000, scoped, tag = 'input window, operand 0, single buffered']
    #allocation7 [shape = 's32[1]{0}', space=sflag, size = 0x4, scoped, tag = 'scoped memory for tpu_custom_call.1']
    #allocation8 [shape = 's32[1]{0}', space=sflag, size = 0x4, scoped, tag = 'scoped memory for tpu_custom_call.1']
    #allocation9 [shape = 'u8[512]{0}', space=vmem, size = 0x400, scoped, tag = 'input window, operand 1, single buffered']
    #allocation10 [shape = 's32[1]{0}', space=sflag, size = 0x4, scoped, tag = 'scoped memory for tpu_custom_call.1']
    #allocation11 [shape = 'u8[512]{0}', space=vmem, size = 0x400, scoped, tag = 'input window, operand 2, single buffered']
    #allocation12 [shape = 'u8[16384]{0}', space=vmem, size = 0x4000, scoped, tag = 'input window, operand 15, single buffered']
    #allocation13 [shape = 's32[1]{0}', space=sflag, size = 0x4, scoped, tag = 'scoped memory for tpu_custom_call.1']
    #allocation14 [shape = 'u8[1024]{0}', space=vmem, size = 0x400, scoped, tag = 'output window, operand 0, single buffered']
    %24 = vsyncpa [#allocation7], 0
    %25 = vsyncpa [#allocation10], 0
    %26 = vsyncpa [#allocation13], 0
    %27 = vsyncpa [#allocation8], 0
    // Predicated region
    $region2: #{tpu_custom_call.1} parent=1 // pred_check
      _
    $region3: #{tpu_custom_call.1} parent=1 // pred_check_branch
      %29 = sbr.rel (0) target = $region5
    $region4: #{tpu_custom_call.1} parent=1 // pred_region
      %s31 = ssub.s32 512, 512
      %32 = vsyncadd [#allocation7], %s31
      %s33 = sshll.u32 [#allocation6], 4
      %s34 = int_to_ptr.vmem [resolvable:$true] %s33
      %39 = dma.hbm_to_vmem [thread:$0]  %s0, 512, %s34, [#allocation7], 128, 128, 8
    $region5: #{tpu_custom_call.1} parent=1 // pred_fallthru
      _
    // Predicated region
    $region6: #{tpu_custom_call.1} parent=1 // pred_check
      _
    $region7: #{tpu_custom_call.1} parent=1 // pred_check_branch
      %41 = sbr.rel (0) target = $region9
    $region8: #{tpu_custom_call.1} parent=1 // pred_region
      %s43 = ssub.s32 16, 16
      %44 = vsyncadd [#allocation10], %s43
      %s46 = sshll.u32 [#allocation9], 4
      %s47 = int_to_ptr.vmem [resolvable:$true] %s46
      %49 = dma.hbm_to_vmem [thread:$0]  %s1, 16, %s47, [#allocation10]
    $region9: #{tpu_custom_call.1} parent=1 // pred_fallthru
      _
    // Predicated region
    $region10: #{tpu_custom_call.1} parent=1 // pred_check
      _
    $region11: #{tpu_custom_call.1} parent=1 // pred_check_branch
      %51 = sbr.rel (0) target = $region13
    $region12: #{tpu_custom_call.1} parent=1 // pred_region
      %s53 = ssub.s32 16, 16
      %54 = vsyncadd [#allocation10], %s53
      %s56 = sshll.u32 [#allocation11], 4
      %s57 = int_to_ptr.vmem [resolvable:$true] %s56
      %59 = dma.hbm_to_vmem [thread:$0]  %s2, 16, %s57, [#allocation10]
    $region13: #{tpu_custom_call.1} parent=1 // pred_fallthru
      _
    // Predicated region
    $region14: #{tpu_custom_call.1} parent=1 // pred_check
      _
    $region15: #{tpu_custom_call.1} parent=1 // pred_check_branch
      %61 = sbr.rel (0) target = $region17
    $region16: #{tpu_custom_call.1} parent=1 // pred_region
      _
    $region17: #{tpu_custom_call.1} parent=1 // pred_fallthru
      _
    // Predicated region
    $region18: #{tpu_custom_call.1} parent=1 // pred_check
      _
    $region19: #{tpu_custom_call.1} parent=1 // pred_check_branch
      %63 = sbr.rel (0) target = $region21
    $region20: #{tpu_custom_call.1} parent=1 // pred_region
      _
    $region21: #{tpu_custom_call.1} parent=1 // pred_fallthru
      _
    // Predicated region
    $region22: #{tpu_custom_call.1} parent=1 // pred_check
      _
    $region23: #{tpu_custom_call.1} parent=1 // pred_check_branch
      %65 = sbr.rel (0) target = $region25
    $region24: #{tpu_custom_call.1} parent=1 // pred_region
      _
    $region25: #{tpu_custom_call.1} parent=1 // pred_fallthru
      _
    // Predicated region
    $region26: #{tpu_custom_call.1} parent=1 // pred_check
      _
    $region27: #{tpu_custom_call.1} parent=1 // pred_check_branch
      %67 = sbr.rel (0) target = $region29
    $region28: #{tpu_custom_call.1} parent=1 // pred_region
      _
    $region29: #{tpu_custom_call.1} parent=1 // pred_fallthru
      _
    // Predicated region
    $region30: #{tpu_custom_call.1} parent=1 // pred_check
      _
    $region31: #{tpu_custom_call.1} parent=1 // pred_check_branch
      %69 = sbr.rel (0) target = $region33
    $region32: #{tpu_custom_call.1} parent=1 // pred_region
      _
    $region33: #{tpu_custom_call.1} parent=1 // pred_fallthru
      _
    // Predicated region
    $region34: #{tpu_custom_call.1} parent=1 // pred_check
      _
    $region35: #{tpu_custom_call.1} parent=1 // pred_check_branch
      %71 = sbr.rel (0) target = $region37
    $region36: #{tpu_custom_call.1} parent=1 // pred_region
      _
    $region37: #{tpu_custom_call.1} parent=1 // pred_fallthru
      _
    // Predicated region
    $region38: #{tpu_custom_call.1} parent=1 // pred_check
      _
    $region39: #{tpu_custom_call.1} parent=1 // pred_check_branch
      %73 = sbr.rel (0) target = $region41
    $region40: #{tpu_custom_call.1} parent=1 // pred_region
      _
    $region41: #{tpu_custom_call.1} parent=1 // pred_fallthru
      _
    // Predicated region
    $region42: #{tpu_custom_call.1} parent=1 // pred_check
      _
    $region43: #{tpu_custom_call.1} parent=1 // pred_check_branch
      %75 = sbr.rel (0) target = $region45
    $region44: #{tpu_custom_call.1} parent=1 // pred_region
      _
    $region45: #{tpu_custom_call.1} parent=1 // pred_fallthru
      _
    // Predicated region
    $region46: #{tpu_custom_call.1} parent=1 // pred_check
      _
    $region47: #{tpu_custom_call.1} parent=1 // pred_check_branch
      %77 = sbr.rel (0) target = $region49
    $region48: #{tpu_custom_call.1} parent=1 // pred_region
      _
    $region49: #{tpu_custom_call.1} parent=1 // pred_fallthru
      _
    // Predicated region
    $region50: #{tpu_custom_call.1} parent=1 // pred_check
      _
    $region51: #{tpu_custom_call.1} parent=1 // pred_check_branch
      %79 = sbr.rel (0) target = $region53
    $region52: #{tpu_custom_call.1} parent=1 // pred_region
      _
    $region53: #{tpu_custom_call.1} parent=1 // pred_fallthru
      _
    // Predicated region
    $region54: #{tpu_custom_call.1} parent=1 // pred_check
      _
    $region55: #{tpu_custom_call.1} parent=1 // pred_check_branch
      %81 = sbr.rel (0) target = $region57
    $region56: #{tpu_custom_call.1} parent=1 // pred_region
      _
    $region57: #{tpu_custom_call.1} parent=1 // pred_fallthru
      _
    // Predicated region
    $region58: #{tpu_custom_call.1} parent=1 // pred_check
      _
    $region59: #{tpu_custom_call.1} parent=1 // pred_check_branch
      %83 = sbr.rel (0) target = $region61
    $region60: #{tpu_custom_call.1} parent=1 // pred_region
      _
    $region61: #{tpu_custom_call.1} parent=1 // pred_fallthru
      _
    // Predicated region
    $region62: #{tpu_custom_call.1} parent=1 // pred_check
      _
    $region63: #{tpu_custom_call.1} parent=1 // pred_check_branch
      %85 = sbr.rel (0) target = $region65
    $region64: #{tpu_custom_call.1} parent=1 // pred_region
      %s87 = ssub.s32 512, 512
      %88 = vsyncadd [#allocation13], %s87
      %s89 = sshll.u32 [#allocation12], 4
      %s90 = int_to_ptr.vmem [resolvable:$true] %s89
      %95 = dma.hbm_to_vmem [thread:$0]  %s15, 512, %s90, [#allocation13], 128, 128, 8
    $region65: #{tpu_custom_call.1} parent=1 // pred_fallthru
      _
    // Predicated region
    $region66: #{tpu_custom_call.1} parent=1 // pred_check
      _
    $region67: #{tpu_custom_call.1} parent=1 // pred_check_branch
      %97 = sbr.rel (0) target = $region69
    $region68: #{tpu_custom_call.1} parent=1 // pred_region
      _
    $region69: #{tpu_custom_call.1} parent=1 // pred_fallthru
      _
    // Predicated region
    $region70: #{tpu_custom_call.1} parent=1 // pred_check
      _
    $region71: #{tpu_custom_call.1} parent=1 // pred_check_branch
      %99 = sbr.rel (0) target = $region73
    $region72: #{tpu_custom_call.1} parent=1 // pred_region
      _
    $region73: #{tpu_custom_call.1} parent=1 // pred_fallthru
      _
    // Predicated region
    $region74: #{tpu_custom_call.1} parent=1 // pred_check
      _
    $region75: #{tpu_custom_call.1} parent=1 // pred_check_branch
      %101 = sbr.rel (0) target = $region77
    $region76: #{tpu_custom_call.1} parent=1 // pred_region
      %102 = dma.done [#allocation7], 512
    $region77: #{tpu_custom_call.1} parent=1 // pred_fallthru
      _
    // Predicated region
    $region78: #{tpu_custom_call.1} parent=1 // pred_check
      _
    $region79: #{tpu_custom_call.1} parent=1 // pred_check_branch
      %104 = sbr.rel (0) target = $region81
    $region80: #{tpu_custom_call.1} parent=1 // pred_region
      %105 = dma.done [#allocation10], 16
    $region81: #{tpu_custom_call.1} parent=1 // pred_fallthru
      _
    // Predicated region
    $region82: #{tpu_custom_call.1} parent=1 // pred_check
      _
    $region83: #{tpu_custom_call.1} parent=1 // pred_check_branch
      %107 = sbr.rel (0) target = $region85
    $region84: #{tpu_custom_call.1} parent=1 // pred_region
      %108 = dma.done [#allocation10], 16
    $region85: #{tpu_custom_call.1} parent=1 // pred_fallthru
      _
    // Predicated region
    $region86: #{tpu_custom_call.1} parent=1 // pred_check
      _
    $region87: #{tpu_custom_call.1} parent=1 // pred_check_branch
      %110 = sbr.rel (0) target = $region89
    $region88: #{tpu_custom_call.1} parent=1 // pred_region
      %111 = dma.done [#allocation13], 512
    $region89: #{tpu_custom_call.1} parent=1 // pred_fallthru
      _
    %v112 = vld [vmem:[#allocation6] sm:$0xff]
    %v113 = vld [vmem:[#allocation6 + $0x8] sm:$0xff]
    %v114 = vld [vmem:[#allocation6 + $0x10] sm:$0xff]
    %v115 = vld [vmem:[#allocation6 + $0x18] sm:$0xff]
    %v116 = vld [vmem:[#allocation9] sm:$0x1]
    %v117 = vld [vmem:[#allocation11] sm:$0x1]
    %vm118 = vcmask 261120
    %v119 = vsel %vm118, %v112, 0.0
    %120 = vadd.xlane.f32.xlu0 %v119
    %v121 = vpop.xlane.xlu0 %120
    %v122 = vsel %vm118, %v113, 0.0
    %123 = vadd.xlane.f32.xlu0 %v122
    %v124 = vpop.xlane.xlu0 %123
    %v125 = vsel %vm118, %v114, 0.0
    %126 = vadd.xlane.f32.xlu0 %v125
    %v127 = vpop.xlane.xlu0 %126
    %v128 = vsel %vm118, %v115, 0.0
    %129 = vadd.xlane.f32.xlu0 %v128
    %v130 = vpop.xlane.xlu0 %129
    %v131 = vrcp.pop 32.0
    %v132 = vmul.f32 %v121, %v131
    %v133 = vmul.f32 %v124, %v131
    %v134 = vmul.f32 %v127, %v131
    %v135 = vmul.f32 %v130, %v131
    %v136 = vsub.f32 %v112, %v132
    %v137 = vsub.f32 %v113, %v133
    %v138 = vsub.f32 %v114, %v134
    %v139 = vsub.f32 %v115, %v135
    %v140 = vmul.f32 %v136, %v136
    %v141 = vmul.f32 %v137, %v137
    %v142 = vmul.f32 %v138, %v138
    %v143 = vmul.f32 %v139, %v139
    %v144 = vsel %vm118, %v140, 0.0
    %145 = vadd.xlane.f32.xlu0 %v144
    %v146 = vpop.xlane.xlu0 %145
    %v147 = vsel %vm118, %v141, 0.0
    %148 = vadd.xlane.f32.xlu0 %v147
    %v149 = vpop.xlane.xlu0 %148
    %v150 = vsel %vm118, %v142, 0.0
    %151 = vadd.xlane.f32.xlu0 %v150
    %v152 = vpop.xlane.xlu0 %151
    %v153 = vsel %vm118, %v143, 0.0
    %154 = vadd.xlane.f32.xlu0 %v153
    %v155 = vpop.xlane.xlu0 %154
    %v156 = vmul.f32 %v146, %v131
    %v157 = vmul.f32 %v149, %v131
    %v158 = vmul.f32 %v152, %v131
    %v159 = vmul.f32 %v155, %v131
    %v160 = vadd.f32 %v156, 1e-05
    %v161 = vadd.f32 %v157, 1e-05
    %v162 = vadd.f32 %v158, 1e-05
    %v163 = vadd.f32 %v159, 1e-05
    %v164 = vrsqrt.pop %v160
    %v165 = vrsqrt.pop %v161
    %v166 = vrsqrt.pop %v162
    %v167 = vrsqrt.pop %v163
    %v168 = vmul.f32 %v136, %v164
    %v169 = vmul.f32 %v137, %v165
    %v170 = vmul.f32 %v138, %v166
    %v171 = vmul.f32 %v139, %v167
    %v173 = vlaneseq
    %v174 = vshrl.u32 %v173, 7
    %v175 = vsub.s32 0, %v174
    %v176 = vrot.slane %v116, %v175
    %v178 = vmul.f32 %v168, %v176
    %v179 = vmul.f32 %v169, %v176
    %v180 = vmul.f32 %v170, %v176
    %v181 = vmul.f32 %v171, %v176
    %v183 = vlaneseq
    %v184 = vshrl.u32 %v183, 7
    %v185 = vsub.s32 0, %v184
    %v186 = vrot.slane %v117, %v185
    %v188 = vadd.f32 %v178, %v186
    %v189 = vadd.f32 %v179, %v186
    %v190 = vadd.f32 %v180, %v186
    %v191 = vadd.f32 %v181, %v186
    %v192 = vld [vmem:[%s3] sm:$0xff]
    %v193 = vld [vmem:[%s3 + $0x8] sm:$0xff]
    %v194 = vld [vmem:[%s3 + $0x10] sm:$0xff]
    %v195 = vld [vmem:[%s3 + $0x18] sm:$0xff]
    %v196 = vld [vmem:[%s4] sm:$0x1]
    %v198 = vlaneseq
    %v199 = vshrl.u32 %v198, 7
    %v200 = vsub.s32 0, %v199
    %v201 = vrot.slane %v196, %v200
    %v204 = vsel %vm118, %v188, 0
    %v207 = vsel %vm118, %v189, 0
    %v210 = vsel %vm118, %v190, 0
    %v213 = vsel %vm118, %v191, 0
    %215 = vmatprep.subr.mxu0 0.0
    %216 = vmatpush1.msra.mxu0 0.0
    %217 = vmatprep.subr.mxu0 0.0
    %218 = vmatpush1.msra.mxu0 0.0
    %219 = vmatprep.subr.mxu0 0.0
    %220 = vmatpush1.msra.mxu0 0.0
    %221 = vmatprep.subr.mxu0 0.0
    %222 = vmatpush1.msra.mxu0 0.0
    %223 = vmatprep.subr.mxu0 0.0
    %224 = vmatpush1.msra.mxu0 0.0
    %225 = vmatprep.subr.mxu0 0.0
    %226 = vmatpush1.msra.mxu0 0.0
    %227 = vmatprep.subr.mxu0 0.0
    %228 = vmatpush1.msra.mxu0 0.0
    %229 = vmatprep.subr.mxu0 0.0
    %230 = vmatpush1.msra.mxu0 0.0
    %231 = vmatprep.subr.mxu0 0.0
    %232 = vmatpush1.msra.mxu0 0.0
    %233 = vmatprep.subr.mxu0 0.0
    %234 = vmatpush1.msra.mxu0 0.0
    %235 = vmatprep.subr.mxu0 0.0
    %236 = vmatpush1.msra.mxu0 0.0
    %237 = vmatprep.subr.mxu0 0.0
    %238 = vmatpush1.msra.mxu0 0.0
    %239 = vmatprep.subr.mxu0 0.0
    %240 = vmatpush1.msra.mxu0 %v195
    %241 = vmatprep.subr.mxu0 0.0
    %242 = vmatpush1.msra.mxu0 %v194
    %243 = vmatprep.subr.mxu0 0.0
    %244 = vmatpush1.msra.mxu0 %v193
    %245 = vmatprep.subr.mxu0 0.0
    %246 = vmatpush1.msra.mxu0 %v192
    %247 = vmatprep.subr.mxu0 0.0
    %248 = vmatpush2.msra.mxu0 0.0
    %249 = vmatprep.subr.mxu0 0.0
    %250 = vmatpush2.msra.mxu0 0.0
    %251 = vmatprep.subr.mxu0 0.0
    %252 = vmatpush2.msra.mxu0 0.0
    %253 = vmatprep.subr.mxu0 0.0
    %254 = vmatpush2.msra.mxu0 0.0
    %255 = vmatprep.subr.mxu0 0.0
    %256 = vmatpush2.msra.mxu0 0.0
    %257 = vmatprep.subr.mxu0 0.0
    %258 = vmatpush2.msra.mxu0 0.0
    %259 = vmatprep.subr.mxu0 0.0
    %260 = vmatpush2.msra.mxu0 0.0
    %261 = vmatprep.subr.mxu0 0.0
    %262 = vmatpush2.msra.mxu0 0.0
    %263 = vmatprep.subr.mxu0 0.0
    %264 = vmatpush2.msra.mxu0 0.0
    %265 = vmatprep.subr.mxu0 0.0
    %266 = vmatpush2.msra.mxu0 0.0
    %267 = vmatprep.subr.mxu0 0.0
    %268 = vmatpush2.msra.mxu0 0.0
    %269 = vmatprep.subr.mxu0 0.0
    %270 = vmatpush2.msra.mxu0 0.0
    %271 = vmatprep.subr.mxu0 0.0
    %272 = vmatpush2.msra.mxu0 0.0
    %273 = vmatprep.subr.mxu0 0.0
    %274 = vmatpush2.msra.mxu0 0.0
    %275 = vmatprep.subr.mxu0 0.0
    %276 = vmatpush2.msra.mxu0 0.0
    %277 = vmatprep.subr.mxu0 0.0
    %278 = vmatpush2.msra.mxu0 0.0
    %279 = vmatprep.mubr.f32.mxu0 0.0
    %280 = vmatmul.mubr.f32.gmra.mxu0 %v204
    %v281 = vpop.f32.mrf.mxu0
    %v282 = vadd.f32 %v201, %v281
    %v283 = vpop.f32.mrf.mxu0
    %284 = vmatprep.mubr.f32.mxu0 0.0
    %285 = vmatmul.mubr.f32.gmra.mxu0 %v207
    %v286 = vpop.f32.mrf.mxu0
    %v287 = vadd.f32 %v201, %v286
    %v288 = vpop.f32.mrf.mxu0
    %289 = vmatprep.mubr.f32.mxu0 0.0
    %290 = vmatmul.mubr.f32.gmra.mxu0 %v210
    %v291 = vpop.f32.mrf.mxu0
    %v292 = vadd.f32 %v201, %v291
    %v293 = vpop.f32.mrf.mxu0
    %294 = vmatprep.mubr.f32.mxu0 0.0
    %295 = vmatmul.mubr.f32.gmra.mxu0 %v213
    %v296 = vpop.f32.mrf.mxu0
    %v297 = vadd.f32 %v201, %v296
    %v298 = vpop.f32.mrf.mxu0
    %299 = vdwg.mxu0
    %vm300 = vcmask 785408
    %301 = vst.msk [vmem:[#allocation2] sm:$0xff] %vm300, %v282
    %302 = vst.msk [vmem:[#allocation2 + $0x8] sm:$0xff] %vm300, %v287
    %303 = vst.msk [vmem:[#allocation2 + $0x10] sm:$0xff] %vm300, %v292
    %304 = vst.msk [vmem:[#allocation2 + $0x18] sm:$0xff] %vm300, %v297
    %v305 = vld [vmem:[#allocation2] sm:$0xff]
    %307 = vrot.lane.b32.xlu0 %v305, 96
    %v308 = vpop.permute.xlu0 %307
    %v309 = vsel %vm118, %v305, 0
    %v311 = vsel %vm118, %v308, 0
    %313 = vmatprep.subr.mxu0 0.0
    %314 = vmatpush1.xpose.msra.mxu0 0.0
    %315 = vmatprep.subr.mxu0 0.0
    %316 = vmatpush1.xpose.msra.mxu0 0.0
    %317 = vmatprep.subr.mxu0 0.0
    %318 = vmatpush1.xpose.msra.mxu0 0.0
    %319 = vmatprep.subr.mxu0 0.0
    %320 = vmatpush1.xpose.msra.mxu0 0.0
    %321 = vmatprep.subr.mxu0 0.0
    %322 = vmatpush1.xpose.msra.mxu0 0.0
    %323 = vmatprep.subr.mxu0 0.0
    %324 = vmatpush1.xpose.msra.mxu0 0.0
    %325 = vmatprep.subr.mxu0 0.0
    %326 = vmatpush1.xpose.msra.mxu0 0.0
    %327 = vmatprep.subr.mxu0 0.0
    %328 = vmatpush1.xpose.msra.mxu0 0.0
    %329 = vmatprep.subr.mxu0 0.0
    %330 = vmatpush1.xpose.msra.mxu0 0.0
    %331 = vmatprep.subr.mxu0 0.0
    %332 = vmatpush1.xpose.msra.mxu0 0.0
    %333 = vmatprep.subr.mxu0 0.0
    %334 = vmatpush1.xpose.msra.mxu0 0.0
    %335 = vmatprep.subr.mxu0 0.0
    %336 = vmatpush1.xpose.msra.mxu0 0.0
    %337 = vmatprep.subr.mxu0 0.0
    %338 = vmatpush1.xpose.msra.mxu0 0.0
    %339 = vmatprep.subr.mxu0 0.0
    %340 = vmatpush1.xpose.msra.mxu0 0.0
    %341 = vmatprep.subr.mxu0 0.0
    %342 = vmatpush1.xpose.msra.mxu0 0.0
    %343 = vmatprep.subr.mxu0 0.0
    %344 = vmatpush1.xpose.msra.mxu0 %v311
    %345 = vmatprep.subr.mxu0 0.0
    %346 = vmatpush2.xpose.msra.mxu0 0.0
    %347 = vmatprep.subr.mxu0 0.0
    %348 = vmatpush2.xpose.msra.mxu0 0.0
    %349 = vmatprep.subr.mxu0 0.0
    %350 = vmatpush2.xpose.msra.mxu0 0.0
    %351 = vmatprep.subr.mxu0 0.0
    %352 = vmatpush2.xpose.msra.mxu0 0.0
    %353 = vmatprep.subr.mxu0 0.0
    %354 = vmatpush2.xpose.msra.mxu0 0.0
    %355 = vmatprep.subr.mxu0 0.0
    %356 = vmatpush2.xpose.msra.mxu0 0.0
    %357 = vmatprep.subr.mxu0 0.0
    %358 = vmatpush2.xpose.msra.mxu0 0.0
    %359 = vmatprep.subr.mxu0 0.0
    %360 = vmatpush2.xpose.msra.mxu0 0.0
    %361 = vmatprep.subr.mxu0 0.0
    %362 = vmatpush2.xpose.msra.mxu0 0.0
    %363 = vmatprep.subr.mxu0 0.0
    %364 = vmatpush2.xpose.msra.mxu0 0.0
    %365 = vmatprep.subr.mxu0 0.0
    %366 = vmatpush2.xpose.msra.mxu0 0.0
    %367 = vmatprep.subr.mxu0 0.0
    %368 = vmatpush2.xpose.msra.mxu0 0.0
    %369 = vmatprep.subr.mxu0 0.0
    %370 = vmatpush2.xpose.msra.mxu0 0.0
    %371 = vmatprep.subr.mxu0 0.0
    %372 = vmatpush2.xpose.msra.mxu0 0.0
    %373 = vmatprep.subr.mxu0 0.0
    %374 = vmatpush2.xpose.msra.mxu0 0.0
    %375 = vmatprep.subr.mxu0 0.0
    %376 = vmatpush2.xpose.msra.mxu0 0.0
    %377 = vmatprep.mubr.f32.mxu0 0.0
    %378 = vmatmul.mubr.f32.gmra.mxu0 %v309
    %v379 = vpop.f32.mrf.mxu0
    %v380 = vadd.f32 0.0, %v379
    %v381 = vpop.f32.mrf.mxu0
    %382 = vdwg.mxu0
    %v383 = vmul.f32 %v380, 0.17677669
    %vm384 = vcmask 64512
    %v385 = vsel %vm384, %v383, -inf
    %386 = vmax.xlane.f32.xlu0 %v385
    %v387 = vpop.xlane.xlu0 %386
    %v388 = vsub.f32 %v383, %v387
    %v389 = vmul.f32 %v388, 1.442695
    %v390 = vpow.pop %v389
    %v391 = vsel %vm384, %v390, 0.0
    %392 = vadd.xlane.f32.xlu0 %v391
    %v393 = vpop.xlane.xlu0 %392
    %v394 = vrcp.pop %v393
    %v395 = vmul.f32 %v390, %v394
    %396 = vrot.lane.b32.xlu0 %v305, 64
    %v397 = vpop.permute.xlu0 %396
    %v400 = vsel %vm384, %v395, 0
    %402 = vmatprep.subr.mxu0 0.0
    %403 = vmatpush1.msra.mxu0 0.0
    %404 = vmatprep.subr.mxu0 0.0
    %405 = vmatpush1.msra.mxu0 0.0
    %406 = vmatprep.subr.mxu0 0.0
    %407 = vmatpush1.msra.mxu0 0.0
    %408 = vmatprep.subr.mxu0 0.0
    %409 = vmatpush1.msra.mxu0 0.0
    %410 = vmatprep.subr.mxu0 0.0
    %411 = vmatpush1.msra.mxu0 0.0
    %412 = vmatprep.subr.mxu0 0.0
    %413 = vmatpush1.msra.mxu0 0.0
    %414 = vmatprep.subr.mxu0 0.0
    %415 = vmatpush1.msra.mxu0 0.0
    %416 = vmatprep.subr.mxu0 0.0
    %417 = vmatpush1.msra.mxu0 0.0
    %418 = vmatprep.subr.mxu0 0.0
    %419 = vmatpush1.msra.mxu0 0.0
    %420 = vmatprep.subr.mxu0 0.0
    %421 = vmatpush1.msra.mxu0 0.0
    %422 = vmatprep.subr.mxu0 0.0
    %423 = vmatpush1.msra.mxu0 0.0
    %424 = vmatprep.subr.mxu0 0.0
    %425 = vmatpush1.msra.mxu0 0.0
    %426 = vmatprep.subr.mxu0 0.0
    %427 = vmatpush1.msra.mxu0 0.0
    %428 = vmatprep.subr.mxu0 0.0
    %429 = vmatpush1.msra.mxu0 0.0
    %430 = vmatprep.subr.mxu0 0.0
    %431 = vmatpush1.msra.mxu0 0.0
    %432 = vmatprep.subr.mxu0 0.0
    %433 = vmatpush1.msra.mxu0 %v397
    %434 = vmatprep.subr.mxu0 0.0
    %435 = vmatpush2.msra.mxu0 0.0
    %436 = vmatprep.subr.mxu0 0.0
    %437 = vmatpush2.msra.mxu0 0.0
    %438 = vmatprep.subr.mxu0 0.0
    %439 = vmatpush2.msra.mxu0 0.0
    %440 = vmatprep.subr.mxu0 0.0
    %441 = vmatpush2.msra.mxu0 0.0
    %442 = vmatprep.subr.mxu0 0.0
    %443 = vmatpush2.msra.mxu0 0.0
    %444 = vmatprep.subr.mxu0 0.0
    %445 = vmatpush2.msra.mxu0 0.0
    %446 = vmatprep.subr.mxu0 0.0
    %447 = vmatpush2.msra.mxu0 0.0
    %448 = vmatprep.subr.mxu0 0.0
    %449 = vmatpush2.msra.mxu0 0.0
    %450 = vmatprep.subr.mxu0 0.0
    %451 = vmatpush2.msra.mxu0 0.0
    %452 = vmatprep.subr.mxu0 0.0
    %453 = vmatpush2.msra.mxu0 0.0
    %454 = vmatprep.subr.mxu0 0.0
    %455 = vmatpush2.msra.mxu0 0.0
    %456 = vmatprep.subr.mxu0 0.0
    %457 = vmatpush2.msra.mxu0 0.0
    %458 = vmatprep.subr.mxu0 0.0
    %459 = vmatpush2.msra.mxu0 0.0
    %460 = vmatprep.subr.mxu0 0.0
    %461 = vmatpush2.msra.mxu0 0.0
    %462 = vmatprep.subr.mxu0 0.0
    %463 = vmatpush2.msra.mxu0 0.0
    %464 = vmatprep.subr.mxu0 0.0
    %465 = vmatpush2.msra.mxu0 0.0
    %466 = vmatprep.mubr.f32.mxu0 0.0
    %467 = vmatmul.mubr.f32.gmra.mxu0 %v400
    %v468 = vpop.f32.mrf.mxu0
    %v469 = vadd.f32 0.0, %v468
    %v470 = vpop.f32.mrf.mxu0
    %471 = vdwg.mxu0
    %472 = vst.msk [vmem:[#allocation3] sm:$0xff] %vm118, %v469
    %v473 = vld [vmem:[#allocation2 + $0x8] sm:$0xff]
    %475 = vrot.lane.b32.xlu0 %v473, 96
    %v476 = vpop.permute.xlu0 %475
    %v477 = vsel %vm118, %v473, 0
    %v479 = vsel %vm118, %v476, 0
    %481 = vmatprep.subr.mxu0 0.0
    %482 = vmatpush1.xpose.msra.mxu0 0.0
    %483 = vmatprep.subr.mxu0 0.0
    %484 = vmatpush1.xpose.msra.mxu0 0.0
    %485 = vmatprep.subr.mxu0 0.0
    %486 = vmatpush1.xpose.msra.mxu0 0.0
    %487 = vmatprep.subr.mxu0 0.0
    %488 = vmatpush1.xpose.msra.mxu0 0.0
    %489 = vmatprep.subr.mxu0 0.0
    %490 = vmatpush1.xpose.msra.mxu0 0.0
    %491 = vmatprep.subr.mxu0 0.0
    %492 = vmatpush1.xpose.msra.mxu0 0.0
    %493 = vmatprep.subr.mxu0 0.0
    %494 = vmatpush1.xpose.msra.mxu0 0.0
    %495 = vmatprep.subr.mxu0 0.0
    %496 = vmatpush1.xpose.msra.mxu0 0.0
    %497 = vmatprep.subr.mxu0 0.0
    %498 = vmatpush1.xpose.msra.mxu0 0.0
    %499 = vmatprep.subr.mxu0 0.0
    %500 = vmatpush1.xpose.msra.mxu0 0.0
    %501 = vmatprep.subr.mxu0 0.0
    %502 = vmatpush1.xpose.msra.mxu0 0.0
    %503 = vmatprep.subr.mxu0 0.0
    %504 = vmatpush1.xpose.msra.mxu0 0.0
    %505 = vmatprep.subr.mxu0 0.0
    %506 = vmatpush1.xpose.msra.mxu0 0.0
    %507 = vmatprep.subr.mxu0 0.0
    %508 = vmatpush1.xpose.msra.mxu0 0.0
    %509 = vmatprep.subr.mxu0 0.0
    %510 = vmatpush1.xpose.msra.mxu0 0.0
    %511 = vmatprep.subr.mxu0 0.0
    %512 = vmatpush1.xpose.msra.mxu0 %v479
    %513 = vmatprep.subr.mxu0 0.0
    %514 = vmatpush2.xpose.msra.mxu0 0.0
    %515 = vmatprep.subr.mxu0 0.0
    %516 = vmatpush2.xpose.msra.mxu0 0.0
    %517 = vmatprep.subr.mxu0 0.0
    %518 = vmatpush2.xpose.msra.mxu0 0.0
    %519 = vmatprep.subr.mxu0 0.0
    %520 = vmatpush2.xpose.msra.mxu0 0.0
    %521 = vmatprep.subr.mxu0 0.0
    %522 = vmatpush2.xpose.msra.mxu0 0.0
    %523 = vmatprep.subr.mxu0 0.0
    %524 = vmatpush2.xpose.msra.mxu0 0.0
    %525 = vmatprep.subr.mxu0 0.0
    %526 = vmatpush2.xpose.msra.mxu0 0.0
    %527 = vmatprep.subr.mxu0 0.0
    %528 = vmatpush2.xpose.msra.mxu0 0.0
    %529 = vmatprep.subr.mxu0 0.0
    %530 = vmatpush2.xpose.msra.mxu0 0.0
    %531 = vmatprep.subr.mxu0 0.0
    %532 = vmatpush2.xpose.msra.mxu0 0.0
    %533 = vmatprep.subr.mxu0 0.0
    %534 = vmatpush2.xpose.msra.mxu0 0.0
    %535 = vmatprep.subr.mxu0 0.0
    %536 = vmatpush2.xpose.msra.mxu0 0.0
    %537 = vmatprep.subr.mxu0 0.0
    %538 = vmatpush2.xpose.msra.mxu0 0.0
    %539 = vmatprep.subr.mxu0 0.0
    %540 = vmatpush2.xpose.msra.mxu0 0.0
    %541 = vmatprep.subr.mxu0 0.0
    %542 = vmatpush2.xpose.msra.mxu0 0.0
    %543 = vmatprep.subr.mxu0 0.0
    %544 = vmatpush2.xpose.msra.mxu0 0.0
    %545 = vmatprep.mubr.f32.mxu0 0.0
    %546 = vmatmul.mubr.f32.gmra.mxu0 %v477
    %v547 = vpop.f32.mrf.mxu0
    %v548 = vadd.f32 0.0, %v547
    %v549 = vpop.f32.mrf.mxu0
    %550 = vdwg.mxu0
    %v551 = vmul.f32 %v548, 0.17677669
    %v552 = vsel %vm384, %v551, -inf
    %553 = vmax.xlane.f32.xlu0 %v552
    %v554 = vpop.xlane.xlu0 %553
    %v555 = vsub.f32 %v551, %v554
    %v556 = vmul.f32 %v555, 1.442695
    %v557 = vpow.pop %v556
    %v558 = vsel %vm384, %v557, 0.0
    %559 = vadd.xlane.f32.xlu0 %v558
    %v560 = vpop.xlane.xlu0 %559
    %v561 = vrcp.pop %v560
    %v562 = vmul.f32 %v557, %v561
    %563 = vrot.lane.b32.xlu0 %v473, 64
    %v564 = vpop.permute.xlu0 %563
    %v567 = vsel %vm384, %v562, 0
    %569 = vmatprep.subr.mxu0 0.0
    %570 = vmatpush1.msra.mxu0 0.0
    %571 = vmatprep.subr.mxu0 0.0
    %572 = vmatpush1.msra.mxu0 0.0
    %573 = vmatprep.subr.mxu0 0.0
    %574 = vmatpush1.msra.mxu0 0.0
    %575 = vmatprep.subr.mxu0 0.0
    %576 = vmatpush1.msra.mxu0 0.0
    %577 = vmatprep.subr.mxu0 0.0
    %578 = vmatpush1.msra.mxu0 0.0
    %579 = vmatprep.subr.mxu0 0.0
    %580 = vmatpush1.msra.mxu0 0.0
    %581 = vmatprep.subr.mxu0 0.0
    %582 = vmatpush1.msra.mxu0 0.0
    %583 = vmatprep.subr.mxu0 0.0
    %584 = vmatpush1.msra.mxu0 0.0
    %585 = vmatprep.subr.mxu0 0.0
    %586 = vmatpush1.msra.mxu0 0.0
    %587 = vmatprep.subr.mxu0 0.0
    %588 = vmatpush1.msra.mxu0 0.0
    %589 = vmatprep.subr.mxu0 0.0
    %590 = vmatpush1.msra.mxu0 0.0
    %591 = vmatprep.subr.mxu0 0.0
    %592 = vmatpush1.msra.mxu0 0.0
    %593 = vmatprep.subr.mxu0 0.0
    %594 = vmatpush1.msra.mxu0 0.0
    %595 = vmatprep.subr.mxu0 0.0
    %596 = vmatpush1.msra.mxu0 0.0
    %597 = vmatprep.subr.mxu0 0.0
    %598 = vmatpush1.msra.mxu0 0.0
    %599 = vmatprep.subr.mxu0 0.0
    %600 = vmatpush1.msra.mxu0 %v564
    %601 = vmatprep.subr.mxu0 0.0
    %602 = vmatpush2.msra.mxu0 0.0
    %603 = vmatprep.subr.mxu0 0.0
    %604 = vmatpush2.msra.mxu0 0.0
    %605 = vmatprep.subr.mxu0 0.0
    %606 = vmatpush2.msra.mxu0 0.0
    %607 = vmatprep.subr.mxu0 0.0
    %608 = vmatpush2.msra.mxu0 0.0
    %609 = vmatprep.subr.mxu0 0.0
    %610 = vmatpush2.msra.mxu0 0.0
    %611 = vmatprep.subr.mxu0 0.0
    %612 = vmatpush2.msra.mxu0 0.0
    %613 = vmatprep.subr.mxu0 0.0
    %614 = vmatpush2.msra.mxu0 0.0
    %615 = vmatprep.subr.mxu0 0.0
    %616 = vmatpush2.msra.mxu0 0.0
    %617 = vmatprep.subr.mxu0 0.0
    %618 = vmatpush2.msra.mxu0 0.0
    %619 = vmatprep.subr.mxu0 0.0
    %620 = vmatpush2.msra.mxu0 0.0
    %621 = vmatprep.subr.mxu0 0.0
    %622 = vmatpush2.msra.mxu0 0.0
    %623 = vmatprep.subr.mxu0 0.0
    %624 = vmatpush2.msra.mxu0 0.0
    %625 = vmatprep.subr.mxu0 0.0
    %626 = vmatpush2.msra.mxu0 0.0
    %627 = vmatprep.subr.mxu0 0.0
    %628 = vmatpush2.msra.mxu0 0.0
    %629 = vmatprep.subr.mxu0 0.0
    %630 = vmatpush2.msra.mxu0 0.0
    %631 = vmatprep.subr.mxu0 0.0
    %632 = vmatpush2.msra.mxu0 0.0
    %633 = vmatprep.mubr.f32.mxu0 0.0
    %634 = vmatmul.mubr.f32.gmra.mxu0 %v567
    %v635 = vpop.f32.mrf.mxu0
    %v636 = vadd.f32 0.0, %v635
    %v637 = vpop.f32.mrf.mxu0
    %638 = vdwg.mxu0
    %639 = vst.msk [vmem:[#allocation3 + $0x8] sm:$0xff] %vm118, %v636
    %v640 = vld [vmem:[#allocation2 + $0x10] sm:$0xff]
    %642 = vrot.lane.b32.xlu0 %v640, 96
    %v643 = vpop.permute.xlu0 %642
    %v644 = vsel %vm118, %v640, 0
    %v646 = vsel %vm118, %v643, 0
    %648 = vmatprep.subr.mxu0 0.0
    %649 = vmatpush1.xpose.msra.mxu0 0.0
    %650 = vmatprep.subr.mxu0 0.0
    %651 = vmatpush1.xpose.msra.mxu0 0.0
    %652 = vmatprep.subr.mxu0 0.0
    %653 = vmatpush1.xpose.msra.mxu0 0.0
    %654 = vmatprep.subr.mxu0 0.0
    %655 = vmatpush1.xpose.msra.mxu0 0.0
    %656 = vmatprep.subr.mxu0 0.0
    %657 = vmatpush1.xpose.msra.mxu0 0.0
    %658 = vmatprep.subr.mxu0 0.0
    %659 = vmatpush1.xpose.msra.mxu0 0.0
    %660 = vmatprep.subr.mxu0 0.0
    %661 = vmatpush1.xpose.msra.mxu0 0.0
    %662 = vmatprep.subr.mxu0 0.0
    %663 = vmatpush1.xpose.msra.mxu0 0.0
    %664 = vmatprep.subr.mxu0 0.0
    %665 = vmatpush1.xpose.msra.mxu0 0.0
    %666 = vmatprep.subr.mxu0 0.0
    %667 = vmatpush1.xpose.msra.mxu0 0.0
    %668 = vmatprep.subr.mxu0 0.0
    %669 = vmatpush1.xpose.msra.mxu0 0.0
    %670 = vmatprep.subr.mxu0 0.0
    %671 = vmatpush1.xpose.msra.mxu0 0.0
    %672 = vmatprep.subr.mxu0 0.0
    %673 = vmatpush1.xpose.msra.mxu0 0.0
    %674 = vmatprep.subr.mxu0 0.0
    %675 = vmatpush1.xpose.msra.mxu0 0.0
    %676 = vmatprep.subr.mxu0 0.0
    %677 = vmatpush1.xpose.msra.mxu0 0.0
    %678 = vmatprep.subr.mxu0 0.0
    %679 = vmatpush1.xpose.msra.mxu0 %v646
    %680 = vmatprep.subr.mxu0 0.0
    %681 = vmatpush2.xpose.msra.mxu0 0.0
    %682 = vmatprep.subr.mxu0 0.0
    %683 = vmatpush2.xpose.msra.mxu0 0.0
    %684 = vmatprep.subr.mxu0 0.0
    %685 = vmatpush2.xpose.msra.mxu0 0.0
    %686 = vmatprep.subr.mxu0 0.0
    %687 = vmatpush2.xpose.msra.mxu0 0.0
    %688 = vmatprep.subr.mxu0 0.0
    %689 = vmatpush2.xpose.msra.mxu0 0.0
    %690 = vmatprep.subr.mxu0 0.0
    %691 = vmatpush2.xpose.msra.mxu0 0.0
    %692 = vmatprep.subr.mxu0 0.0
    %693 = vmatpush2.xpose.msra.mxu0 0.0
    %694 = vmatprep.subr.mxu0 0.0
    %695 = vmatpush2.xpose.msra.mxu0 0.0
    %696 = vmatprep.subr.mxu0 0.0
    %697 = vmatpush2.xpose.msra.mxu0 0.0
    %698 = vmatprep.subr.mxu0 0.0
    %699 = vmatpush2.xpose.msra.mxu0 0.0
    %700 = vmatprep.subr.mxu0 0.0
    %701 = vmatpush2.xpose.msra.mxu0 0.0
    %702 = vmatprep.subr.mxu0 0.0
    %703 = vmatpush2.xpose.msra.mxu0 0.0
    %704 = vmatprep.subr.mxu0 0.0
    %705 = vmatpush2.xpose.msra.mxu0 0.0
    %706 = vmatprep.subr.mxu0 0.0
    %707 = vmatpush2.xpose.msra.mxu0 0.0
    %708 = vmatprep.subr.mxu0 0.0
    %709 = vmatpush2.xpose.msra.mxu0 0.0
    %710 = vmatprep.subr.mxu0 0.0
    %711 = vmatpush2.xpose.msra.mxu0 0.0
    %712 = vmatprep.mubr.f32.mxu0 0.0
    %713 = vmatmul.mubr.f32.gmra.mxu0 %v644
    %v714 = vpop.f32.mrf.mxu0
    %v715 = vadd.f32 0.0, %v714
    %v716 = vpop.f32.mrf.mxu0
    %717 = vdwg.mxu0
    %v718 = vmul.f32 %v715, 0.17677669
    %v719 = vsel %vm384, %v718, -inf
    %720 = vmax.xlane.f32.xlu0 %v719
    %v721 = vpop.xlane.xlu0 %720
    %v722 = vsub.f32 %v718, %v721
    %v723 = vmul.f32 %v722, 1.442695
    %v724 = vpow.pop %v723
    %v725 = vsel %vm384, %v724, 0.0
    %726 = vadd.xlane.f32.xlu0 %v725
    %v727 = vpop.xlane.xlu0 %726
    %v728 = vrcp.pop %v727
    %v729 = vmul.f32 %v724, %v728
    %730 = vrot.lane.b32.xlu0 %v640, 64
    %v731 = vpop.permute.xlu0 %730
    %v734 = vsel %vm384, %v729, 0
    %736 = vmatprep.subr.mxu0 0.0
    %737 = vmatpush1.msra.mxu0 0.0
    %738 = vmatprep.subr.mxu0 0.0
    %739 = vmatpush1.msra.mxu0 0.0
    %740 = vmatprep.subr.mxu0 0.0
    %741 = vmatpush1.msra.mxu0 0.0
    %742 = vmatprep.subr.mxu0 0.0
    %743 = vmatpush1.msra.mxu0 0.0
    %744 = vmatprep.subr.mxu0 0.0
    %745 = vmatpush1.msra.mxu0 0.0
    %746 = vmatprep.subr.mxu0 0.0
    %747 = vmatpush1.msra.mxu0 0.0
    %748 = vmatprep.subr.mxu0 0.0
    %749 = vmatpush1.msra.mxu0 0.0
    %750 = vmatprep.subr.mxu0 0.0
    %751 = vmatpush1.msra.mxu0 0.0
    %752 = vmatprep.subr.mxu0 0.0
    %753 = vmatpush1.msra.mxu0 0.0
    %754 = vmatprep.subr.mxu0 0.0
    %755 = vmatpush1.msra.mxu0 0.0
    %756 = vmatprep.subr.mxu0 0.0
    %757 = vmatpush1.msra.mxu0 0.0
    %758 = vmatprep.subr.mxu0 0.0
    %759 = vmatpush1.msra.mxu0 0.0
    %760 = vmatprep.subr.mxu0 0.0
    %761 = vmatpush1.msra.mxu0 0.0
    %762 = vmatprep.subr.mxu0 0.0
    %763 = vmatpush1.msra.mxu0 0.0
    %764 = vmatprep.subr.mxu0 0.0
    %765 = vmatpush1.msra.mxu0 0.0
    %766 = vmatprep.subr.mxu0 0.0
    %767 = vmatpush1.msra.mxu0 %v731
    %768 = vmatprep.subr.mxu0 0.0
    %769 = vmatpush2.msra.mxu0 0.0
    %770 = vmatprep.subr.mxu0 0.0
    %771 = vmatpush2.msra.mxu0 0.0
    %772 = vmatprep.subr.mxu0 0.0
    %773 = vmatpush2.msra.mxu0 0.0
    %774 = vmatprep.subr.mxu0 0.0
    %775 = vmatpush2.msra.mxu0 0.0
    %776 = vmatprep.subr.mxu0 0.0
    %777 = vmatpush2.msra.mxu0 0.0
    %778 = vmatprep.subr.mxu0 0.0
    %779 = vmatpush2.msra.mxu0 0.0
    %780 = vmatprep.subr.mxu0 0.0
    %781 = vmatpush2.msra.mxu0 0.0
    %782 = vmatprep.subr.mxu0 0.0
    %783 = vmatpush2.msra.mxu0 0.0
    %784 = vmatprep.subr.mxu0 0.0
    %785 = vmatpush2.msra.mxu0 0.0
    %786 = vmatprep.subr.mxu0 0.0
    %787 = vmatpush2.msra.mxu0 0.0
    %788 = vmatprep.subr.mxu0 0.0
    %789 = vmatpush2.msra.mxu0 0.0
    %790 = vmatprep.subr.mxu0 0.0
    %791 = vmatpush2.msra.mxu0 0.0
    %792 = vmatprep.subr.mxu0 0.0
    %793 = vmatpush2.msra.mxu0 0.0
    %794 = vmatprep.subr.mxu0 0.0
    %795 = vmatpush2.msra.mxu0 0.0
    %796 = vmatprep.subr.mxu0 0.0
    %797 = vmatpush2.msra.mxu0 0.0
    %798 = vmatprep.subr.mxu0 0.0
    %799 = vmatpush2.msra.mxu0 0.0
    %800 = vmatprep.mubr.f32.mxu0 0.0
    %801 = vmatmul.mubr.f32.gmra.mxu0 %v734
    %v802 = vpop.f32.mrf.mxu0
    %v803 = vadd.f32 0.0, %v802
    %v804 = vpop.f32.mrf.mxu0
    %805 = vdwg.mxu0
    %806 = vst.msk [vmem:[#allocation3 + $0x10] sm:$0xff] %vm118, %v803
    %v807 = vld [vmem:[#allocation2 + $0x18] sm:$0xff]
    %809 = vrot.lane.b32.xlu0 %v807, 96
    %v810 = vpop.permute.xlu0 %809
    %v811 = vsel %vm118, %v807, 0
    %v813 = vsel %vm118, %v810, 0
    %815 = vmatprep.subr.mxu0 0.0
    %816 = vmatpush1.xpose.msra.mxu0 0.0
    %817 = vmatprep.subr.mxu0 0.0
    %818 = vmatpush1.xpose.msra.mxu0 0.0
    %819 = vmatprep.subr.mxu0 0.0
    %820 = vmatpush1.xpose.msra.mxu0 0.0
    %821 = vmatprep.subr.mxu0 0.0
    %822 = vmatpush1.xpose.msra.mxu0 0.0
    %823 = vmatprep.subr.mxu0 0.0
    %824 = vmatpush1.xpose.msra.mxu0 0.0
    %825 = vmatprep.subr.mxu0 0.0
    %826 = vmatpush1.xpose.msra.mxu0 0.0
    %827 = vmatprep.subr.mxu0 0.0
    %828 = vmatpush1.xpose.msra.mxu0 0.0
    %829 = vmatprep.subr.mxu0 0.0
    %830 = vmatpush1.xpose.msra.mxu0 0.0
    %831 = vmatprep.subr.mxu0 0.0
    %832 = vmatpush1.xpose.msra.mxu0 0.0
    %833 = vmatprep.subr.mxu0 0.0
    %834 = vmatpush1.xpose.msra.mxu0 0.0
    %835 = vmatprep.subr.mxu0 0.0
    %836 = vmatpush1.xpose.msra.mxu0 0.0
    %837 = vmatprep.subr.mxu0 0.0
    %838 = vmatpush1.xpose.msra.mxu0 0.0
    %839 = vmatprep.subr.mxu0 0.0
    %840 = vmatpush1.xpose.msra.mxu0 0.0
    %841 = vmatprep.subr.mxu0 0.0
    %842 = vmatpush1.xpose.msra.mxu0 0.0
    %843 = vmatprep.subr.mxu0 0.0
    %844 = vmatpush1.xpose.msra.mxu0 0.0
    %845 = vmatprep.subr.mxu0 0.0
    %846 = vmatpush1.xpose.msra.mxu0 %v813
    %847 = vmatprep.subr.mxu0 0.0
    %848 = vmatpush2.xpose.msra.mxu0 0.0
    %849 = vmatprep.subr.mxu0 0.0
    %850 = vmatpush2.xpose.msra.mxu0 0.0
    %851 = vmatprep.subr.mxu0 0.0
    %852 = vmatpush2.xpose.msra.mxu0 0.0
    %853 = vmatprep.subr.mxu0 0.0
    %854 = vmatpush2.xpose.msra.mxu0 0.0
    %855 = vmatprep.subr.mxu0 0.0
    %856 = vmatpush2.xpose.msra.mxu0 0.0
    %857 = vmatprep.subr.mxu0 0.0
    %858 = vmatpush2.xpose.msra.mxu0 0.0
    %859 = vmatprep.subr.mxu0 0.0
    %860 = vmatpush2.xpose.msra.mxu0 0.0
    %861 = vmatprep.subr.mxu0 0.0
    %862 = vmatpush2.xpose.msra.mxu0 0.0
    %863 = vmatprep.subr.mxu0 0.0
    %864 = vmatpush2.xpose.msra.mxu0 0.0
    %865 = vmatprep.subr.mxu0 0.0
    %866 = vmatpush2.xpose.msra.mxu0 0.0
    %867 = vmatprep.subr.mxu0 0.0
    %868 = vmatpush2.xpose.msra.mxu0 0.0
    %869 = vmatprep.subr.mxu0 0.0
    %870 = vmatpush2.xpose.msra.mxu0 0.0
    %871 = vmatprep.subr.mxu0 0.0
    %872 = vmatpush2.xpose.msra.mxu0 0.0
    %873 = vmatprep.subr.mxu0 0.0
    %874 = vmatpush2.xpose.msra.mxu0 0.0
    %875 = vmatprep.subr.mxu0 0.0
    %876 = vmatpush2.xpose.msra.mxu0 0.0
    %877 = vmatprep.subr.mxu0 0.0
    %878 = vmatpush2.xpose.msra.mxu0 0.0
    %879 = vmatprep.mubr.f32.mxu0 0.0
    %880 = vmatmul.mubr.f32.gmra.mxu0 %v811
    %v881 = vpop.f32.mrf.mxu0
    %v882 = vadd.f32 0.0, %v881
    %v883 = vpop.f32.mrf.mxu0
    %884 = vdwg.mxu0
    %v885 = vmul.f32 %v882, 0.17677669
    %v886 = vsel %vm384, %v885, -inf
    %887 = vmax.xlane.f32.xlu0 %v886
    %v888 = vpop.xlane.xlu0 %887
    %v889 = vsub.f32 %v885, %v888
    %v890 = vmul.f32 %v889, 1.442695
    %v891 = vpow.pop %v890
    %v892 = vsel %vm384, %v891, 0.0
    %893 = vadd.xlane.f32.xlu0 %v892
    %v894 = vpop.xlane.xlu0 %893
    %v895 = vrcp.pop %v894
    %v896 = vmul.f32 %v891, %v895
    %897 = vrot.lane.b32.xlu0 %v807, 64
    %v898 = vpop.permute.xlu0 %897
    %v901 = vsel %vm384, %v896, 0
    %903 = vmatprep.subr.mxu0 0.0
    %904 = vmatpush1.msra.mxu0 0.0
    %905 = vmatprep.subr.mxu0 0.0
    %906 = vmatpush1.msra.mxu0 0.0
    %907 = vmatprep.subr.mxu0 0.0
    %908 = vmatpush1.msra.mxu0 0.0
    %909 = vmatprep.subr.mxu0 0.0
    %910 = vmatpush1.msra.mxu0 0.0
    %911 = vmatprep.subr.mxu0 0.0
    %912 = vmatpush1.msra.mxu0 0.0
    %913 = vmatprep.subr.mxu0 0.0
    %914 = vmatpush1.msra.mxu0 0.0
    %915 = vmatprep.subr.mxu0 0.0
    %916 = vmatpush1.msra.mxu0 0.0
    %917 = vmatprep.subr.mxu0 0.0
    %918 = vmatpush1.msra.mxu0 0.0
    %919 = vmatprep.subr.mxu0 0.0
    %920 = vmatpush1.msra.mxu0 0.0
    %921 = vmatprep.subr.mxu0 0.0
    %922 = vmatpush1.msra.mxu0 0.0
    %923 = vmatprep.subr.mxu0 0.0
    %924 = vmatpush1.msra.mxu0 0.0
    %925 = vmatprep.subr.mxu0 0.0
    %926 = vmatpush1.msra.mxu0 0.0
    %927 = vmatprep.subr.mxu0 0.0
    %928 = vmatpush1.msra.mxu0 0.0
    %929 = vmatprep.subr.mxu0 0.0
    %930 = vmatpush1.msra.mxu0 0.0
    %931 = vmatprep.subr.mxu0 0.0
    %932 = vmatpush1.msra.mxu0 0.0
    %933 = vmatprep.subr.mxu0 0.0
    %934 = vmatpush1.msra.mxu0 %v898
    %935 = vmatprep.subr.mxu0 0.0
    %936 = vmatpush2.msra.mxu0 0.0
    %937 = vmatprep.subr.mxu0 0.0
    %938 = vmatpush2.msra.mxu0 0.0
    %939 = vmatprep.subr.mxu0 0.0
    %940 = vmatpush2.msra.mxu0 0.0
    %941 = vmatprep.subr.mxu0 0.0
    %942 = vmatpush2.msra.mxu0 0.0
    %943 = vmatprep.subr.mxu0 0.0
    %944 = vmatpush2.msra.mxu0 0.0
    %945 = vmatprep.subr.mxu0 0.0
    %946 = vmatpush2.msra.mxu0 0.0
    %947 = vmatprep.subr.mxu0 0.0
    %948 = vmatpush2.msra.mxu0 0.0
    %949 = vmatprep.subr.mxu0 0.0
    %950 = vmatpush2.msra.mxu0 0.0
    %951 = vmatprep.subr.mxu0 0.0
    %952 = vmatpush2.msra.mxu0 0.0
    %953 = vmatprep.subr.mxu0 0.0
    %954 = vmatpush2.msra.mxu0 0.0
    %955 = vmatprep.subr.mxu0 0.0
    %956 = vmatpush2.msra.mxu0 0.0
    %957 = vmatprep.subr.mxu0 0.0
    %958 = vmatpush2.msra.mxu0 0.0
    %959 = vmatprep.subr.mxu0 0.0
    %960 = vmatpush2.msra.mxu0 0.0
    %961 = vmatprep.subr.mxu0 0.0
    %962 = vmatpush2.msra.mxu0 0.0
    %963 = vmatprep.subr.mxu0 0.0
    %964 = vmatpush2.msra.mxu0 0.0
    %965 = vmatprep.subr.mxu0 0.0
    %966 = vmatpush2.msra.mxu0 0.0
    %967 = vmatprep.mubr.f32.mxu0 0.0
    %968 = vmatmul.mubr.f32.gmra.mxu0 %v901
    %v969 = vpop.f32.mrf.mxu0
    %v970 = vadd.f32 0.0, %v969
    %v971 = vpop.f32.mrf.mxu0
    %972 = vdwg.mxu0
    %973 = vst.msk [vmem:[#allocation3 + $0x18] sm:$0xff] %vm118, %v970
    %v974 = vld [vmem:[#allocation3] sm:$0xff]
    %v975 = vld [vmem:[#allocation3 + $0x8] sm:$0xff]
    %v976 = vld [vmem:[#allocation3 + $0x10] sm:$0xff]
    %v977 = vld [vmem:[#allocation3 + $0x18] sm:$0xff]
    %v978 = vld [vmem:[%s5] sm:$0xff]
    %v979 = vld [vmem:[%s5 + $0x8] sm:$0xff]
    %v980 = vld [vmem:[%s5 + $0x10] sm:$0xff]
    %v981 = vld [vmem:[%s5 + $0x18] sm:$0xff]
    %v982 = vld [vmem:[%s6] sm:$0x1]
    %v984 = vlaneseq
    %v985 = vshrl.u32 %v984, 7
    %v986 = vsub.s32 0, %v985
    %v987 = vrot.slane %v982, %v986
    %v990 = vsel %vm118, %v974, 0
    %v993 = vsel %vm118, %v975, 0
    %v996 = vsel %vm118, %v976, 0
    %v999 = vsel %vm118, %v977, 0
    %1001 = vmatprep.subr.mxu0 0.0
    %1002 = vmatpush1.msra.mxu0 0.0
    %1003 = vmatprep.subr.mxu0 0.0
    %1004 = vmatpush1.msra.mxu0 0.0
    %1005 = vmatprep.subr.mxu0 0.0
    %1006 = vmatpush1.msra.mxu0 0.0
    %1007 = vmatprep.subr.mxu0 0.0
    %1008 = vmatpush1.msra.mxu0 0.0
    %1009 = vmatprep.subr.mxu0 0.0
    %1010 = vmatpush1.msra.mxu0 0.0
    %1011 = vmatprep.subr.mxu0 0.0
    %1012 = vmatpush1.msra.mxu0 0.0
    %1013 = vmatprep.subr.mxu0 0.0
    %1014 = vmatpush1.msra.mxu0 0.0
    %1015 = vmatprep.subr.mxu0 0.0
    %1016 = vmatpush1.msra.mxu0 0.0
    %1017 = vmatprep.subr.mxu0 0.0
    %1018 = vmatpush1.msra.mxu0 0.0
    %1019 = vmatprep.subr.mxu0 0.0
    %1020 = vmatpush1.msra.mxu0 0.0
    %1021 = vmatprep.subr.mxu0 0.0
    %1022 = vmatpush1.msra.mxu0 0.0
    %1023 = vmatprep.subr.mxu0 0.0
    %1024 = vmatpush1.msra.mxu0 0.0
    %1025 = vmatprep.subr.mxu0 0.0
    %1026 = vmatpush1.msra.mxu0 %v981
    %1027 = vmatprep.subr.mxu0 0.0
    %1028 = vmatpush1.msra.mxu0 %v980
    %1029 = vmatprep.subr.mxu0 0.0
    %1030 = vmatpush1.msra.mxu0 %v979
    %1031 = vmatprep.subr.mxu0 0.0
    %1032 = vmatpush1.msra.mxu0 %v978
    %1033 = vmatprep.subr.mxu0 0.0
    %1034 = vmatpush2.msra.mxu0 0.0
    %1035 = vmatprep.subr.mxu0 0.0
    %1036 = vmatpush2.msra.mxu0 0.0
    %1037 = vmatprep.subr.mxu0 0.0
    %1038 = vmatpush2.msra.mxu0 0.0
    %1039 = vmatprep.subr.mxu0 0.0
    %1040 = vmatpush2.msra.mxu0 0.0
    %1041 = vmatprep.subr.mxu0 0.0
    %1042 = vmatpush2.msra.mxu0 0.0
    %1043 = vmatprep.subr.mxu0 0.0
    %1044 = vmatpush2.msra.mxu0 0.0
    %1045 = vmatprep.subr.mxu0 0.0
    %1046 = vmatpush2.msra.mxu0 0.0
    %1047 = vmatprep.subr.mxu0 0.0
    %1048 = vmatpush2.msra.mxu0 0.0
    %1049 = vmatprep.subr.mxu0 0.0
    %1050 = vmatpush2.msra.mxu0 0.0
    %1051 = vmatprep.subr.mxu0 0.0
    %1052 = vmatpush2.msra.mxu0 0.0
    %1053 = vmatprep.subr.mxu0 0.0
    %1054 = vmatpush2.msra.mxu0 0.0
    %1055 = vmatprep.subr.mxu0 0.0
    %1056 = vmatpush2.msra.mxu0 0.0
    %1057 = vmatprep.subr.mxu0 0.0
    %1058 = vmatpush2.msra.mxu0 0.0
    %1059 = vmatprep.subr.mxu0 0.0
    %1060 = vmatpush2.msra.mxu0 0.0
    %1061 = vmatprep.subr.mxu0 0.0
    %1062 = vmatpush2.msra.mxu0 0.0
    %1063 = vmatprep.subr.mxu0 0.0
    %1064 = vmatpush2.msra.mxu0 0.0
    %1065 = vmatprep.mubr.f32.mxu0 0.0
    %1066 = vmatmul.mubr.f32.gmra.mxu0 %v990
    %v1067 = vpop.f32.mrf.mxu0
    %v1068 = vadd.f32 %v987, %v1067
    %v1069 = vpop.f32.mrf.mxu0
    %1070 = vmatprep.mubr.f32.mxu0 0.0
    %1071 = vmatmul.mubr.f32.gmra.mxu0 %v993
    %v1072 = vpop.f32.mrf.mxu0
    %v1073 = vadd.f32 %v987, %v1072
    %v1074 = vpop.f32.mrf.mxu0
    %1075 = vmatprep.mubr.f32.mxu0 0.0
    %1076 = vmatmul.mubr.f32.gmra.mxu0 %v996
    %v1077 = vpop.f32.mrf.mxu0
    %v1078 = vadd.f32 %v987, %v1077
    %v1079 = vpop.f32.mrf.mxu0
    %1080 = vmatprep.mubr.f32.mxu0 0.0
    %1081 = vmatmul.mubr.f32.gmra.mxu0 %v999
    %v1082 = vpop.f32.mrf.mxu0
    %v1083 = vadd.f32 %v987, %v1082
    %v1084 = vpop.f32.mrf.mxu0
    %1085 = vdwg.mxu0
    %v1086 = vadd.f32 %v188, %v1068
    %v1087 = vadd.f32 %v189, %v1073
    %v1088 = vadd.f32 %v190, %v1078
    %v1089 = vadd.f32 %v191, %v1083
    %v1090 = vld [vmem:[%s7] sm:$0x1]
    %v1091 = vld [vmem:[%s8] sm:$0x1]
    %v1092 = vsel %vm118, %v1086, 0.0
    %1093 = vadd.xlane.f32.xlu0 %v1092
    %v1094 = vpop.xlane.xlu0 %1093
    %v1095 = vsel %vm118, %v1087, 0.0
    %1096 = vadd.xlane.f32.xlu0 %v1095
    %v1097 = vpop.xlane.xlu0 %1096
    %v1098 = vsel %vm118, %v1088, 0.0
    %1099 = vadd.xlane.f32.xlu0 %v1098
    %v1100 = vpop.xlane.xlu0 %1099
    %v1101 = vsel %vm118, %v1089, 0.0
    %1102 = vadd.xlane.f32.xlu0 %v1101
    %v1103 = vpop.xlane.xlu0 %1102
    %v1104 = vmul.f32 %v1094, %v131
    %v1105 = vmul.f32 %v1097, %v131
    %v1106 = vmul.f32 %v1100, %v131
    %v1107 = vmul.f32 %v1103, %v131
    %v1108 = vsub.f32 %v1086, %v1104
    %v1109 = vsub.f32 %v1087, %v1105
    %v1110 = vsub.f32 %v1088, %v1106
    %v1111 = vsub.f32 %v1089, %v1107
    %v1112 = vmul.f32 %v1108, %v1108
    %v1113 = vmul.f32 %v1109, %v1109
    %v1114 = vmul.f32 %v1110, %v1110
    %v1115 = vmul.f32 %v1111, %v1111
    %v1116 = vsel %vm118, %v1112, 0.0
    %1117 = vadd.xlane.f32.xlu0 %v1116
    %v1118 = vpop.xlane.xlu0 %1117
    %v1119 = vsel %vm118, %v1113, 0.0
    %1120 = vadd.xlane.f32.xlu0 %v1119
    %v1121 = vpop.xlane.xlu0 %1120
    %v1122 = vsel %vm118, %v1114, 0.0
    %1123 = vadd.xlane.f32.xlu0 %v1122
    %v1124 = vpop.xlane.xlu0 %1123
    %v1125 = vsel %vm118, %v1115, 0.0
    %1126 = vadd.xlane.f32.xlu0 %v1125
    %v1127 = vpop.xlane.xlu0 %1126
    %v1128 = vmul.f32 %v1118, %v131
    %v1129 = vmul.f32 %v1121, %v131
    %v1130 = vmul.f32 %v1124, %v131
    %v1131 = vmul.f32 %v1127, %v131
    %v1132 = vadd.f32 %v1128, 1e-05
    %v1133 = vadd.f32 %v1129, 1e-05
    %v1134 = vadd.f32 %v1130, 1e-05
    %v1135 = vadd.f32 %v1131, 1e-05
    %v1136 = vrsqrt.pop %v1132
    %v1137 = vrsqrt.pop %v1133
    %v1138 = vrsqrt.pop %v1134
    %v1139 = vrsqrt.pop %v1135
    %v1140 = vmul.f32 %v1108, %v1136
    %v1141 = vmul.f32 %v1109, %v1137
    %v1142 = vmul.f32 %v1110, %v1138
    %v1143 = vmul.f32 %v1111, %v1139
    %v1145 = vlaneseq
    %v1146 = vshrl.u32 %v1145, 7
    %v1147 = vsub.s32 0, %v1146
    %v1148 = vrot.slane %v1090, %v1147
    %v1150 = vmul.f32 %v1140, %v1148
    %v1151 = vmul.f32 %v1141, %v1148
    %v1152 = vmul.f32 %v1142, %v1148
    %v1153 = vmul.f32 %v1143, %v1148
    %v1155 = vlaneseq
    %v1156 = vshrl.u32 %v1155, 7
    %v1157 = vsub.s32 0, %v1156
    %v1158 = vrot.slane %v1091, %v1157
    %v1160 = vadd.f32 %v1150, %v1158
    %v1161 = vadd.f32 %v1151, %v1158
    %v1162 = vadd.f32 %v1152, %v1158
    %v1163 = vadd.f32 %v1153, %v1158
    %v1164 = vld [vmem:[%s9] sm:$0xff]
    %v1165 = vld [vmem:[%s9 + $0x8] sm:$0xff]
    %v1166 = vld [vmem:[%s9 + $0x10] sm:$0xff]
    %v1167 = vld [vmem:[%s9 + $0x18] sm:$0xff]
    %v1168 = vld [vmem:[%s10] sm:$0x1]
    %v1170 = vlaneseq
    %v1171 = vshrl.u32 %v1170, 7
    %v1172 = vsub.s32 0, %v1171
    %v1173 = vrot.slane %v1168, %v1172
    %v1176 = vsel %vm118, %v1160, 0
    %v1179 = vsel %vm118, %v1161, 0
    %v1182 = vsel %vm118, %v1162, 0
    %v1185 = vsel %vm118, %v1163, 0
    %1187 = vmatprep.subr.mxu0 0.0
    %1188 = vmatpush1.msra.mxu0 0.0
    %1189 = vmatprep.subr.mxu0 0.0
    %1190 = vmatpush1.msra.mxu0 0.0
    %1191 = vmatprep.subr.mxu0 0.0
    %1192 = vmatpush1.msra.mxu0 0.0
    %1193 = vmatprep.subr.mxu0 0.0
    %1194 = vmatpush1.msra.mxu0 0.0
    %1195 = vmatprep.subr.mxu0 0.0
    %1196 = vmatpush1.msra.mxu0 0.0
    %1197 = vmatprep.subr.mxu0 0.0
    %1198 = vmatpush1.msra.mxu0 0.0
    %1199 = vmatprep.subr.mxu0 0.0
    %1200 = vmatpush1.msra.mxu0 0.0
    %1201 = vmatprep.subr.mxu0 0.0
    %1202 = vmatpush1.msra.mxu0 0.0
    %1203 = vmatprep.subr.mxu0 0.0
    %1204 = vmatpush1.msra.mxu0 0.0
    %1205 = vmatprep.subr.mxu0 0.0
    %1206 = vmatpush1.msra.mxu0 0.0
    %1207 = vmatprep.subr.mxu0 0.0
    %1208 = vmatpush1.msra.mxu0 0.0
    %1209 = vmatprep.subr.mxu0 0.0
    %1210 = vmatpush1.msra.mxu0 0.0
    %1211 = vmatprep.subr.mxu0 0.0
    %1212 = vmatpush1.msra.mxu0 %v1167
    %1213 = vmatprep.subr.mxu0 0.0
    %1214 = vmatpush1.msra.mxu0 %v1166
    %1215 = vmatprep.subr.mxu0 0.0
    %1216 = vmatpush1.msra.mxu0 %v1165
    %1217 = vmatprep.subr.mxu0 0.0
    %1218 = vmatpush1.msra.mxu0 %v1164
    %1219 = vmatprep.subr.mxu0 0.0
    %1220 = vmatpush2.msra.mxu0 0.0
    %1221 = vmatprep.subr.mxu0 0.0
    %1222 = vmatpush2.msra.mxu0 0.0
    %1223 = vmatprep.subr.mxu0 0.0
    %1224 = vmatpush2.msra.mxu0 0.0
    %1225 = vmatprep.subr.mxu0 0.0
    %1226 = vmatpush2.msra.mxu0 0.0
    %1227 = vmatprep.subr.mxu0 0.0
    %1228 = vmatpush2.msra.mxu0 0.0
    %1229 = vmatprep.subr.mxu0 0.0
    %1230 = vmatpush2.msra.mxu0 0.0
    %1231 = vmatprep.subr.mxu0 0.0
    %1232 = vmatpush2.msra.mxu0 0.0
    %1233 = vmatprep.subr.mxu0 0.0
    %1234 = vmatpush2.msra.mxu0 0.0
    %1235 = vmatprep.subr.mxu0 0.0
    %1236 = vmatpush2.msra.mxu0 0.0
    %1237 = vmatprep.subr.mxu0 0.0
    %1238 = vmatpush2.msra.mxu0 0.0
    %1239 = vmatprep.subr.mxu0 0.0
    %1240 = vmatpush2.msra.mxu0 0.0
    %1241 = vmatprep.subr.mxu0 0.0
    %1242 = vmatpush2.msra.mxu0 0.0
    %1243 = vmatprep.subr.mxu0 0.0
    %1244 = vmatpush2.msra.mxu0 0.0
    %1245 = vmatprep.subr.mxu0 0.0
    %1246 = vmatpush2.msra.mxu0 0.0
    %1247 = vmatprep.subr.mxu0 0.0
    %1248 = vmatpush2.msra.mxu0 0.0
    %1249 = vmatprep.subr.mxu0 0.0
    %1250 = vmatpush2.msra.mxu0 0.0
    %1251 = vmatprep.mubr.f32.mxu0 0.0
    %1252 = vmatmul.mubr.f32.gmra.mxu0 %v1176
    %v1253 = vpop.f32.mrf.mxu0
    %v1254 = vadd.f32 %v1173, %v1253
    %v1255 = vpop.f32.mrf.mxu0
    %1256 = vmatprep.mubr.f32.mxu0 0.0
    %1257 = vmatmul.mubr.f32.gmra.mxu0 %v1179
    %v1258 = vpop.f32.mrf.mxu0
    %v1259 = vadd.f32 %v1173, %v1258
    %v1260 = vpop.f32.mrf.mxu0
    %1261 = vmatprep.mubr.f32.mxu0 0.0
    %1262 = vmatmul.mubr.f32.gmra.mxu0 %v1182
    %v1263 = vpop.f32.mrf.mxu0
    %v1264 = vadd.f32 %v1173, %v1263
    %v1265 = vpop.f32.mrf.mxu0
    %1266 = vmatprep.mubr.f32.mxu0 0.0
    %1267 = vmatmul.mubr.f32.gmra.mxu0 %v1185
    %v1268 = vpop.f32.mrf.mxu0
    %v1269 = vadd.f32 %v1173, %v1268
    %v1270 = vpop.f32.mrf.mxu0
    %1271 = vdwg.mxu0
    %v1272 = vmul.f32 %v1254, 0.5
    %v1273 = vmul.f32 %v1259, 0.5
    %v1274 = vmul.f32 %v1264, 0.5
    %v1275 = vmul.f32 %v1269, 0.5
    %v1276 = vmul.f32 %v1254, 0.044715
    %v1277 = vmul.f32 %v1259, 0.044715
    %v1278 = vmul.f32 %v1264, 0.044715
    %v1279 = vmul.f32 %v1269, 0.044715
    %v1280 = vmul.f32 %v1276, %v1254
    %v1281 = vmul.f32 %v1277, %v1259
    %v1282 = vmul.f32 %v1278, %v1264
    %v1283 = vmul.f32 %v1279, %v1269
    %v1284 = vmul.f32 %v1280, %v1254
    %v1285 = vmul.f32 %v1281, %v1259
    %v1286 = vmul.f32 %v1282, %v1264
    %v1287 = vmul.f32 %v1283, %v1269
    %v1288 = vadd.f32 %v1254, %v1284
    %v1289 = vadd.f32 %v1259, %v1285
    %v1290 = vadd.f32 %v1264, %v1286
    %v1291 = vadd.f32 %v1269, %v1287
    %v1292 = vmul.f32 %v1288, 0.7978846
    %v1293 = vmul.f32 %v1289, 0.7978846
    %v1294 = vmul.f32 %v1290, 0.7978846
    %v1295 = vmul.f32 %v1291, 0.7978846
    %v1296 = vtanh.pop %v1292
    %v1297 = vtanh.pop %v1293
    %v1298 = vtanh.pop %v1294
    %v1299 = vtanh.pop %v1295
    %v1300 = vadd.f32 %v1296, 1.0
    %v1301 = vadd.f32 %v1297, 1.0
    %v1302 = vadd.f32 %v1298, 1.0
    %v1303 = vadd.f32 %v1299, 1.0
    %v1304 = vmul.f32 %v1272, %v1300
    %v1305 = vmul.f32 %v1273, %v1301
    %v1306 = vmul.f32 %v1274, %v1302
    %v1307 = vmul.f32 %v1275, %v1303
    %v1308 = vld [vmem:[%s11] sm:$0xff]
    %v1309 = vld [vmem:[%s11 + $0x8] sm:$0xff]
    %v1310 = vld [vmem:[%s11 + $0x10] sm:$0xff]
    %v1311 = vld [vmem:[%s11 + $0x18] sm:$0xff]
    %v1312 = vld [vmem:[%s11 + $0x20] sm:$0xff]
    %v1313 = vld [vmem:[%s11 + $0x28] sm:$0xff]
    %v1314 = vld [vmem:[%s11 + $0x30] sm:$0xff]
    %v1315 = vld [vmem:[%s11 + $0x38] sm:$0xff]
    %v1316 = vld [vmem:[%s12] sm:$0x1]
    %v1318 = vlaneseq
    %v1319 = vshrl.u32 %v1318, 7
    %v1320 = vsub.s32 0, %v1319
    %v1321 = vrot.slane %v1316, %v1320
    %vm1323 = vcmask 523264
    %v1325 = vsel %vm1323, %v1304, 0
    %v1328 = vsel %vm1323, %v1305, 0
    %v1331 = vsel %vm1323, %v1306, 0
    %v1334 = vsel %vm1323, %v1307, 0
    %1336 = vmatprep.subr.mxu0 0.0
    %1337 = vmatpush1.msra.mxu0 0.0
    %1338 = vmatprep.subr.mxu0 0.0
    %1339 = vmatpush1.msra.mxu0 0.0
    %1340 = vmatprep.subr.mxu0 0.0
    %1341 = vmatpush1.msra.mxu0 0.0
    %1342 = vmatprep.subr.mxu0 0.0
    %1343 = vmatpush1.msra.mxu0 0.0
    %1344 = vmatprep.subr.mxu0 0.0
    %1345 = vmatpush1.msra.mxu0 0.0
    %1346 = vmatprep.subr.mxu0 0.0
    %1347 = vmatpush1.msra.mxu0 0.0
    %1348 = vmatprep.subr.mxu0 0.0
    %1349 = vmatpush1.msra.mxu0 0.0
    %1350 = vmatprep.subr.mxu0 0.0
    %1351 = vmatpush1.msra.mxu0 0.0
    %1352 = vmatprep.subr.mxu0 0.0
    %1353 = vmatpush1.msra.mxu0 %v1315
    %1354 = vmatprep.subr.mxu0 0.0
    %1355 = vmatpush1.msra.mxu0 %v1314
    %1356 = vmatprep.subr.mxu0 0.0
    %1357 = vmatpush1.msra.mxu0 %v1313
    %1358 = vmatprep.subr.mxu0 0.0
    %1359 = vmatpush1.msra.mxu0 %v1312
    %1360 = vmatprep.subr.mxu0 0.0
    %1361 = vmatpush1.msra.mxu0 %v1311
    %1362 = vmatprep.subr.mxu0 0.0
    %1363 = vmatpush1.msra.mxu0 %v1310
    %1364 = vmatprep.subr.mxu0 0.0
    %1365 = vmatpush1.msra.mxu0 %v1309
    %1366 = vmatprep.subr.mxu0 0.0
    %1367 = vmatpush1.msra.mxu0 %v1308
    %1368 = vmatprep.subr.mxu0 0.0
    %1369 = vmatpush2.msra.mxu0 0.0
    %1370 = vmatprep.subr.mxu0 0.0
    %1371 = vmatpush2.msra.mxu0 0.0
    %1372 = vmatprep.subr.mxu0 0.0
    %1373 = vmatpush2.msra.mxu0 0.0
    %1374 = vmatprep.subr.mxu0 0.0
    %1375 = vmatpush2.msra.mxu0 0.0
    %1376 = vmatprep.subr.mxu0 0.0
    %1377 = vmatpush2.msra.mxu0 0.0
    %1378 = vmatprep.subr.mxu0 0.0
    %1379 = vmatpush2.msra.mxu0 0.0
    %1380 = vmatprep.subr.mxu0 0.0
    %1381 = vmatpush2.msra.mxu0 0.0
    %1382 = vmatprep.subr.mxu0 0.0
    %1383 = vmatpush2.msra.mxu0 0.0
    %1384 = vmatprep.subr.mxu0 0.0
    %1385 = vmatpush2.msra.mxu0 0.0
    %1386 = vmatprep.subr.mxu0 0.0
    %1387 = vmatpush2.msra.mxu0 0.0
    %1388 = vmatprep.subr.mxu0 0.0
    %1389 = vmatpush2.msra.mxu0 0.0
    %1390 = vmatprep.subr.mxu0 0.0
    %1391 = vmatpush2.msra.mxu0 0.0
    %1392 = vmatprep.subr.mxu0 0.0
    %1393 = vmatpush2.msra.mxu0 0.0
    %1394 = vmatprep.subr.mxu0 0.0
    %1395 = vmatpush2.msra.mxu0 0.0
    %1396 = vmatprep.subr.mxu0 0.0
    %1397 = vmatpush2.msra.mxu0 0.0
    %1398 = vmatprep.subr.mxu0 0.0
    %1399 = vmatpush2.msra.mxu0 0.0
    %1400 = vmatprep.mubr.f32.mxu0 0.0
    %1401 = vmatmul.mubr.f32.gmra.mxu0 %v1325
    %v1402 = vpop.f32.mrf.mxu0
    %v1403 = vadd.f32 %v1321, %v1402
    %v1404 = vpop.f32.mrf.mxu0
    %1405 = vmatprep.mubr.f32.mxu0 0.0
    %1406 = vmatmul.mubr.f32.gmra.mxu0 %v1328
    %v1407 = vpop.f32.mrf.mxu0
    %v1408 = vadd.f32 %v1321, %v1407
    %v1409 = vpop.f32.mrf.mxu0
    %1410 = vmatprep.mubr.f32.mxu0 0.0
    %1411 = vmatmul.mubr.f32.gmra.mxu0 %v1331
    %v1412 = vpop.f32.mrf.mxu0
    %v1413 = vadd.f32 %v1321, %v1412
    %v1414 = vpop.f32.mrf.mxu0
    %1415 = vmatprep.mubr.f32.mxu0 0.0
    %1416 = vmatmul.mubr.f32.gmra.mxu0 %v1334
    %v1417 = vpop.f32.mrf.mxu0
    %v1418 = vadd.f32 %v1321, %v1417
    %v1419 = vpop.f32.mrf.mxu0
    %1420 = vdwg.mxu0
    %v1421 = vadd.f32 %v1160, %v1403
    %v1422 = vadd.f32 %v1161, %v1408
    %v1423 = vadd.f32 %v1162, %v1413
    %v1424 = vadd.f32 %v1163, %v1418
    %v1425 = vld [vmem:[%s13] sm:$0x1]
    %v1426 = vld [vmem:[%s14] sm:$0x1]
    %v1427 = vsel %vm118, %v1421, 0.0
    %1428 = vadd.xlane.f32.xlu0 %v1427
    %v1429 = vpop.xlane.xlu0 %1428
    %v1430 = vsel %vm118, %v1422, 0.0
    %1431 = vadd.xlane.f32.xlu0 %v1430
    %v1432 = vpop.xlane.xlu0 %1431
    %v1433 = vsel %vm118, %v1423, 0.0
    %1434 = vadd.xlane.f32.xlu0 %v1433
    %v1435 = vpop.xlane.xlu0 %1434
    %v1436 = vsel %vm118, %v1424, 0.0
    %1437 = vadd.xlane.f32.xlu0 %v1436
    %v1438 = vpop.xlane.xlu0 %1437
    %v1439 = vmul.f32 %v1429, %v131
    %v1440 = vmul.f32 %v1432, %v131
    %v1441 = vmul.f32 %v1435, %v131
    %v1442 = vmul.f32 %v1438, %v131
    %v1443 = vsub.f32 %v1421, %v1439
    %v1444 = vsub.f32 %v1422, %v1440
    %v1445 = vsub.f32 %v1423, %v1441
    %v1446 = vsub.f32 %v1424, %v1442
    %v1447 = vmul.f32 %v1443, %v1443
    %v1448 = vmul.f32 %v1444, %v1444
    %v1449 = vmul.f32 %v1445, %v1445
    %v1450 = vmul.f32 %v1446, %v1446
    %v1451 = vsel %vm118, %v1447, 0.0
    %1452 = vadd.xlane.f32.xlu0 %v1451
    %v1453 = vpop.xlane.xlu0 %1452
    %v1454 = vsel %vm118, %v1448, 0.0
    %1455 = vadd.xlane.f32.xlu0 %v1454
    %v1456 = vpop.xlane.xlu0 %1455
    %v1457 = vsel %vm118, %v1449, 0.0
    %1458 = vadd.xlane.f32.xlu0 %v1457
    %v1459 = vpop.xlane.xlu0 %1458
    %v1460 = vsel %vm118, %v1450, 0.0
    %1461 = vadd.xlane.f32.xlu0 %v1460
    %v1462 = vpop.xlane.xlu0 %1461
    %v1463 = vmul.f32 %v1453, %v131
    %v1464 = vmul.f32 %v1456, %v131
    %v1465 = vmul.f32 %v1459, %v131
    %v1466 = vmul.f32 %v1462, %v131
    %v1467 = vadd.f32 %v1463, 1e-05
    %v1468 = vadd.f32 %v1464, 1e-05
    %v1469 = vadd.f32 %v1465, 1e-05
    %v1470 = vadd.f32 %v1466, 1e-05
    %v1471 = vrsqrt.pop %v1467
    %v1472 = vrsqrt.pop %v1468
    %v1473 = vrsqrt.pop %v1469
    %v1474 = vrsqrt.pop %v1470
    %v1475 = vmul.f32 %v1443, %v1471
    %v1476 = vmul.f32 %v1444, %v1472
    %v1477 = vmul.f32 %v1445, %v1473
    %v1478 = vmul.f32 %v1446, %v1474
    %v1480 = vlaneseq
    %v1481 = vshrl.u32 %v1480, 7
    %v1482 = vsub.s32 0, %v1481
    %v1483 = vrot.slane %v1425, %v1482
    %v1485 = vmul.f32 %v1475, %v1483
    %v1486 = vmul.f32 %v1476, %v1483
    %v1487 = vmul.f32 %v1477, %v1483
    %v1488 = vmul.f32 %v1478, %v1483
    %v1490 = vlaneseq
    %v1491 = vshrl.u32 %v1490, 7
    %v1492 = vsub.s32 0, %v1491
    %v1493 = vrot.slane %v1426, %v1492
    %v1495 = vadd.f32 %v1485, %v1493
    %v1496 = vadd.f32 %v1486, %v1493
    %v1497 = vadd.f32 %v1487, %v1493
    %v1498 = vadd.f32 %v1488, %v1493
    %s1499 = scalar_lea.vmem %s3, 32
    %v1500 = vld [vmem:[%s1499] sm:$0xff]
    %v1501 = vld [vmem:[%s1499 + $0x8] sm:$0xff]
    %v1502 = vld [vmem:[%s1499 + $0x10] sm:$0xff]
    %v1503 = vld [vmem:[%s1499 + $0x18] sm:$0xff]
    %s1504 = scalar_lea.vmem %s4, 1
    %v1505 = vld [vmem:[%s1504] sm:$0x1]
    %v1507 = vlaneseq
    %v1508 = vshrl.u32 %v1507, 7
    %v1509 = vsub.s32 0, %v1508
    %v1510 = vrot.slane %v1505, %v1509
    %v1513 = vsel %vm118, %v1495, 0
    %v1516 = vsel %vm118, %v1496, 0
    %v1519 = vsel %vm118, %v1497, 0
    %v1522 = vsel %vm118, %v1498, 0
    %1524 = vmatprep.subr.mxu0 0.0
    %1525 = vmatpush1.msra.mxu0 0.0
    %1526 = vmatprep.subr.mxu0 0.0
    %1527 = vmatpush1.msra.mxu0 0.0
    %1528 = vmatprep.subr.mxu0 0.0
    %1529 = vmatpush1.msra.mxu0 0.0
    %1530 = vmatprep.subr.mxu0 0.0
    %1531 = vmatpush1.msra.mxu0 0.0
    %1532 = vmatprep.subr.mxu0 0.0
    %1533 = vmatpush1.msra.mxu0 0.0
    %1534 = vmatprep.subr.mxu0 0.0
    %1535 = vmatpush1.msra.mxu0 0.0
    %1536 = vmatprep.subr.mxu0 0.0
    %1537 = vmatpush1.msra.mxu0 0.0
    %1538 = vmatprep.subr.mxu0 0.0
    %1539 = vmatpush1.msra.mxu0 0.0
    %1540 = vmatprep.subr.mxu0 0.0
    %1541 = vmatpush1.msra.mxu0 0.0
    %1542 = vmatprep.subr.mxu0 0.0
    %1543 = vmatpush1.msra.mxu0 0.0
    %1544 = vmatprep.subr.mxu0 0.0
    %1545 = vmatpush1.msra.mxu0 0.0
    %1546 = vmatprep.subr.mxu0 0.0
    %1547 = vmatpush1.msra.mxu0 0.0
    %1548 = vmatprep.subr.mxu0 0.0
    %1549 = vmatpush1.msra.mxu0 %v1503
    %1550 = vmatprep.subr.mxu0 0.0
    %1551 = vmatpush1.msra.mxu0 %v1502
    %1552 = vmatprep.subr.mxu0 0.0
    %1553 = vmatpush1.msra.mxu0 %v1501
    %1554 = vmatprep.subr.mxu0 0.0
    %1555 = vmatpush1.msra.mxu0 %v1500
    %1556 = vmatprep.subr.mxu0 0.0
    %1557 = vmatpush2.msra.mxu0 0.0
    %1558 = vmatprep.subr.mxu0 0.0
    %1559 = vmatpush2.msra.mxu0 0.0
    %1560 = vmatprep.subr.mxu0 0.0
    %1561 = vmatpush2.msra.mxu0 0.0
    %1562 = vmatprep.subr.mxu0 0.0
    %1563 = vmatpush2.msra.mxu0 0.0
    %1564 = vmatprep.subr.mxu0 0.0
    %1565 = vmatpush2.msra.mxu0 0.0
    %1566 = vmatprep.subr.mxu0 0.0
    %1567 = vmatpush2.msra.mxu0 0.0
    %1568 = vmatprep.subr.mxu0 0.0
    %1569 = vmatpush2.msra.mxu0 0.0
    %1570 = vmatprep.subr.mxu0 0.0
    %1571 = vmatpush2.msra.mxu0 0.0
    %1572 = vmatprep.subr.mxu0 0.0
    %1573 = vmatpush2.msra.mxu0 0.0
    %1574 = vmatprep.subr.mxu0 0.0
    %1575 = vmatpush2.msra.mxu0 0.0
    %1576 = vmatprep.subr.mxu0 0.0
    %1577 = vmatpush2.msra.mxu0 0.0
    %1578 = vmatprep.subr.mxu0 0.0
    %1579 = vmatpush2.msra.mxu0 0.0
    %1580 = vmatprep.subr.mxu0 0.0
    %1581 = vmatpush2.msra.mxu0 0.0
    %1582 = vmatprep.subr.mxu0 0.0
    %1583 = vmatpush2.msra.mxu0 0.0
    %1584 = vmatprep.subr.mxu0 0.0
    %1585 = vmatpush2.msra.mxu0 0.0
    %1586 = vmatprep.subr.mxu0 0.0
    %1587 = vmatpush2.msra.mxu0 0.0
    %1588 = vmatprep.mubr.f32.mxu0 0.0
    %1589 = vmatmul.mubr.f32.gmra.mxu0 %v1513
    %v1590 = vpop.f32.mrf.mxu0
    %v1591 = vadd.f32 %v1510, %v1590
    %v1592 = vpop.f32.mrf.mxu0
    %1593 = vmatprep.mubr.f32.mxu0 0.0
    %1594 = vmatmul.mubr.f32.gmra.mxu0 %v1516
    %v1595 = vpop.f32.mrf.mxu0
    %v1596 = vadd.f32 %v1510, %v1595
    %v1597 = vpop.f32.mrf.mxu0
    %1598 = vmatprep.mubr.f32.mxu0 0.0
    %1599 = vmatmul.mubr.f32.gmra.mxu0 %v1519
    %v1600 = vpop.f32.mrf.mxu0
    %v1601 = vadd.f32 %v1510, %v1600
    %v1602 = vpop.f32.mrf.mxu0
    %1603 = vmatprep.mubr.f32.mxu0 0.0
    %1604 = vmatmul.mubr.f32.gmra.mxu0 %v1522
    %v1605 = vpop.f32.mrf.mxu0
    %v1606 = vadd.f32 %v1510, %v1605
    %v1607 = vpop.f32.mrf.mxu0
    %1608 = vdwg.mxu0
    %1609 = vst.msk [vmem:[#allocation2] sm:$0xff] %vm300, %v1591
    %1610 = vst.msk [vmem:[#allocation2 + $0x8] sm:$0xff] %vm300, %v1596
    %1611 = vst.msk [vmem:[#allocation2 + $0x10] sm:$0xff] %vm300, %v1601
    %1612 = vst.msk [vmem:[#allocation2 + $0x18] sm:$0xff] %vm300, %v1606
    %v1613 = vld [vmem:[#allocation2] sm:$0xff]
    %1615 = vrot.lane.b32.xlu0 %v1613, 96
    %v1616 = vpop.permute.xlu0 %1615
    %v1617 = vsel %vm118, %v1613, 0
    %v1619 = vsel %vm118, %v1616, 0
    %1621 = vmatprep.subr.mxu0 0.0
    %1622 = vmatpush1.xpose.msra.mxu0 0.0
    %1623 = vmatprep.subr.mxu0 0.0
    %1624 = vmatpush1.xpose.msra.mxu0 0.0
    %1625 = vmatprep.subr.mxu0 0.0
    %1626 = vmatpush1.xpose.msra.mxu0 0.0
    %1627 = vmatprep.subr.mxu0 0.0
    %1628 = vmatpush1.xpose.msra.mxu0 0.0
    %1629 = vmatprep.subr.mxu0 0.0
    %1630 = vmatpush1.xpose.msra.mxu0 0.0
    %1631 = vmatprep.subr.mxu0 0.0
    %1632 = vmatpush1.xpose.msra.mxu0 0.0
    %1633 = vmatprep.subr.mxu0 0.0
    %1634 = vmatpush1.xpose.msra.mxu0 0.0
    %1635 = vmatprep.subr.mxu0 0.0
    %1636 = vmatpush1.xpose.msra.mxu0 0.0
    %1637 = vmatprep.subr.mxu0 0.0
    %1638 = vmatpush1.xpose.msra.mxu0 0.0
    %1639 = vmatprep.subr.mxu0 0.0
    %1640 = vmatpush1.xpose.msra.mxu0 0.0
    %1641 = vmatprep.subr.mxu0 0.0
    %1642 = vmatpush1.xpose.msra.mxu0 0.0
    %1643 = vmatprep.subr.mxu0 0.0
    %1644 = vmatpush1.xpose.msra.mxu0 0.0
    %1645 = vmatprep.subr.mxu0 0.0
    %1646 = vmatpush1.xpose.msra.mxu0 0.0
    %1647 = vmatprep.subr.mxu0 0.0
    %1648 = vmatpush1.xpose.msra.mxu0 0.0
    %1649 = vmatprep.subr.mxu0 0.0
    %1650 = vmatpush1.xpose.msra.mxu0 0.0
    %1651 = vmatprep.subr.mxu0 0.0
    %1652 = vmatpush1.xpose.msra.mxu0 %v1619
    %1653 = vmatprep.subr.mxu0 0.0
    %1654 = vmatpush2.xpose.msra.mxu0 0.0
    %1655 = vmatprep.subr.mxu0 0.0
    %1656 = vmatpush2.xpose.msra.mxu0 0.0
    %1657 = vmatprep.subr.mxu0 0.0
    %1658 = vmatpush2.xpose.msra.mxu0 0.0
    %1659 = vmatprep.subr.mxu0 0.0
    %1660 = vmatpush2.xpose.msra.mxu0 0.0
    %1661 = vmatprep.subr.mxu0 0.0
    %1662 = vmatpush2.xpose.msra.mxu0 0.0
    %1663 = vmatprep.subr.mxu0 0.0
    %1664 = vmatpush2.xpose.msra.mxu0 0.0
    %1665 = vmatprep.subr.mxu0 0.0
    %1666 = vmatpush2.xpose.msra.mxu0 0.0
    %1667 = vmatprep.subr.mxu0 0.0
    %1668 = vmatpush2.xpose.msra.mxu0 0.0
    %1669 = vmatprep.subr.mxu0 0.0
    %1670 = vmatpush2.xpose.msra.mxu0 0.0
    %1671 = vmatprep.subr.mxu0 0.0
    %1672 = vmatpush2.xpose.msra.mxu0 0.0
    %1673 = vmatprep.subr.mxu0 0.0
    %1674 = vmatpush2.xpose.msra.mxu0 0.0
    %1675 = vmatprep.subr.mxu0 0.0
    %1676 = vmatpush2.xpose.msra.mxu0 0.0
    %1677 = vmatprep.subr.mxu0 0.0
    %1678 = vmatpush2.xpose.msra.mxu0 0.0
    %1679 = vmatprep.subr.mxu0 0.0
    %1680 = vmatpush2.xpose.msra.mxu0 0.0
    %1681 = vmatprep.subr.mxu0 0.0
    %1682 = vmatpush2.xpose.msra.mxu0 0.0
    %1683 = vmatprep.subr.mxu0 0.0
    %1684 = vmatpush2.xpose.msra.mxu0 0.0
    %1685 = vmatprep.mubr.f32.mxu0 0.0
    %1686 = vmatmul.mubr.f32.gmra.mxu0 %v1617
    %v1687 = vpop.f32.mrf.mxu0
    %v1688 = vadd.f32 0.0, %v1687
    %v1689 = vpop.f32.mrf.mxu0
    %1690 = vdwg.mxu0
    %v1691 = vmul.f32 %v1688, 0.17677669
    %v1692 = vsel %vm384, %v1691, -inf
    %1693 = vmax.xlane.f32.xlu0 %v1692
    %v1694 = vpop.xlane.xlu0 %1693
    %v1695 = vsub.f32 %v1691, %v1694
    %v1696 = vmul.f32 %v1695, 1.442695
    %v1697 = vpow.pop %v1696
    %v1698 = vsel %vm384, %v1697, 0.0
    %1699 = vadd.xlane.f32.xlu0 %v1698
    %v1700 = vpop.xlane.xlu0 %1699
    %v1701 = vrcp.pop %v1700
    %v1702 = vmul.f32 %v1697, %v1701
    %1703 = vrot.lane.b32.xlu0 %v1613, 64
    %v1704 = vpop.permute.xlu0 %1703
    %v1707 = vsel %vm384, %v1702, 0
    %1709 = vmatprep.subr.mxu0 0.0
    %1710 = vmatpush1.msra.mxu0 0.0
    %1711 = vmatprep.subr.mxu0 0.0
    %1712 = vmatpush1.msra.mxu0 0.0
    %1713 = vmatprep.subr.mxu0 0.0
    %1714 = vmatpush1.msra.mxu0 0.0
    %1715 = vmatprep.subr.mxu0 0.0
    %1716 = vmatpush1.msra.mxu0 0.0
    %1717 = vmatprep.subr.mxu0 0.0
    %1718 = vmatpush1.msra.mxu0 0.0
    %1719 = vmatprep.subr.mxu0 0.0
    %1720 = vmatpush1.msra.mxu0 0.0
    %1721 = vmatprep.subr.mxu0 0.0
    %1722 = vmatpush1.msra.mxu0 0.0
    %1723 = vmatprep.subr.mxu0 0.0
    %1724 = vmatpush1.msra.mxu0 0.0
    %1725 = vmatprep.subr.mxu0 0.0
    %1726 = vmatpush1.msra.mxu0 0.0
    %1727 = vmatprep.subr.mxu0 0.0
    %1728 = vmatpush1.msra.mxu0 0.0
    %1729 = vmatprep.subr.mxu0 0.0
    %1730 = vmatpush1.msra.mxu0 0.0
    %1731 = vmatprep.subr.mxu0 0.0
    %1732 = vmatpush1.msra.mxu0 0.0
    %1733 = vmatprep.subr.mxu0 0.0
    %1734 = vmatpush1.msra.mxu0 0.0
    %1735 = vmatprep.subr.mxu0 0.0
    %1736 = vmatpush1.msra.mxu0 0.0
    %1737 = vmatprep.subr.mxu0 0.0
    %1738 = vmatpush1.msra.mxu0 0.0
    %1739 = vmatprep.subr.mxu0 0.0
    %1740 = vmatpush1.msra.mxu0 %v1704
    %1741 = vmatprep.subr.mxu0 0.0
    %1742 = vmatpush2.msra.mxu0 0.0
    %1743 = vmatprep.subr.mxu0 0.0
    %1744 = vmatpush2.msra.mxu0 0.0
    %1745 = vmatprep.subr.mxu0 0.0
    %1746 = vmatpush2.msra.mxu0 0.0
    %1747 = vmatprep.subr.mxu0 0.0
    %1748 = vmatpush2.msra.mxu0 0.0
    %1749 = vmatprep.subr.mxu0 0.0
    %1750 = vmatpush2.msra.mxu0 0.0
    %1751 = vmatprep.subr.mxu0 0.0
    %1752 = vmatpush2.msra.mxu0 0.0
    %1753 = vmatprep.subr.mxu0 0.0
    %1754 = vmatpush2.msra.mxu0 0.0
    %1755 = vmatprep.subr.mxu0 0.0
    %1756 = vmatpush2.msra.mxu0 0.0
    %1757 = vmatprep.subr.mxu0 0.0
    %1758 = vmatpush2.msra.mxu0 0.0
    %1759 = vmatprep.subr.mxu0 0.0
    %1760 = vmatpush2.msra.mxu0 0.0
    %1761 = vmatprep.subr.mxu0 0.0
    %1762 = vmatpush2.msra.mxu0 0.0
    %1763 = vmatprep.subr.mxu0 0.0
    %1764 = vmatpush2.msra.mxu0 0.0
    %1765 = vmatprep.subr.mxu0 0.0
    %1766 = vmatpush2.msra.mxu0 0.0
    %1767 = vmatprep.subr.mxu0 0.0
    %1768 = vmatpush2.msra.mxu0 0.0
    %1769 = vmatprep.subr.mxu0 0.0
    %1770 = vmatpush2.msra.mxu0 0.0
    %1771 = vmatprep.subr.mxu0 0.0
    %1772 = vmatpush2.msra.mxu0 0.0
    %1773 = vmatprep.mubr.f32.mxu0 0.0
    %1774 = vmatmul.mubr.f32.gmra.mxu0 %v1707
    %v1775 = vpop.f32.mrf.mxu0
    %v1776 = vadd.f32 0.0, %v1775
    %v1777 = vpop.f32.mrf.mxu0
    %1778 = vdwg.mxu0
    %1779 = vst.msk [vmem:[#allocation3] sm:$0xff] %vm118, %v1776
    %v1780 = vld [vmem:[#allocation2 + $0x8] sm:$0xff]
    %1782 = vrot.lane.b32.xlu0 %v1780, 96
    %v1783 = vpop.permute.xlu0 %1782
    %v1784 = vsel %vm118, %v1780, 0
    %v1786 = vsel %vm118, %v1783, 0
    %1788 = vmatprep.subr.mxu0 0.0
    %1789 = vmatpush1.xpose.msra.mxu0 0.0
    %1790 = vmatprep.subr.mxu0 0.0
    %1791 = vmatpush1.xpose.msra.mxu0 0.0
    %1792 = vmatprep.subr.mxu0 0.0
    %1793 = vmatpush1.xpose.msra.mxu0 0.0
    %1794 = vmatprep.subr.mxu0 0.0
    %1795 = vmatpush1.xpose.msra.mxu0 0.0
    %1796 = vmatprep.subr.mxu0 0.0
    %1797 = vmatpush1.xpose.msra.mxu0 0.0
    %1798 = vmatprep.subr.mxu0 0.0
    %1799 = vmatpush1.xpose.msra.mxu0 0.0
    %1800 = vmatprep.subr.mxu0 0.0
    %1801 = vmatpush1.xpose.msra.mxu0 0.0
    %1802 = vmatprep.subr.mxu0 0.0
    %1803 = vmatpush1.xpose.msra.mxu0 0.0
    %1804 = vmatprep.subr.mxu0 0.0
    %1805 = vmatpush1.xpose.msra.mxu0 0.0
    %1806 = vmatprep.subr.mxu0 0.0
    %1807 = vmatpush1.xpose.msra.mxu0 0.0
    %1808 = vmatprep.subr.mxu0 0.0
    %1809 = vmatpush1.xpose.msra.mxu0 0.0
    %1810 = vmatprep.subr.mxu0 0.0
    %1811 = vmatpush1.xpose.msra.mxu0 0.0
    %1812 = vmatprep.subr.mxu0 0.0
    %1813 = vmatpush1.xpose.msra.mxu0 0.0
    %1814 = vmatprep.subr.mxu0 0.0
    %1815 = vmatpush1.xpose.msra.mxu0 0.0
    %1816 = vmatprep.subr.mxu0 0.0
    %1817 = vmatpush1.xpose.msra.mxu0 0.0
    %1818 = vmatprep.subr.mxu0 0.0
    %1819 = vmatpush1.xpose.msra.mxu0 %v1786
    %1820 = vmatprep.subr.mxu0 0.0
    %1821 = vmatpush2.xpose.msra.mxu0 0.0
    %1822 = vmatprep.subr.mxu0 0.0
    %1823 = vmatpush2.xpose.msra.mxu0 0.0
    %1824 = vmatprep.subr.mxu0 0.0
    %1825 = vmatpush2.xpose.msra.mxu0 0.0
    %1826 = vmatprep.subr.mxu0 0.0
    %1827 = vmatpush2.xpose.msra.mxu0 0.0
    %1828 = vmatprep.subr.mxu0 0.0
    %1829 = vmatpush2.xpose.msra.mxu0 0.0
    %1830 = vmatprep.subr.mxu0 0.0
    %1831 = vmatpush2.xpose.msra.mxu0 0.0
    %1832 = vmatprep.subr.mxu0 0.0
    %1833 = vmatpush2.xpose.msra.mxu0 0.0
    %1834 = vmatprep.subr.mxu0 0.0
    %1835 = vmatpush2.xpose.msra.mxu0 0.0
    %1836 = vmatprep.subr.mxu0 0.0
    %1837 = vmatpush2.xpose.msra.mxu0 0.0
    %1838 = vmatprep.subr.mxu0 0.0
    %1839 = vmatpush2.xpose.msra.mxu0 0.0
    %1840 = vmatprep.subr.mxu0 0.0
    %1841 = vmatpush2.xpose.msra.mxu0 0.0
    %1842 = vmatprep.subr.mxu0 0.0
    %1843 = vmatpush2.xpose.msra.mxu0 0.0
    %1844 = vmatprep.subr.mxu0 0.0
    %1845 = vmatpush2.xpose.msra.mxu0 0.0
    %1846 = vmatprep.subr.mxu0 0.0
    %1847 = vmatpush2.xpose.msra.mxu0 0.0
    %1848 = vmatprep.subr.mxu0 0.0
    %1849 = vmatpush2.xpose.msra.mxu0 0.0
    %1850 = vmatprep.subr.mxu0 0.0
    %1851 = vmatpush2.xpose.msra.mxu0 0.0
    %1852 = vmatprep.mubr.f32.mxu0 0.0
    %1853 = vmatmul.mubr.f32.gmra.mxu0 %v1784
    %v1854 = vpop.f32.mrf.mxu0
    %v1855 = vadd.f32 0.0, %v1854
    %v1856 = vpop.f32.mrf.mxu0
    %1857 = vdwg.mxu0
    %v1858 = vmul.f32 %v1855, 0.17677669
    %v1859 = vsel %vm384, %v1858, -inf
    %1860 = vmax.xlane.f32.xlu0 %v1859
    %v1861 = vpop.xlane.xlu0 %1860
    %v1862 = vsub.f32 %v1858, %v1861
    %v1863 = vmul.f32 %v1862, 1.442695
    %v1864 = vpow.pop %v1863
    %v1865 = vsel %vm384, %v1864, 0.0
    %1866 = vadd.xlane.f32.xlu0 %v1865
    %v1867 = vpop.xlane.xlu0 %1866
    %v1868 = vrcp.pop %v1867
    %v1869 = vmul.f32 %v1864, %v1868
    %1870 = vrot.lane.b32.xlu0 %v1780, 64
    %v1871 = vpop.permute.xlu0 %1870
    %v1874 = vsel %vm384, %v1869, 0
    %1876 = vmatprep.subr.mxu0 0.0
    %1877 = vmatpush1.msra.mxu0 0.0
    %1878 = vmatprep.subr.mxu0 0.0
    %1879 = vmatpush1.msra.mxu0 0.0
    %1880 = vmatprep.subr.mxu0 0.0
    %1881 = vmatpush1.msra.mxu0 0.0
    %1882 = vmatprep.subr.mxu0 0.0
    %1883 = vmatpush1.msra.mxu0 0.0
    %1884 = vmatprep.subr.mxu0 0.0
    %1885 = vmatpush1.msra.mxu0 0.0
    %1886 = vmatprep.subr.mxu0 0.0
    %1887 = vmatpush1.msra.mxu0 0.0
    %1888 = vmatprep.subr.mxu0 0.0
    %1889 = vmatpush1.msra.mxu0 0.0
    %1890 = vmatprep.subr.mxu0 0.0
    %1891 = vmatpush1.msra.mxu0 0.0
    %1892 = vmatprep.subr.mxu0 0.0
    %1893 = vmatpush1.msra.mxu0 0.0
    %1894 = vmatprep.subr.mxu0 0.0
    %1895 = vmatpush1.msra.mxu0 0.0
    %1896 = vmatprep.subr.mxu0 0.0
    %1897 = vmatpush1.msra.mxu0 0.0
    %1898 = vmatprep.subr.mxu0 0.0
    %1899 = vmatpush1.msra.mxu0 0.0
    %1900 = vmatprep.subr.mxu0 0.0
    %1901 = vmatpush1.msra.mxu0 0.0
    %1902 = vmatprep.subr.mxu0 0.0
    %1903 = vmatpush1.msra.mxu0 0.0
    %1904 = vmatprep.subr.mxu0 0.0
    %1905 = vmatpush1.msra.mxu0 0.0
    %1906 = vmatprep.subr.mxu0 0.0
    %1907 = vmatpush1.msra.mxu0 %v1871
    %1908 = vmatprep.subr.mxu0 0.0
    %1909 = vmatpush2.msra.mxu0 0.0
    %1910 = vmatprep.subr.mxu0 0.0
    %1911 = vmatpush2.msra.mxu0 0.0
    %1912 = vmatprep.subr.mxu0 0.0
    %1913 = vmatpush2.msra.mxu0 0.0
    %1914 = vmatprep.subr.mxu0 0.0
    %1915 = vmatpush2.msra.mxu0 0.0
    %1916 = vmatprep.subr.mxu0 0.0
    %1917 = vmatpush2.msra.mxu0 0.0
    %1918 = vmatprep.subr.mxu0 0.0
    %1919 = vmatpush2.msra.mxu0 0.0
    %1920 = vmatprep.subr.mxu0 0.0
    %1921 = vmatpush2.msra.mxu0 0.0
    %1922 = vmatprep.subr.mxu0 0.0
    %1923 = vmatpush2.msra.mxu0 0.0
    %1924 = vmatprep.subr.mxu0 0.0
    %1925 = vmatpush2.msra.mxu0 0.0
    %1926 = vmatprep.subr.mxu0 0.0
    %1927 = vmatpush2.msra.mxu0 0.0
    %1928 = vmatprep.subr.mxu0 0.0
    %1929 = vmatpush2.msra.mxu0 0.0
    %1930 = vmatprep.subr.mxu0 0.0
    %1931 = vmatpush2.msra.mxu0 0.0
    %1932 = vmatprep.subr.mxu0 0.0
    %1933 = vmatpush2.msra.mxu0 0.0
    %1934 = vmatprep.subr.mxu0 0.0
    %1935 = vmatpush2.msra.mxu0 0.0
    %1936 = vmatprep.subr.mxu0 0.0
    %1937 = vmatpush2.msra.mxu0 0.0
    %1938 = vmatprep.subr.mxu0 0.0
    %1939 = vmatpush2.msra.mxu0 0.0
    %1940 = vmatprep.mubr.f32.mxu0 0.0
    %1941 = vmatmul.mubr.f32.gmra.mxu0 %v1874
    %v1942 = vpop.f32.mrf.mxu0
    %v1943 = vadd.f32 0.0, %v1942
    %v1944 = vpop.f32.mrf.mxu0
    %1945 = vdwg.mxu0
    %1946 = vst.msk [vmem:[#allocation3 + $0x8] sm:$0xff] %vm118, %v1943
    %v1947 = vld [vmem:[#allocation2 + $0x10] sm:$0xff]
    %1949 = vrot.lane.b32.xlu0 %v1947, 96
    %v1950 = vpop.permute.xlu0 %1949
    %v1951 = vsel %vm118, %v1947, 0
    %v1953 = vsel %vm118, %v1950, 0
    %1955 = vmatprep.subr.mxu0 0.0
    %1956 = vmatpush1.xpose.msra.mxu0 0.0
    %1957 = vmatprep.subr.mxu0 0.0
    %1958 = vmatpush1.xpose.msra.mxu0 0.0
    %1959 = vmatprep.subr.mxu0 0.0
    %1960 = vmatpush1.xpose.msra.mxu0 0.0
    %1961 = vmatprep.subr.mxu0 0.0
    %1962 = vmatpush1.xpose.msra.mxu0 0.0
    %1963 = vmatprep.subr.mxu0 0.0
    %1964 = vmatpush1.xpose.msra.mxu0 0.0
    %1965 = vmatprep.subr.mxu0 0.0
    %1966 = vmatpush1.xpose.msra.mxu0 0.0
    %1967 = vmatprep.subr.mxu0 0.0
    %1968 = vmatpush1.xpose.msra.mxu0 0.0
    %1969 = vmatprep.subr.mxu0 0.0
    %1970 = vmatpush1.xpose.msra.mxu0 0.0
    %1971 = vmatprep.subr.mxu0 0.0
    %1972 = vmatpush1.xpose.msra.mxu0 0.0
    %1973 = vmatprep.subr.mxu0 0.0
    %1974 = vmatpush1.xpose.msra.mxu0 0.0
    %1975 = vmatprep.subr.mxu0 0.0
    %1976 = vmatpush1.xpose.msra.mxu0 0.0
    %1977 = vmatprep.subr.mxu0 0.0
    %1978 = vmatpush1.xpose.msra.mxu0 0.0
    %1979 = vmatprep.subr.mxu0 0.0
    %1980 = vmatpush1.xpose.msra.mxu0 0.0
    %1981 = vmatprep.subr.mxu0 0.0
    %1982 = vmatpush1.xpose.msra.mxu0 0.0
    %1983 = vmatprep.subr.mxu0 0.0
    %1984 = vmatpush1.xpose.msra.mxu0 0.0
    %1985 = vmatprep.subr.mxu0 0.0
    %1986 = vmatpush1.xpose.msra.mxu0 %v1953
    %1987 = vmatprep.subr.mxu0 0.0
    %1988 = vmatpush2.xpose.msra.mxu0 0.0
    %1989 = vmatprep.subr.mxu0 0.0
    %1990 = vmatpush2.xpose.msra.mxu0 0.0
    %1991 = vmatprep.subr.mxu0 0.0
    %1992 = vmatpush2.xpose.msra.mxu0 0.0
    %1993 = vmatprep.subr.mxu0 0.0
    %1994 = vmatpush2.xpose.msra.mxu0 0.0
    %1995 = vmatprep.subr.mxu0 0.0
    %1996 = vmatpush2.xpose.msra.mxu0 0.0
    %1997 = vmatprep.subr.mxu0 0.0
    %1998 = vmatpush2.xpose.msra.mxu0 0.0
    %1999 = vmatprep.subr.mxu0 0.0
    %2000 = vmatpush2.xpose.msra.mxu0 0.0
    %2001 = vmatprep.subr.mxu0 0.0
    %2002 = vmatpush2.xpose.msra.mxu0 0.0
    %2003 = vmatprep.subr.mxu0 0.0
    %2004 = vmatpush2.xpose.msra.mxu0 0.0
    %2005 = vmatprep.subr.mxu0 0.0
    %2006 = vmatpush2.xpose.msra.mxu0 0.0
    %2007 = vmatprep.subr.mxu0 0.0
    %2008 = vmatpush2.xpose.msra.mxu0 0.0
    %2009 = vmatprep.subr.mxu0 0.0
    %2010 = vmatpush2.xpose.msra.mxu0 0.0
    %2011 = vmatprep.subr.mxu0 0.0
    %2012 = vmatpush2.xpose.msra.mxu0 0.0
    %2013 = vmatprep.subr.mxu0 0.0
    %2014 = vmatpush2.xpose.msra.mxu0 0.0
    %2015 = vmatprep.subr.mxu0 0.0
    %2016 = vmatpush2.xpose.msra.mxu0 0.0
    %2017 = vmatprep.subr.mxu0 0.0
    %2018 = vmatpush2.xpose.msra.mxu0 0.0
    %2019 = vmatprep.mubr.f32.mxu0 0.0
    %2020 = vmatmul.mubr.f32.gmra.mxu0 %v1951
    %v2021 = vpop.f32.mrf.mxu0
    %v2022 = vadd.f32 0.0, %v2021
    %v2023 = vpop.f32.mrf.mxu0
    %2024 = vdwg.mxu0
    %v2025 = vmul.f32 %v2022, 0.17677669
    %v2026 = vsel %vm384, %v2025, -inf
    %2027 = vmax.xlane.f32.xlu0 %v2026
    %v2028 = vpop.xlane.xlu0 %2027
    %v2029 = vsub.f32 %v2025, %v2028
    %v2030 = vmul.f32 %v2029, 1.442695
    %v2031 = vpow.pop %v2030
    %v2032 = vsel %vm384, %v2031, 0.0
    %2033 = vadd.xlane.f32.xlu0 %v2032
    %v2034 = vpop.xlane.xlu0 %2033
    %v2035 = vrcp.pop %v2034
    %v2036 = vmul.f32 %v2031, %v2035
    %2037 = vrot.lane.b32.xlu0 %v1947, 64
    %v2038 = vpop.permute.xlu0 %2037
    %v2041 = vsel %vm384, %v2036, 0
    %2043 = vmatprep.subr.mxu0 0.0
    %2044 = vmatpush1.msra.mxu0 0.0
    %2045 = vmatprep.subr.mxu0 0.0
    %2046 = vmatpush1.msra.mxu0 0.0
    %2047 = vmatprep.subr.mxu0 0.0
    %2048 = vmatpush1.msra.mxu0 0.0
    %2049 = vmatprep.subr.mxu0 0.0
    %2050 = vmatpush1.msra.mxu0 0.0
    %2051 = vmatprep.subr.mxu0 0.0
    %2052 = vmatpush1.msra.mxu0 0.0
    %2053 = vmatprep.subr.mxu0 0.0
    %2054 = vmatpush1.msra.mxu0 0.0
    %2055 = vmatprep.subr.mxu0 0.0
    %2056 = vmatpush1.msra.mxu0 0.0
    %2057 = vmatprep.subr.mxu0 0.0
    %2058 = vmatpush1.msra.mxu0 0.0
    %2059 = vmatprep.subr.mxu0 0.0
    %2060 = vmatpush1.msra.mxu0 0.0
    %2061 = vmatprep.subr.mxu0 0.0
    %2062 = vmatpush1.msra.mxu0 0.0
    %2063 = vmatprep.subr.mxu0 0.0
    %2064 = vmatpush1.msra.mxu0 0.0
    %2065 = vmatprep.subr.mxu0 0.0
    %2066 = vmatpush1.msra.mxu0 0.0
    %2067 = vmatprep.subr.mxu0 0.0
    %2068 = vmatpush1.msra.mxu0 0.0
    %2069 = vmatprep.subr.mxu0 0.0
    %2070 = vmatpush1.msra.mxu0 0.0
    %2071 = vmatprep.subr.mxu0 0.0
    %2072 = vmatpush1.msra.mxu0 0.0
    %2073 = vmatprep.subr.mxu0 0.0
    %2074 = vmatpush1.msra.mxu0 %v2038
    %2075 = vmatprep.subr.mxu0 0.0
    %2076 = vmatpush2.msra.mxu0 0.0
    %2077 = vmatprep.subr.mxu0 0.0
    %2078 = vmatpush2.msra.mxu0 0.0
    %2079 = vmatprep.subr.mxu0 0.0
    %2080 = vmatpush2.msra.mxu0 0.0
    %2081 = vmatprep.subr.mxu0 0.0
    %2082 = vmatpush2.msra.mxu0 0.0
    %2083 = vmatprep.subr.mxu0 0.0
    %2084 = vmatpush2.msra.mxu0 0.0
    %2085 = vmatprep.subr.mxu0 0.0
    %2086 = vmatpush2.msra.mxu0 0.0
    %2087 = vmatprep.subr.mxu0 0.0
    %2088 = vmatpush2.msra.mxu0 0.0
    %2089 = vmatprep.subr.mxu0 0.0
    %2090 = vmatpush2.msra.mxu0 0.0
    %2091 = vmatprep.subr.mxu0 0.0
    %2092 = vmatpush2.msra.mxu0 0.0
    %2093 = vmatprep.subr.mxu0 0.0
    %2094 = vmatpush2.msra.mxu0 0.0
    %2095 = vmatprep.subr.mxu0 0.0
    %2096 = vmatpush2.msra.mxu0 0.0
    %2097 = vmatprep.subr.mxu0 0.0
    %2098 = vmatpush2.msra.mxu0 0.0
    %2099 = vmatprep.subr.mxu0 0.0
    %2100 = vmatpush2.msra.mxu0 0.0
    %2101 = vmatprep.subr.mxu0 0.0
    %2102 = vmatpush2.msra.mxu0 0.0
    %2103 = vmatprep.subr.mxu0 0.0
    %2104 = vmatpush2.msra.mxu0 0.0
    %2105 = vmatprep.subr.mxu0 0.0
    %2106 = vmatpush2.msra.mxu0 0.0
    %2107 = vmatprep.mubr.f32.mxu0 0.0
    %2108 = vmatmul.mubr.f32.gmra.mxu0 %v2041
    %v2109 = vpop.f32.mrf.mxu0
    %v2110 = vadd.f32 0.0, %v2109
    %v2111 = vpop.f32.mrf.mxu0
    %2112 = vdwg.mxu0
    %2113 = vst.msk [vmem:[#allocation3 + $0x10] sm:$0xff] %vm118, %v2110
    %v2114 = vld [vmem:[#allocation2 + $0x18] sm:$0xff]
    %2116 = vrot.lane.b32.xlu0 %v2114, 96
    %v2117 = vpop.permute.xlu0 %2116
    %v2118 = vsel %vm118, %v2114, 0
    %v2120 = vsel %vm118, %v2117, 0
    %2122 = vmatprep.subr.mxu0 0.0
    %2123 = vmatpush1.xpose.msra.mxu0 0.0
    %2124 = vmatprep.subr.mxu0 0.0
    %2125 = vmatpush1.xpose.msra.mxu0 0.0
    %2126 = vmatprep.subr.mxu0 0.0
    %2127 = vmatpush1.xpose.msra.mxu0 0.0
    %2128 = vmatprep.subr.mxu0 0.0
    %2129 = vmatpush1.xpose.msra.mxu0 0.0
    %2130 = vmatprep.subr.mxu0 0.0
    %2131 = vmatpush1.xpose.msra.mxu0 0.0
    %2132 = vmatprep.subr.mxu0 0.0
    %2133 = vmatpush1.xpose.msra.mxu0 0.0
    %2134 = vmatprep.subr.mxu0 0.0
    %2135 = vmatpush1.xpose.msra.mxu0 0.0
    %2136 = vmatprep.subr.mxu0 0.0
    %2137 = vmatpush1.xpose.msra.mxu0 0.0
    %2138 = vmatprep.subr.mxu0 0.0
    %2139 = vmatpush1.xpose.msra.mxu0 0.0
    %2140 = vmatprep.subr.mxu0 0.0
    %2141 = vmatpush1.xpose.msra.mxu0 0.0
    %2142 = vmatprep.subr.mxu0 0.0
    %2143 = vmatpush1.xpose.msra.mxu0 0.0
    %2144 = vmatprep.subr.mxu0 0.0
    %2145 = vmatpush1.xpose.msra.mxu0 0.0
    %2146 = vmatprep.subr.mxu0 0.0
    %2147 = vmatpush1.xpose.msra.mxu0 0.0
    %2148 = vmatprep.subr.mxu0 0.0
    %2149 = vmatpush1.xpose.msra.mxu0 0.0
    %2150 = vmatprep.subr.mxu0 0.0
    %2151 = vmatpush1.xpose.msra.mxu0 0.0
    %2152 = vmatprep.subr.mxu0 0.0
    %2153 = vmatpush1.xpose.msra.mxu0 %v2120
    %2154 = vmatprep.subr.mxu0 0.0
    %2155 = vmatpush2.xpose.msra.mxu0 0.0
    %2156 = vmatprep.subr.mxu0 0.0
    %2157 = vmatpush2.xpose.msra.mxu0 0.0
    %2158 = vmatprep.subr.mxu0 0.0
    %2159 = vmatpush2.xpose.msra.mxu0 0.0
    %2160 = vmatprep.subr.mxu0 0.0
    %2161 = vmatpush2.xpose.msra.mxu0 0.0
    %2162 = vmatprep.subr.mxu0 0.0
    %2163 = vmatpush2.xpose.msra.mxu0 0.0
    %2164 = vmatprep.subr.mxu0 0.0
    %2165 = vmatpush2.xpose.msra.mxu0 0.0
    %2166 = vmatprep.subr.mxu0 0.0
    %2167 = vmatpush2.xpose.msra.mxu0 0.0
    %2168 = vmatprep.subr.mxu0 0.0
    %2169 = vmatpush2.xpose.msra.mxu0 0.0
    %2170 = vmatprep.subr.mxu0 0.0
    %2171 = vmatpush2.xpose.msra.mxu0 0.0
    %2172 = vmatprep.subr.mxu0 0.0
    %2173 = vmatpush2.xpose.msra.mxu0 0.0
    %2174 = vmatprep.subr.mxu0 0.0
    %2175 = vmatpush2.xpose.msra.mxu0 0.0
    %2176 = vmatprep.subr.mxu0 0.0
    %2177 = vmatpush2.xpose.msra.mxu0 0.0
    %2178 = vmatprep.subr.mxu0 0.0
    %2179 = vmatpush2.xpose.msra.mxu0 0.0
    %2180 = vmatprep.subr.mxu0 0.0
    %2181 = vmatpush2.xpose.msra.mxu0 0.0
    %2182 = vmatprep.subr.mxu0 0.0
    %2183 = vmatpush2.xpose.msra.mxu0 0.0
    %2184 = vmatprep.subr.mxu0 0.0
    %2185 = vmatpush2.xpose.msra.mxu0 0.0
    %2186 = vmatprep.mubr.f32.mxu0 0.0
    %2187 = vmatmul.mubr.f32.gmra.mxu0 %v2118
    %v2188 = vpop.f32.mrf.mxu0
    %v2189 = vadd.f32 0.0, %v2188
    %v2190 = vpop.f32.mrf.mxu0
    %2191 = vdwg.mxu0
    %v2192 = vmul.f32 %v2189, 0.17677669
    %v2193 = vsel %vm384, %v2192, -inf
    %2194 = vmax.xlane.f32.xlu0 %v2193
    %v2195 = vpop.xlane.xlu0 %2194
    %v2196 = vsub.f32 %v2192, %v2195
    %v2197 = vmul.f32 %v2196, 1.442695
    %v2198 = vpow.pop %v2197
    %v2199 = vsel %vm384, %v2198, 0.0
    %2200 = vadd.xlane.f32.xlu0 %v2199
    %v2201 = vpop.xlane.xlu0 %2200
    %v2202 = vrcp.pop %v2201
    %v2203 = vmul.f32 %v2198, %v2202
    %2204 = vrot.lane.b32.xlu0 %v2114, 64
    %v2205 = vpop.permute.xlu0 %2204
    %v2208 = vsel %vm384, %v2203, 0
    %2210 = vmatprep.subr.mxu0 0.0
    %2211 = vmatpush1.msra.mxu0 0.0
    %2212 = vmatprep.subr.mxu0 0.0
    %2213 = vmatpush1.msra.mxu0 0.0
    %2214 = vmatprep.subr.mxu0 0.0
    %2215 = vmatpush1.msra.mxu0 0.0
    %2216 = vmatprep.subr.mxu0 0.0
    %2217 = vmatpush1.msra.mxu0 0.0
    %2218 = vmatprep.subr.mxu0 0.0
    %2219 = vmatpush1.msra.mxu0 0.0
    %2220 = vmatprep.subr.mxu0 0.0
    %2221 = vmatpush1.msra.mxu0 0.0
    %2222 = vmatprep.subr.mxu0 0.0
    %2223 = vmatpush1.msra.mxu0 0.0
    %2224 = vmatprep.subr.mxu0 0.0
    %2225 = vmatpush1.msra.mxu0 0.0
    %2226 = vmatprep.subr.mxu0 0.0
    %2227 = vmatpush1.msra.mxu0 0.0
    %2228 = vmatprep.subr.mxu0 0.0
    %2229 = vmatpush1.msra.mxu0 0.0
    %2230 = vmatprep.subr.mxu0 0.0
    %2231 = vmatpush1.msra.mxu0 0.0
    %2232 = vmatprep.subr.mxu0 0.0
    %2233 = vmatpush1.msra.mxu0 0.0
    %2234 = vmatprep.subr.mxu0 0.0
    %2235 = vmatpush1.msra.mxu0 0.0
    %2236 = vmatprep.subr.mxu0 0.0
    %2237 = vmatpush1.msra.mxu0 0.0
    %2238 = vmatprep.subr.mxu0 0.0
    %2239 = vmatpush1.msra.mxu0 0.0
    %2240 = vmatprep.subr.mxu0 0.0
    %2241 = vmatpush1.msra.mxu0 %v2205
    %2242 = vmatprep.subr.mxu0 0.0
    %2243 = vmatpush2.msra.mxu0 0.0
    %2244 = vmatprep.subr.mxu0 0.0
    %2245 = vmatpush2.msra.mxu0 0.0
    %2246 = vmatprep.subr.mxu0 0.0
    %2247 = vmatpush2.msra.mxu0 0.0
    %2248 = vmatprep.subr.mxu0 0.0
    %2249 = vmatpush2.msra.mxu0 0.0
    %2250 = vmatprep.subr.mxu0 0.0
    %2251 = vmatpush2.msra.mxu0 0.0
    %2252 = vmatprep.subr.mxu0 0.0
    %2253 = vmatpush2.msra.mxu0 0.0
    %2254 = vmatprep.subr.mxu0 0.0
    %2255 = vmatpush2.msra.mxu0 0.0
    %2256 = vmatprep.subr.mxu0 0.0
    %2257 = vmatpush2.msra.mxu0 0.0
    %2258 = vmatprep.subr.mxu0 0.0
    %2259 = vmatpush2.msra.mxu0 0.0
    %2260 = vmatprep.subr.mxu0 0.0
    %2261 = vmatpush2.msra.mxu0 0.0
    %2262 = vmatprep.subr.mxu0 0.0
    %2263 = vmatpush2.msra.mxu0 0.0
    %2264 = vmatprep.subr.mxu0 0.0
    %2265 = vmatpush2.msra.mxu0 0.0
    %2266 = vmatprep.subr.mxu0 0.0
    %2267 = vmatpush2.msra.mxu0 0.0
    %2268 = vmatprep.subr.mxu0 0.0
    %2269 = vmatpush2.msra.mxu0 0.0
    %2270 = vmatprep.subr.mxu0 0.0
    %2271 = vmatpush2.msra.mxu0 0.0
    %2272 = vmatprep.subr.mxu0 0.0
    %2273 = vmatpush2.msra.mxu0 0.0
    %2274 = vmatprep.mubr.f32.mxu0 0.0
    %2275 = vmatmul.mubr.f32.gmra.mxu0 %v2208
    %v2276 = vpop.f32.mrf.mxu0
    %v2277 = vadd.f32 0.0, %v2276
    %v2278 = vpop.f32.mrf.mxu0
    %2279 = vdwg.mxu0
    %2280 = vst.msk [vmem:[#allocation3 + $0x18] sm:$0xff] %vm118, %v2277
    %v2281 = vld [vmem:[#allocation3] sm:$0xff]
    %v2282 = vld [vmem:[#allocation3 + $0x8] sm:$0xff]
    %v2283 = vld [vmem:[#allocation3 + $0x10] sm:$0xff]
    %v2284 = vld [vmem:[#allocation3 + $0x18] sm:$0xff]
    %s2285 = scalar_lea.vmem %s5, 32
    %v2286 = vld [vmem:[%s2285] sm:$0xff]
    %v2287 = vld [vmem:[%s2285 + $0x8] sm:$0xff]
    %v2288 = vld [vmem:[%s2285 + $0x10] sm:$0xff]
    %v2289 = vld [vmem:[%s2285 + $0x18] sm:$0xff]
    %s2290 = scalar_lea.vmem %s6, 1
    %v2291 = vld [vmem:[%s2290] sm:$0x1]
    %v2293 = vlaneseq
    %v2294 = vshrl.u32 %v2293, 7
    %v2295 = vsub.s32 0, %v2294
    %v2296 = vrot.slane %v2291, %v2295
    %v2299 = vsel %vm118, %v2281, 0
    %v2302 = vsel %vm118, %v2282, 0
    %v2305 = vsel %vm118, %v2283, 0
    %v2308 = vsel %vm118, %v2284, 0
    %2310 = vmatprep.subr.mxu0 0.0
    %2311 = vmatpush1.msra.mxu0 0.0
    %2312 = vmatprep.subr.mxu0 0.0
    %2313 = vmatpush1.msra.mxu0 0.0
    %2314 = vmatprep.subr.mxu0 0.0
    %2315 = vmatpush1.msra.mxu0 0.0
    %2316 = vmatprep.subr.mxu0 0.0
    %2317 = vmatpush1.msra.mxu0 0.0
    %2318 = vmatprep.subr.mxu0 0.0
    %2319 = vmatpush1.msra.mxu0 0.0
    %2320 = vmatprep.subr.mxu0 0.0
    %2321 = vmatpush1.msra.mxu0 0.0
    %2322 = vmatprep.subr.mxu0 0.0
    %2323 = vmatpush1.msra.mxu0 0.0
    %2324 = vmatprep.subr.mxu0 0.0
    %2325 = vmatpush1.msra.mxu0 0.0
    %2326 = vmatprep.subr.mxu0 0.0
    %2327 = vmatpush1.msra.mxu0 0.0
    %2328 = vmatprep.subr.mxu0 0.0
    %2329 = vmatpush1.msra.mxu0 0.0
    %2330 = vmatprep.subr.mxu0 0.0
    %2331 = vmatpush1.msra.mxu0 0.0
    %2332 = vmatprep.subr.mxu0 0.0
    %2333 = vmatpush1.msra.mxu0 0.0
    %2334 = vmatprep.subr.mxu0 0.0
    %2335 = vmatpush1.msra.mxu0 %v2289
    %2336 = vmatprep.subr.mxu0 0.0
    %2337 = vmatpush1.msra.mxu0 %v2288
    %2338 = vmatprep.subr.mxu0 0.0
    %2339 = vmatpush1.msra.mxu0 %v2287
    %2340 = vmatprep.subr.mxu0 0.0
    %2341 = vmatpush1.msra.mxu0 %v2286
    %2342 = vmatprep.subr.mxu0 0.0
    %2343 = vmatpush2.msra.mxu0 0.0
    %2344 = vmatprep.subr.mxu0 0.0
    %2345 = vmatpush2.msra.mxu0 0.0
    %2346 = vmatprep.subr.mxu0 0.0
    %2347 = vmatpush2.msra.mxu0 0.0
    %2348 = vmatprep.subr.mxu0 0.0
    %2349 = vmatpush2.msra.mxu0 0.0
    %2350 = vmatprep.subr.mxu0 0.0
    %2351 = vmatpush2.msra.mxu0 0.0
    %2352 = vmatprep.subr.mxu0 0.0
    %2353 = vmatpush2.msra.mxu0 0.0
    %2354 = vmatprep.subr.mxu0 0.0
    %2355 = vmatpush2.msra.mxu0 0.0
    %2356 = vmatprep.subr.mxu0 0.0
    %2357 = vmatpush2.msra.mxu0 0.0
    %2358 = vmatprep.subr.mxu0 0.0
    %2359 = vmatpush2.msra.mxu0 0.0
    %2360 = vmatprep.subr.mxu0 0.0
    %2361 = vmatpush2.msra.mxu0 0.0
    %2362 = vmatprep.subr.mxu0 0.0
    %2363 = vmatpush2.msra.mxu0 0.0
    %2364 = vmatprep.subr.mxu0 0.0
    %2365 = vmatpush2.msra.mxu0 0.0
    %2366 = vmatprep.subr.mxu0 0.0
    %2367 = vmatpush2.msra.mxu0 0.0
    %2368 = vmatprep.subr.mxu0 0.0
    %2369 = vmatpush2.msra.mxu0 0.0
    %2370 = vmatprep.subr.mxu0 0.0
    %2371 = vmatpush2.msra.mxu0 0.0
    %2372 = vmatprep.subr.mxu0 0.0
    %2373 = vmatpush2.msra.mxu0 0.0
    %2374 = vmatprep.mubr.f32.mxu0 0.0
    %2375 = vmatmul.mubr.f32.gmra.mxu0 %v2299
    %v2376 = vpop.f32.mrf.mxu0
    %v2377 = vadd.f32 %v2296, %v2376
    %v2378 = vpop.f32.mrf.mxu0
    %2379 = vmatprep.mubr.f32.mxu0 0.0
    %2380 = vmatmul.mubr.f32.gmra.mxu0 %v2302
    %v2381 = vpop.f32.mrf.mxu0
    %v2382 = vadd.f32 %v2296, %v2381
    %v2383 = vpop.f32.mrf.mxu0
    %2384 = vmatprep.mubr.f32.mxu0 0.0
    %2385 = vmatmul.mubr.f32.gmra.mxu0 %v2305
    %v2386 = vpop.f32.mrf.mxu0
    %v2387 = vadd.f32 %v2296, %v2386
    %v2388 = vpop.f32.mrf.mxu0
    %2389 = vmatprep.mubr.f32.mxu0 0.0
    %2390 = vmatmul.mubr.f32.gmra.mxu0 %v2308
    %v2391 = vpop.f32.mrf.mxu0
    %v2392 = vadd.f32 %v2296, %v2391
    %v2393 = vpop.f32.mrf.mxu0
    %2394 = vdwg.mxu0
    %v2395 = vadd.f32 %v1495, %v2377
    %v2396 = vadd.f32 %v1496, %v2382
    %v2397 = vadd.f32 %v1497, %v2387
    %v2398 = vadd.f32 %v1498, %v2392
    %s2399 = scalar_lea.vmem %s7, 1
    %v2400 = vld [vmem:[%s2399] sm:$0x1]
    %s2401 = scalar_lea.vmem %s8, 1
    %v2402 = vld [vmem:[%s2401] sm:$0x1]
    %v2403 = vsel %vm118, %v2395, 0.0
    %2404 = vadd.xlane.f32.xlu0 %v2403
    %v2405 = vpop.xlane.xlu0 %2404
    %v2406 = vsel %vm118, %v2396, 0.0
    %2407 = vadd.xlane.f32.xlu0 %v2406
    %v2408 = vpop.xlane.xlu0 %2407
    %v2409 = vsel %vm118, %v2397, 0.0
    %2410 = vadd.xlane.f32.xlu0 %v2409
    %v2411 = vpop.xlane.xlu0 %2410
    %v2412 = vsel %vm118, %v2398, 0.0
    %2413 = vadd.xlane.f32.xlu0 %v2412
    %v2414 = vpop.xlane.xlu0 %2413
    %v2415 = vmul.f32 %v2405, %v131
    %v2416 = vmul.f32 %v2408, %v131
    %v2417 = vmul.f32 %v2411, %v131
    %v2418 = vmul.f32 %v2414, %v131
    %v2419 = vsub.f32 %v2395, %v2415
    %v2420 = vsub.f32 %v2396, %v2416
    %v2421 = vsub.f32 %v2397, %v2417
    %v2422 = vsub.f32 %v2398, %v2418
    %v2423 = vmul.f32 %v2419, %v2419
    %v2424 = vmul.f32 %v2420, %v2420
    %v2425 = vmul.f32 %v2421, %v2421
    %v2426 = vmul.f32 %v2422, %v2422
    %v2427 = vsel %vm118, %v2423, 0.0
    %2428 = vadd.xlane.f32.xlu0 %v2427
    %v2429 = vpop.xlane.xlu0 %2428
    %v2430 = vsel %vm118, %v2424, 0.0
    %2431 = vadd.xlane.f32.xlu0 %v2430
    %v2432 = vpop.xlane.xlu0 %2431
    %v2433 = vsel %vm118, %v2425, 0.0
    %2434 = vadd.xlane.f32.xlu0 %v2433
    %v2435 = vpop.xlane.xlu0 %2434
    %v2436 = vsel %vm118, %v2426, 0.0
    %2437 = vadd.xlane.f32.xlu0 %v2436
    %v2438 = vpop.xlane.xlu0 %2437
    %v2439 = vmul.f32 %v2429, %v131
    %v2440 = vmul.f32 %v2432, %v131
    %v2441 = vmul.f32 %v2435, %v131
    %v2442 = vmul.f32 %v2438, %v131
    %v2443 = vadd.f32 %v2439, 1e-05
    %v2444 = vadd.f32 %v2440, 1e-05
    %v2445 = vadd.f32 %v2441, 1e-05
    %v2446 = vadd.f32 %v2442, 1e-05
    %v2447 = vrsqrt.pop %v2443
    %v2448 = vrsqrt.pop %v2444
    %v2449 = vrsqrt.pop %v2445
    %v2450 = vrsqrt.pop %v2446
    %v2451 = vmul.f32 %v2419, %v2447
    %v2452 = vmul.f32 %v2420, %v2448
    %v2453 = vmul.f32 %v2421, %v2449
    %v2454 = vmul.f32 %v2422, %v2450
    %v2456 = vlaneseq
    %v2457 = vshrl.u32 %v2456, 7
    %v2458 = vsub.s32 0, %v2457
    %v2459 = vrot.slane %v2400, %v2458
    %v2461 = vmul.f32 %v2451, %v2459
    %v2462 = vmul.f32 %v2452, %v2459
    %v2463 = vmul.f32 %v2453, %v2459
    %v2464 = vmul.f32 %v2454, %v2459
    %v2466 = vlaneseq
    %v2467 = vshrl.u32 %v2466, 7
    %v2468 = vsub.s32 0, %v2467
    %v2469 = vrot.slane %v2402, %v2468
    %v2471 = vadd.f32 %v2461, %v2469
    %v2472 = vadd.f32 %v2462, %v2469
    %v2473 = vadd.f32 %v2463, %v2469
    %v2474 = vadd.f32 %v2464, %v2469
    %s2475 = scalar_lea.vmem %s9, 32
    %v2476 = vld [vmem:[%s2475] sm:$0xff]
    %v2477 = vld [vmem:[%s2475 + $0x8] sm:$0xff]
    %v2478 = vld [vmem:[%s2475 + $0x10] sm:$0xff]
    %v2479 = vld [vmem:[%s2475 + $0x18] sm:$0xff]
    %s2480 = scalar_lea.vmem %s10, 1
    %v2481 = vld [vmem:[%s2480] sm:$0x1]
    %v2483 = vlaneseq
    %v2484 = vshrl.u32 %v2483, 7
    %v2485 = vsub.s32 0, %v2484
    %v2486 = vrot.slane %v2481, %v2485
    %v2489 = vsel %vm118, %v2471, 0
    %v2492 = vsel %vm118, %v2472, 0
    %v2495 = vsel %vm118, %v2473, 0
    %v2498 = vsel %vm118, %v2474, 0
    %2500 = vmatprep.subr.mxu0 0.0
    %2501 = vmatpush1.msra.mxu0 0.0
    %2502 = vmatprep.subr.mxu0 0.0
    %2503 = vmatpush1.msra.mxu0 0.0
    %2504 = vmatprep.subr.mxu0 0.0
    %2505 = vmatpush1.msra.mxu0 0.0
    %2506 = vmatprep.subr.mxu0 0.0
    %2507 = vmatpush1.msra.mxu0 0.0
    %2508 = vmatprep.subr.mxu0 0.0
    %2509 = vmatpush1.msra.mxu0 0.0
    %2510 = vmatprep.subr.mxu0 0.0
    %2511 = vmatpush1.msra.mxu0 0.0
    %2512 = vmatprep.subr.mxu0 0.0
    %2513 = vmatpush1.msra.mxu0 0.0
    %2514 = vmatprep.subr.mxu0 0.0
    %2515 = vmatpush1.msra.mxu0 0.0
    %2516 = vmatprep.subr.mxu0 0.0
    %2517 = vmatpush1.msra.mxu0 0.0
    %2518 = vmatprep.subr.mxu0 0.0
    %2519 = vmatpush1.msra.mxu0 0.0
    %2520 = vmatprep.subr.mxu0 0.0
    %2521 = vmatpush1.msra.mxu0 0.0
    %2522 = vmatprep.subr.mxu0 0.0
    %2523 = vmatpush1.msra.mxu0 0.0
    %2524 = vmatprep.subr.mxu0 0.0
    %2525 = vmatpush1.msra.mxu0 %v2479
    %2526 = vmatprep.subr.mxu0 0.0
    %2527 = vmatpush1.msra.mxu0 %v2478
    %2528 = vmatprep.subr.mxu0 0.0
    %2529 = vmatpush1.msra.mxu0 %v2477
    %2530 = vmatprep.subr.mxu0 0.0
    %2531 = vmatpush1.msra.mxu0 %v2476
    %2532 = vmatprep.subr.mxu0 0.0
    %2533 = vmatpush2.msra.mxu0 0.0
    %2534 = vmatprep.subr.mxu0 0.0
    %2535 = vmatpush2.msra.mxu0 0.0
    %2536 = vmatprep.subr.mxu0 0.0
    %2537 = vmatpush2.msra.mxu0 0.0
    %2538 = vmatprep.subr.mxu0 0.0
    %2539 = vmatpush2.msra.mxu0 0.0
    %2540 = vmatprep.subr.mxu0 0.0
    %2541 = vmatpush2.msra.mxu0 0.0
    %2542 = vmatprep.subr.mxu0 0.0
    %2543 = vmatpush2.msra.mxu0 0.0
    %2544 = vmatprep.subr.mxu0 0.0
    %2545 = vmatpush2.msra.mxu0 0.0
    %2546 = vmatprep.subr.mxu0 0.0
    %2547 = vmatpush2.msra.mxu0 0.0
    %2548 = vmatprep.subr.mxu0 0.0
    %2549 = vmatpush2.msra.mxu0 0.0
    %2550 = vmatprep.subr.mxu0 0.0
    %2551 = vmatpush2.msra.mxu0 0.0
    %2552 = vmatprep.subr.mxu0 0.0
    %2553 = vmatpush2.msra.mxu0 0.0
    %2554 = vmatprep.subr.mxu0 0.0
    %2555 = vmatpush2.msra.mxu0 0.0
    %2556 = vmatprep.subr.mxu0 0.0
    %2557 = vmatpush2.msra.mxu0 0.0
    %2558 = vmatprep.subr.mxu0 0.0
    %2559 = vmatpush2.msra.mxu0 0.0
    %2560 = vmatprep.subr.mxu0 0.0
    %2561 = vmatpush2.msra.mxu0 0.0
    %2562 = vmatprep.subr.mxu0 0.0
    %2563 = vmatpush2.msra.mxu0 0.0
    %2564 = vmatprep.mubr.f32.mxu0 0.0
    %2565 = vmatmul.mubr.f32.gmra.mxu0 %v2489
    %v2566 = vpop.f32.mrf.mxu0
    %v2567 = vadd.f32 %v2486, %v2566
    %v2568 = vpop.f32.mrf.mxu0
    %2569 = vmatprep.mubr.f32.mxu0 0.0
    %2570 = vmatmul.mubr.f32.gmra.mxu0 %v2492
    %v2571 = vpop.f32.mrf.mxu0
    %v2572 = vadd.f32 %v2486, %v2571
    %v2573 = vpop.f32.mrf.mxu0
    %2574 = vmatprep.mubr.f32.mxu0 0.0
    %2575 = vmatmul.mubr.f32.gmra.mxu0 %v2495
    %v2576 = vpop.f32.mrf.mxu0
    %v2577 = vadd.f32 %v2486, %v2576
    %v2578 = vpop.f32.mrf.mxu0
    %2579 = vmatprep.mubr.f32.mxu0 0.0
    %2580 = vmatmul.mubr.f32.gmra.mxu0 %v2498
    %v2581 = vpop.f32.mrf.mxu0
    %v2582 = vadd.f32 %v2486, %v2581
    %v2583 = vpop.f32.mrf.mxu0
    %2584 = vdwg.mxu0
    %v2585 = vmul.f32 %v2567, 0.5
    %v2586 = vmul.f32 %v2572, 0.5
    %v2587 = vmul.f32 %v2577, 0.5
    %v2588 = vmul.f32 %v2582, 0.5
    %v2589 = vmul.f32 %v2567, 0.044715
    %v2590 = vmul.f32 %v2572, 0.044715
    %v2591 = vmul.f32 %v2577, 0.044715
    %v2592 = vmul.f32 %v2582, 0.044715
    %v2593 = vmul.f32 %v2589, %v2567
    %v2594 = vmul.f32 %v2590, %v2572
    %v2595 = vmul.f32 %v2591, %v2577
    %v2596 = vmul.f32 %v2592, %v2582
    %v2597 = vmul.f32 %v2593, %v2567
    %v2598 = vmul.f32 %v2594, %v2572
    %v2599 = vmul.f32 %v2595, %v2577
    %v2600 = vmul.f32 %v2596, %v2582
    %v2601 = vadd.f32 %v2567, %v2597
    %v2602 = vadd.f32 %v2572, %v2598
    %v2603 = vadd.f32 %v2577, %v2599
    %v2604 = vadd.f32 %v2582, %v2600
    %v2605 = vmul.f32 %v2601, 0.7978846
    %v2606 = vmul.f32 %v2602, 0.7978846
    %v2607 = vmul.f32 %v2603, 0.7978846
    %v2608 = vmul.f32 %v2604, 0.7978846
    %v2609 = vtanh.pop %v2605
    %v2610 = vtanh.pop %v2606
    %v2611 = vtanh.pop %v2607
    %v2612 = vtanh.pop %v2608
    %v2613 = vadd.f32 %v2609, 1.0
    %v2614 = vadd.f32 %v2610, 1.0
    %v2615 = vadd.f32 %v2611, 1.0
    %v2616 = vadd.f32 %v2612, 1.0
    %v2617 = vmul.f32 %v2585, %v2613
    %v2618 = vmul.f32 %v2586, %v2614
    %v2619 = vmul.f32 %v2587, %v2615
    %v2620 = vmul.f32 %v2588, %v2616
    %s2621 = scalar_lea.vmem %s11, 64
    %v2622 = vld [vmem:[%s2621] sm:$0xff]
    %v2623 = vld [vmem:[%s2621 + $0x8] sm:$0xff]
    %v2624 = vld [vmem:[%s2621 + $0x10] sm:$0xff]
    %v2625 = vld [vmem:[%s2621 + $0x18] sm:$0xff]
    %v2626 = vld [vmem:[%s2621 + $0x20] sm:$0xff]
    %v2627 = vld [vmem:[%s2621 + $0x28] sm:$0xff]
    %v2628 = vld [vmem:[%s2621 + $0x30] sm:$0xff]
    %v2629 = vld [vmem:[%s2621 + $0x38] sm:$0xff]
    %s2630 = scalar_lea.vmem %s12, 1
    %v2631 = vld [vmem:[%s2630] sm:$0x1]
    %v2633 = vlaneseq
    %v2634 = vshrl.u32 %v2633, 7
    %v2635 = vsub.s32 0, %v2634
    %v2636 = vrot.slane %v2631, %v2635
    %v2639 = vsel %vm1323, %v2617, 0
    %v2642 = vsel %vm1323, %v2618, 0
    %v2645 = vsel %vm1323, %v2619, 0
    %v2648 = vsel %vm1323, %v2620, 0
    %2650 = vmatprep.subr.mxu0 0.0
    %2651 = vmatpush1.msra.mxu0 0.0
    %2652 = vmatprep.subr.mxu0 0.0
    %2653 = vmatpush1.msra.mxu0 0.0
    %2654 = vmatprep.subr.mxu0 0.0
    %2655 = vmatpush1.msra.mxu0 0.0
    %2656 = vmatprep.subr.mxu0 0.0
    %2657 = vmatpush1.msra.mxu0 0.0
    %2658 = vmatprep.subr.mxu0 0.0
    %2659 = vmatpush1.msra.mxu0 0.0
    %2660 = vmatprep.subr.mxu0 0.0
    %2661 = vmatpush1.msra.mxu0 0.0
    %2662 = vmatprep.subr.mxu0 0.0
    %2663 = vmatpush1.msra.mxu0 0.0
    %2664 = vmatprep.subr.mxu0 0.0
    %2665 = vmatpush1.msra.mxu0 0.0
    %2666 = vmatprep.subr.mxu0 0.0
    %2667 = vmatpush1.msra.mxu0 %v2629
    %2668 = vmatprep.subr.mxu0 0.0
    %2669 = vmatpush1.msra.mxu0 %v2628
    %2670 = vmatprep.subr.mxu0 0.0
    %2671 = vmatpush1.msra.mxu0 %v2627
    %2672 = vmatprep.subr.mxu0 0.0
    %2673 = vmatpush1.msra.mxu0 %v2626
    %2674 = vmatprep.subr.mxu0 0.0
    %2675 = vmatpush1.msra.mxu0 %v2625
    %2676 = vmatprep.subr.mxu0 0.0
    %2677 = vmatpush1.msra.mxu0 %v2624
    %2678 = vmatprep.subr.mxu0 0.0
    %2679 = vmatpush1.msra.mxu0 %v2623
    %2680 = vmatprep.subr.mxu0 0.0
    %2681 = vmatpush1.msra.mxu0 %v2622
    %2682 = vmatprep.subr.mxu0 0.0
    %2683 = vmatpush2.msra.mxu0 0.0
    %2684 = vmatprep.subr.mxu0 0.0
    %2685 = vmatpush2.msra.mxu0 0.0
    %2686 = vmatprep.subr.mxu0 0.0
    %2687 = vmatpush2.msra.mxu0 0.0
    %2688 = vmatprep.subr.mxu0 0.0
    %2689 = vmatpush2.msra.mxu0 0.0
    %2690 = vmatprep.subr.mxu0 0.0
    %2691 = vmatpush2.msra.mxu0 0.0
    %2692 = vmatprep.subr.mxu0 0.0
    %2693 = vmatpush2.msra.mxu0 0.0
    %2694 = vmatprep.subr.mxu0 0.0
    %2695 = vmatpush2.msra.mxu0 0.0
    %2696 = vmatprep.subr.mxu0 0.0
    %2697 = vmatpush2.msra.mxu0 0.0
    %2698 = vmatprep.subr.mxu0 0.0
    %2699 = vmatpush2.msra.mxu0 0.0
    %2700 = vmatprep.subr.mxu0 0.0
    %2701 = vmatpush2.msra.mxu0 0.0
    %2702 = vmatprep.subr.mxu0 0.0
    %2703 = vmatpush2.msra.mxu0 0.0
    %2704 = vmatprep.subr.mxu0 0.0
    %2705 = vmatpush2.msra.mxu0 0.0
    %2706 = vmatprep.subr.mxu0 0.0
    %2707 = vmatpush2.msra.mxu0 0.0
    %2708 = vmatprep.subr.mxu0 0.0
    %2709 = vmatpush2.msra.mxu0 0.0
    %2710 = vmatprep.subr.mxu0 0.0
    %2711 = vmatpush2.msra.mxu0 0.0
    %2712 = vmatprep.subr.mxu0 0.0
    %2713 = vmatpush2.msra.mxu0 0.0
    %2714 = vmatprep.mubr.f32.mxu0 0.0
    %2715 = vmatmul.mubr.f32.gmra.mxu0 %v2639
    %v2716 = vpop.f32.mrf.mxu0
    %v2717 = vadd.f32 %v2636, %v2716
    %v2718 = vpop.f32.mrf.mxu0
    %2719 = vmatprep.mubr.f32.mxu0 0.0
    %2720 = vmatmul.mubr.f32.gmra.mxu0 %v2642
    %v2721 = vpop.f32.mrf.mxu0
    %v2722 = vadd.f32 %v2636, %v2721
    %v2723 = vpop.f32.mrf.mxu0
    %2724 = vmatprep.mubr.f32.mxu0 0.0
    %2725 = vmatmul.mubr.f32.gmra.mxu0 %v2645
    %v2726 = vpop.f32.mrf.mxu0
    %v2727 = vadd.f32 %v2636, %v2726
    %v2728 = vpop.f32.mrf.mxu0
    %2729 = vmatprep.mubr.f32.mxu0 0.0
    %2730 = vmatmul.mubr.f32.gmra.mxu0 %v2648
    %v2731 = vpop.f32.mrf.mxu0
    %v2732 = vadd.f32 %v2636, %v2731
    %v2733 = vpop.f32.mrf.mxu0
    %2734 = vdwg.mxu0
    %v2735 = vadd.f32 %v2471, %v2717
    %v2736 = vadd.f32 %v2472, %v2722
    %v2737 = vadd.f32 %v2473, %v2727
    %v2738 = vadd.f32 %v2474, %v2732
    %s2739 = scalar_lea.vmem %s13, 1
    %v2740 = vld [vmem:[%s2739] sm:$0x1]
    %s2741 = scalar_lea.vmem %s14, 1
    %v2742 = vld [vmem:[%s2741] sm:$0x1]
    %v2743 = vsel %vm118, %v2735, 0.0
    %2744 = vadd.xlane.f32.xlu0 %v2743
    %v2745 = vpop.xlane.xlu0 %2744
    %v2746 = vsel %vm118, %v2736, 0.0
    %2747 = vadd.xlane.f32.xlu0 %v2746
    %v2748 = vpop.xlane.xlu0 %2747
    %v2749 = vsel %vm118, %v2737, 0.0
    %2750 = vadd.xlane.f32.xlu0 %v2749
    %v2751 = vpop.xlane.xlu0 %2750
    %v2752 = vsel %vm118, %v2738, 0.0
    %2753 = vadd.xlane.f32.xlu0 %v2752
    %v2754 = vpop.xlane.xlu0 %2753
    %v2755 = vmul.f32 %v2745, %v131
    %v2756 = vmul.f32 %v2748, %v131
    %v2757 = vmul.f32 %v2751, %v131
    %v2758 = vmul.f32 %v2754, %v131
    %v2759 = vsub.f32 %v2735, %v2755
    %v2760 = vsub.f32 %v2736, %v2756
    %v2761 = vsub.f32 %v2737, %v2757
    %v2762 = vsub.f32 %v2738, %v2758
    %v2763 = vmul.f32 %v2759, %v2759
    %v2764 = vmul.f32 %v2760, %v2760
    %v2765 = vmul.f32 %v2761, %v2761
    %v2766 = vmul.f32 %v2762, %v2762
    %v2767 = vsel %vm118, %v2763, 0.0
    %2768 = vadd.xlane.f32.xlu0 %v2767
    %v2769 = vpop.xlane.xlu0 %2768
    %v2770 = vsel %vm118, %v2764, 0.0
    %2771 = vadd.xlane.f32.xlu0 %v2770
    %v2772 = vpop.xlane.xlu0 %2771
    %v2773 = vsel %vm118, %v2765, 0.0
    %2774 = vadd.xlane.f32.xlu0 %v2773
    %v2775 = vpop.xlane.xlu0 %2774
    %v2776 = vsel %vm118, %v2766, 0.0
    %2777 = vadd.xlane.f32.xlu0 %v2776
    %v2778 = vpop.xlane.xlu0 %2777
    %v2779 = vmul.f32 %v2769, %v131
    %v2780 = vmul.f32 %v2772, %v131
    %v2781 = vmul.f32 %v2775, %v131
    %v2782 = vmul.f32 %v2778, %v131
    %v2783 = vadd.f32 %v2779, 1e-05
    %v2784 = vadd.f32 %v2780, 1e-05
    %v2785 = vadd.f32 %v2781, 1e-05
    %v2786 = vadd.f32 %v2782, 1e-05
    %v2787 = vrsqrt.pop %v2783
    %v2788 = vrsqrt.pop %v2784
    %v2789 = vrsqrt.pop %v2785
    %v2790 = vrsqrt.pop %v2786
    %v2791 = vmul.f32 %v2759, %v2787
    %v2792 = vmul.f32 %v2760, %v2788
    %v2793 = vmul.f32 %v2761, %v2789
    %v2794 = vmul.f32 %v2762, %v2790
    %v2796 = vlaneseq
    %v2797 = vshrl.u32 %v2796, 7
    %v2798 = vsub.s32 0, %v2797
    %v2799 = vrot.slane %v2740, %v2798
    %v2801 = vmul.f32 %v2791, %v2799
    %v2802 = vmul.f32 %v2792, %v2799
    %v2803 = vmul.f32 %v2793, %v2799
    %v2804 = vmul.f32 %v2794, %v2799
    %v2806 = vlaneseq
    %v2807 = vshrl.u32 %v2806, 7
    %v2808 = vsub.s32 0, %v2807
    %v2809 = vrot.slane %v2742, %v2808
    %v2811 = vadd.f32 %v2801, %v2809
    %v2812 = vadd.f32 %v2802, %v2809
    %v2813 = vadd.f32 %v2803, %v2809
    %v2814 = vadd.f32 %v2804, %v2809
    %2815 = vst.msk [vmem:[#allocation4] sm:$0xff] %vm118, %v2811
    %2816 = vst.msk [vmem:[#allocation4 + $0x8] sm:$0xff] %vm118, %v2812
    %2817 = vst.msk [vmem:[#allocation4 + $0x10] sm:$0xff] %vm118, %v2813
    %2818 = vst.msk [vmem:[#allocation4 + $0x18] sm:$0xff] %vm118, %v2814
    %v2819 = vld [vmem:[#allocation4] ss:$8 sm:$0x3]
    %s2820 = scalar_lea.vmem [#allocation4], 16
    %v2821 = vld [vmem:[%s2820] ss:$8 sm:$0x3]
    %s2822 = sld [smem:[#allocation5]]
    %v2823 = vstv %s2822
    %v2824 = vmul.f32 %v2819, %v2823
    %s2825 = ssub.f32 1.0, %s2822
    %v2826 = vstv %s2825
    %v2827 = vmul.f32 %v2821, %v2826
    %v2828 = vadd.f32 %v2824, %v2827
    %v2829 = vld [vmem:[#allocation12] sm:$0xff]
    %v2830 = vld [vmem:[#allocation12 + $0x8] sm:$0xff]
    %v2831 = vld [vmem:[#allocation12 + $0x10] sm:$0xff]
    %v2832 = vld [vmem:[#allocation12 + $0x18] sm:$0xff]
    %v2833 = vld [vmem:[%s16] sm:$0x1]
    %v2835 = vlaneseq
    %v2836 = vshrl.u32 %v2835, 7
    %v2837 = vsub.s32 0, %v2836
    %v2838 = vrot.slane %v2833, %v2837
    %v2841 = vsel %vm118, %v2828, 0
    %2843 = vmatprep.subr.mxu0 0.0
    %2844 = vmatpush1.msra.mxu0 0.0
    %2845 = vmatprep.subr.mxu0 0.0
    %2846 = vmatpush1.msra.mxu0 0.0
    %2847 = vmatprep.subr.mxu0 0.0
    %2848 = vmatpush1.msra.mxu0 0.0
    %2849 = vmatprep.subr.mxu0 0.0
    %2850 = vmatpush1.msra.mxu0 0.0
    %2851 = vmatprep.subr.mxu0 0.0
    %2852 = vmatpush1.msra.mxu0 0.0
    %2853 = vmatprep.subr.mxu0 0.0
    %2854 = vmatpush1.msra.mxu0 0.0
    %2855 = vmatprep.subr.mxu0 0.0
    %2856 = vmatpush1.msra.mxu0 0.0
    %2857 = vmatprep.subr.mxu0 0.0
    %2858 = vmatpush1.msra.mxu0 0.0
    %2859 = vmatprep.subr.mxu0 0.0
    %2860 = vmatpush1.msra.mxu0 0.0
    %2861 = vmatprep.subr.mxu0 0.0
    %2862 = vmatpush1.msra.mxu0 0.0
    %2863 = vmatprep.subr.mxu0 0.0
    %2864 = vmatpush1.msra.mxu0 0.0
    %2865 = vmatprep.subr.mxu0 0.0
    %2866 = vmatpush1.msra.mxu0 0.0
    %2867 = vmatprep.subr.mxu0 0.0
    %2868 = vmatpush1.msra.mxu0 %v2832
    %2869 = vmatprep.subr.mxu0 0.0
    %2870 = vmatpush1.msra.mxu0 %v2831
    %2871 = vmatprep.subr.mxu0 0.0
    %2872 = vmatpush1.msra.mxu0 %v2830
    %2873 = vmatprep.subr.mxu0 0.0
    %2874 = vmatpush1.msra.mxu0 %v2829
    %2875 = vmatprep.subr.mxu0 0.0
    %2876 = vmatpush2.msra.mxu0 0.0
    %2877 = vmatprep.subr.mxu0 0.0
    %2878 = vmatpush2.msra.mxu0 0.0
    %2879 = vmatprep.subr.mxu0 0.0
    %2880 = vmatpush2.msra.mxu0 0.0
    %2881 = vmatprep.subr.mxu0 0.0
    %2882 = vmatpush2.msra.mxu0 0.0
    %2883 = vmatprep.subr.mxu0 0.0
    %2884 = vmatpush2.msra.mxu0 0.0
    %2885 = vmatprep.subr.mxu0 0.0
    %2886 = vmatpush2.msra.mxu0 0.0
    %2887 = vmatprep.subr.mxu0 0.0
    %2888 = vmatpush2.msra.mxu0 0.0
    %2889 = vmatprep.subr.mxu0 0.0
    %2890 = vmatpush2.msra.mxu0 0.0
    %2891 = vmatprep.subr.mxu0 0.0
    %2892 = vmatpush2.msra.mxu0 0.0
    %2893 = vmatprep.subr.mxu0 0.0
    %2894 = vmatpush2.msra.mxu0 0.0
    %2895 = vmatprep.subr.mxu0 0.0
    %2896 = vmatpush2.msra.mxu0 0.0
    %2897 = vmatprep.subr.mxu0 0.0
    %2898 = vmatpush2.msra.mxu0 0.0
    %2899 = vmatprep.subr.mxu0 0.0
    %2900 = vmatpush2.msra.mxu0 0.0
    %2901 = vmatprep.subr.mxu0 0.0
    %2902 = vmatpush2.msra.mxu0 0.0
    %2903 = vmatprep.subr.mxu0 0.0
    %2904 = vmatpush2.msra.mxu0 0.0
    %2905 = vmatprep.subr.mxu0 0.0
    %2906 = vmatpush2.msra.mxu0 0.0
    %2907 = vmatprep.mubr.f32.mxu0 0.0
    %2908 = vmatmul.mubr.f32.gmra.mxu0 %v2841
    %v2909 = vpop.f32.mrf.mxu0
    %v2910 = vadd.f32 %v2838, %v2909
    %v2911 = vpop.f32.mrf.mxu0
    %2912 = vdwg.mxu0
    %2913 = vst [vmem:[#allocation14] sm:$0x3] %v2910
    // Predicated region
    $region90: #{tpu_custom_call.1} parent=1 // pred_check
      _
    $region91: #{tpu_custom_call.1} parent=1 // pred_check_branch
      %2915 = sbr.rel (0) target = $region93
    $region92: #{tpu_custom_call.1} parent=1 // pred_region
      %s2917 = ssub.s32 32, 32
      %2918 = vsyncadd [#allocation8], %s2917
      %s2920 = sshll.u32 [#allocation14], 4
      %s2921 = int_to_ptr.vmem [resolvable:$true] %s2920
      %2923 = dma.vmem_to_hbm [thread:$0]  %s2921, 32, %s18, [#allocation8]
    $region93: #{tpu_custom_call.1} parent=1 // pred_fallthru
      _
    // Predicated region
    $region94: #{tpu_custom_call.1} parent=1 // pred_check
      _
    $region95: #{tpu_custom_call.1} parent=1 // pred_check_branch
      %2925 = sbr.rel (0) target = $region97
    $region96: #{tpu_custom_call.1} parent=1 // pred_region
      %2926 = dma.done [#allocation8], 32
    $region97: #{tpu_custom_call.1} parent=1 // pred_fallthru
      _
    %2927 = vsyncpa [#allocation7], 1
    %2928 = vsyncpa [#allocation10], 1
    %2929 = vsyncpa [#allocation13], 1
    %2930 = vsyncpa [#allocation8], 1

</llo_original>
